<compile_context>
chip_gen: v7x
topology: tpu7x:2x2x1
jax: 0.10.0
libtpu: 0.0.40
codegen_flags: <defaults>
</compile_context>

<pallas_src>
from functools import partial

import jax
import jax.numpy as jnp
from jax import lax
from jax.experimental import pallas as pl
from jax.experimental.pallas import tpu as pltpu


# -----------------------------------------------------------------------------
# Kernel 1: 3x3 SAME conv over an NCHW input block -> lane-dense output + stats.
# -----------------------------------------------------------------------------
def _conv1_kernel(x_ref, wb_ref, r_ref, y_ref, st_ref, *,
                  H, W, Cin, Cout, mm_dtype):
    zrow = jnp.zeros((1, W), jnp.float32)
    acc = jnp.zeros((H, W * Cout), jnp.float32)
    for i in range(Cin):
        xi = x_ref[0, i].astype(jnp.float32)                 # (H, W) channel plane
        xp = jnp.concatenate([zrow, xi, zrow], axis=0)       # (H+2, W): vertical SAME
        for dy in range(3):
            # dx taps + horizontal SAME padding live inside the banded weights.
            acc = acc + jnp.dot(xp[dy:dy + H].astype(mm_dtype), wb_ref[dy, i],
                                preferred_element_type=jnp.float32)
    # Packed per-image BN statistics: row 0 = sum, row 1 = sum of squares.
    rows = jnp.concatenate([jnp.sum(acc, axis=0, keepdims=True),
                            jnp.sum(acc * acc, axis=0, keepdims=True)], axis=0)
    st_ref[0] = jnp.dot(rows, r_ref[...], preferred_element_type=jnp.float32)
    y_ref[0] = acc.astype(y_ref.dtype)                       # lane-dense (H, W*Cout)


# -----------------------------------------------------------------------------
# Kernel 2: BN1-apply + ReLU fused into the read, 3x3 SAME conv, packed stats.
# -----------------------------------------------------------------------------
def _conv2_kernel(y1_ref, wb_ref, bn_ref, r_ref, y_ref, st_ref, *,
                  H, W, Cmid, Cout, mm_dtype):
    # Single broadcast FMA + max: bn_ref[0] = scale (lane-tiled), bn_ref[1] = shift.
    a = y1_ref[0].astype(jnp.float32) * bn_ref[0:1, :] + bn_ref[1:2, :]
    a = jnp.maximum(a, 0.0)                                  # (H, W*Cmid)
    # Vertical SAME padding of the *post-activation* tensor is zero rows.
    zrow = jnp.zeros((1, W * Cmid), jnp.float32)
    ap = jnp.concatenate([zrow, a, zrow], axis=0)            # (H+2, W*Cmid)
    acc = jnp.zeros((H, W * Cout), jnp.float32)
    for dy in range(3):
        acc = acc + jnp.dot(ap[dy:dy + H].astype(mm_dtype), wb_ref[dy],
                            preferred_element_type=jnp.float32)
    rows = jnp.concatenate([jnp.sum(acc, axis=0, keepdims=True),
                            jnp.sum(acc * acc, axis=0, keepdims=True)], axis=0)
    st_ref[0] = jnp.dot(rows, r_ref[...], preferred_element_type=jnp.float32)
    y_ref[0] = acc.astype(y_ref.dtype)


# -----------------------------------------------------------------------------
# Kernel 3: BN2-apply + ReLU, emit NCHW channel planes directly (fused transpose).
# -----------------------------------------------------------------------------
def _bn_relu_to_nchw_kernel(y_ref, bn_ref, sel_ref, o_ref, *, Cout):
    z = y_ref[0].astype(jnp.float32) * bn_ref[0:1, :] + bn_ref[1:2, :]
    z = jnp.maximum(z, 0.0)                                  # (H, W*Cout) lane-dense
    for o in range(Cout):
        # Exact 0/1 selection matmul extracts channel o's (H, W) plane on the MXU.
        o_ref[0, o] = jnp.dot(z, sel_ref[o], preferred_element_type=jnp.float32)


# -----------------------------------------------------------------------------
# Wrapper-side constant builders (banded weights, channel-sum / -select matrices).
# -----------------------------------------------------------------------------
def _shifted_eyes(W, dtype):
    # E_dx[cc, c] = 1 iff cc == c + dx - 1; out-of-range columns are dropped,
    # which is exactly the horizontal zero (SAME) padding.
    return [jnp.eye(W, W, k=1 - dx, dtype=dtype) for dx in range(3)]


def _band_per_in_channel(w, W, dtype):
    # w: (3, 3, Cin, Cout) HWIO -> (3, Cin, W, W*Cout)
    _, _, Cin, _ = w.shape
    eyes = _shifted_eyes(W, w.dtype)
    rows = []
    for dy in range(3):
        per_i = []
        for i in range(Cin):
            m = sum(jnp.kron(eyes[dx], w[dy, dx, i][None, :]) for dx in range(3))
            per_i.append(m)
        rows.append(jnp.stack(per_i, axis=0))
    return jnp.stack(rows, axis=0).astype(dtype)


def _band_dense(w, W, dtype):
    # w: (3, 3, Ci, Co) HWIO -> (3, W*Ci, W*Co), lane-dense channel-minor layout.
    eyes = _shifted_eyes(W, w.dtype)
    return jnp.stack(
        [sum(jnp.kron(eyes[dx], w[dy, dx]) for dx in range(3)) for dy in range(3)],
        axis=0).astype(dtype)


def _channel_sum_matrix(W, C):
    # (W*C, C): sums the W column blocks of a lane-dense row into per-channel values.
    return jnp.kron(jnp.ones((W, 1), jnp.float32), jnp.eye(C, dtype=jnp.float32))


def _channel_select_matrices(W, C):
    # (C, W*C, W): S[o] extracts channel o's (H, W) plane from a lane-dense tile.
    eyeW = jnp.eye(W, dtype=jnp.float32)
    eyeC = jnp.eye(C, dtype=jnp.float32)
    return jnp.stack([jnp.kron(eyeW, eyeC[:, o:o + 1]) for o in range(C)], axis=0)


def _bn_scale_shift(s, q, count, gamma, beta, eps):
    mean = s / count
    var = jnp.maximum(q / count - mean * mean, 0.0)   # biased variance (train mode)
    scale = gamma * lax.rsqrt(var + eps)
    return scale, beta - scale * mean


# -----------------------------------------------------------------------------
# pallas_call wrappers.
# -----------------------------------------------------------------------------
def _conv1_call(x, band1, rmat, *, W, Cout, interm_dtype, mm_dtype, cparams):
    N, Cin, H, _ = x.shape
    kern = partial(_conv1_kernel, H=H, W=W, Cin=Cin, Cout=Cout, mm_dtype=mm_dtype)
    return pl.pallas_call(
        kern,
        out_shape=(jax.ShapeDtypeStruct((N, H, W * Cout), interm_dtype),
                   jax.ShapeDtypeStruct((N, 2, Cout), jnp.float32)),
        grid=(N,),
        in_specs=[
            pl.BlockSpec((1, Cin, H, W), lambda n: (n, 0, 0, 0)),
            pl.BlockSpec((3, Cin, W, W * Cout), lambda n: (0, 0, 0, 0)),
            pl.BlockSpec((W * Cout, Cout), lambda n: (0, 0)),
        ],
        out_specs=(
            pl.BlockSpec((1, H, W * Cout), lambda n: (n, 0, 0)),
            pl.BlockSpec((1, 2, Cout), lambda n: (n, 0, 0)),
        ),
        compiler_params=cparams,
    )(x, band1, rmat)


def _conv2_call(y1, band2, bn_pack, rmat, *, W, Cout, interm_dtype, mm_dtype, cparams):
    N, H, WCmid = y1.shape
    Cmid = WCmid // W
    kern = partial(_conv2_kernel, H=H, W=W, Cmid=Cmid, Cout=Cout, mm_dtype=mm_dtype)
    return pl.pallas_call(
        kern,
        out_shape=(jax.ShapeDtypeStruct((N, H, W * Cout), interm_dtype),
                   jax.ShapeDtypeStruct((N, 2, Cout), jnp.float32)),
        grid=(N,),
        in_specs=[
            pl.BlockSpec((1, H, WCmid), lambda n: (n, 0, 0)),
            pl.BlockSpec((3, WCmid, W * Cout), lambda n: (0, 0, 0)),
            pl.BlockSpec((2, WCmid), lambda n: (0, 0)),
            pl.BlockSpec((W * Cout, Cout), lambda n: (0, 0)),
        ],
        out_specs=(
            pl.BlockSpec((1, H, W * Cout), lambda n: (n, 0, 0)),
            pl.BlockSpec((1, 2, Cout), lambda n: (n, 0, 0)),
        ),
        compiler_params=cparams,
    )(y1, band2, bn_pack, rmat)


def _bn_relu_nchw_call(y2, bn_pack, sel, *, W, Cout, cparams):
    N, H, WC = y2.shape
    kern = partial(_bn_relu_to_nchw_kernel, Cout=Cout)
    return pl.pallas_call(
        kern,
        out_shape=jax.ShapeDtypeStruct((N, Cout, H, W), jnp.float32),
        grid=(N,),
        in_specs=[
            pl.BlockSpec((1, H, WC), lambda n: (n, 0, 0)),
            pl.BlockSpec((2, WC), lambda n: (0, 0)),
            pl.BlockSpec((Cout, WC, W), lambda n: (0, 0, 0)),
        ],
        out_specs=pl.BlockSpec((1, Cout, H, W), lambda n: (n, 0, 0, 0)),
        compiler_params=cparams,
    )(y2, bn_pack, sel)


# -----------------------------------------------------------------------------
# DoubleConv forward (NCHW in / NCHW out, matching the PyTorch module).
# -----------------------------------------------------------------------------
@partial(jax.jit, static_argnames=("use_bf16_matmul", "bf16_intermediates", "eps"))
def double_conv(x_nchw, params, *, use_bf16_matmul=True, bf16_intermediates=True,
                eps=1e-5):
    x = x_nchw.astype(jnp.float32)
    N, Cin, H, W = x.shape
    Cout = params["w1"].shape[-1]
    count = float(N * H * W)

    mm_dtype = jnp.bfloat16 if use_bf16_matmul else jnp.float32
    interm_dtype = jnp.bfloat16 if bf16_intermediates else jnp.float32
    cparams = pltpu.CompilerParams(
        dimension_semantics=("parallel",),
        vmem_limit_bytes=32 * 1024 * 1024)

    # Conv biases are dropped on purpose (cancelled by the BN mean subtraction).
    band1 = _band_per_in_channel(params["w1"], W, mm_dtype)   # (3, Cin, W, W*Cout)
    band2 = _band_dense(params["w2"], W, mm_dtype)            # (3, W*Cout, W*Cout)
    rmat = _channel_sum_matrix(W, Cout)                       # (W*Cout, Cout)
    sel = _channel_select_matrices(W, Cout)                   # (Cout, W*Cout, W)

    # K1: conv1 + packed BN1 stats.
    y1, st1 = _conv1_call(x, band1, rmat, W=W, Cout=Cout,
                          interm_dtype=interm_dtype, mm_dtype=mm_dtype,
                          cparams=cparams)
    sc1, sh1 = _bn_scale_shift(jnp.sum(st1[:, 0, :], axis=0),
                               jnp.sum(st1[:, 1, :], axis=0),
                               count, params["g1"], params["be1"], eps)
    bn1 = jnp.stack([jnp.tile(sc1, W), jnp.tile(sh1, W)], axis=0)   # (2, W*Cout)

    # K2: BN1+ReLU fused into the read, conv2 + packed BN2 stats.
    y2, st2 = _conv2_call(y1, band2, bn1, rmat, W=W, Cout=Cout,
                          interm_dtype=interm_dtype, mm_dtype=mm_dtype,
                          cparams=cparams)
    sc2, sh2 = _bn_scale_shift(jnp.sum(st2[:, 0, :], axis=0),
                               jnp.sum(st2[:, 1, :], axis=0),
                               count, params["g2"], params["be2"], eps)
    bn2 = jnp.stack([jnp.tile(sc2, W), jnp.tile(sh2, W)], axis=0)   # (2, W*Cout)

    # K3: BN2+ReLU, NCHW channel planes written directly.
    return _bn_relu_nchw_call(y2, bn2, sel, W=W, Cout=Cout, cparams=cparams)


# -----------------------------------------------------------------------------
# Pure-JAX reference (with conv biases, demonstrating the bias cancellation).
# -----------------------------------------------------------------------------
def ref_double_conv(x_nchw, params, eps=1e-5):
    def conv(x, w, b):
        y = lax.conv_general_dilated(
            x, w, (1, 1), "SAME",
            dimension_numbers=("NHWC", "HWIO", "NHWC"),
            precision=lax.Precision.HIGHEST)
        return y + b

    def bnr(y, g, be):
        mean = jnp.mean(y, axis=(0, 1, 2), keepdims=True)
        var = jnp.mean((y - mean) ** 2, axis=(0, 1, 2), keepdims=True)
        return jnp.maximum(g * (y - mean) * lax.rsqrt(var + eps) + be, 0.0)

    x = jnp.transpose(x_nchw, (0, 2, 3, 1))
    y = bnr(conv(x, params["w1"], params["b1"]), params["g1"], params["be1"])
    y = bnr(conv(y, params["w2"], params["b2"]), params["g2"], params["be2"])
    return jnp.transpose(y, (0, 3, 1, 2))


if __name__ == "__main__":
    key = jax.random.PRNGKey(0)
    in_channels, out_channels = 4, 8
    N, H, W = 2, 16, 16

    k = jax.random.split(key, 6)
    params = {
        "w1": 0.1 * jax.random.normal(k[0], (3, 3, in_channels, out_channels), jnp.float32),
        "b1": 0.1 * jax.random.normal(k[1], (out_channels,), jnp.float32),
        "g1": 1.0 + 0.05 * jax.random.normal(k[2], (out_channels,), jnp.float32),
        "be1": 0.02 * jnp.ones((out_channels,), jnp.float32),
        "w2": 0.1 * jax.random.normal(k[3], (3, 3, out_channels, out_channels), jnp.float32),
        "b2": 0.1 * jax.random.normal(k[4], (out_channels,), jnp.float32),
        "g2": 1.0 + 0.05 * jax.random.normal(k[5], (out_channels,), jnp.float32),
        "be2": -0.02 * jnp.ones((out_channels,), jnp.float32),
    }
    x = jax.random.normal(key, (N, in_channels, H, W), jnp.float32)  # NCHW

    ref = jax.block_until_ready(ref_double_conv(x, params))

    # All-f32 path (tight-ish check, robust to MXU precision mode).
    out_f32 = jax.block_until_ready(
        double_conv(x, params, use_bf16_matmul=False, bf16_intermediates=False))
    assert out_f32.shape == (N, out_channels, H, W), out_f32.shape
    assert bool(jnp.all(jnp.isfinite(out_f32)))
    err_f32 = float(jnp.max(jnp.abs(out_f32 - ref)))
    assert err_f32 < 5e-2, f"f32 path max error {err_f32}"

    # Default performance path: bf16 intermediates + bf16 MXU operands (f32 acc / BN).
    out = jax.block_until_ready(double_conv(x, params))
    assert out.shape == (N, out_channels, H, W), out.shape
    assert bool(jnp.all(jnp.isfinite(out)))
    err_bf16 = float(jnp.max(jnp.abs(out - ref)))
    assert err_bf16 < 1.5e-1, f"bf16 path max error {err_bf16}"

    print("KERNEL_OK")
</pallas_src>

<mosaic_0001>
module attributes {stable_mosaic.version = 11 : i64} {
  func.func @_conv1_kernel(%arg0: i32, %arg1: memref<1x4x16x16xf32, #tpu.memory_space<vmem>>, %arg2: memref<3x4x16x128xf32, #tpu.memory_space<vmem>>, %arg3: memref<128x8xf32, #tpu.memory_space<vmem>>, %arg4: memref<1x16x128xf32, #tpu.memory_space<vmem>>, %arg5: memref<1x2x8xf32, #tpu.memory_space<vmem>>) attributes {dimension_semantics = [#tpu.dimension_semantics<parallel>], iteration_bounds = array<i64: 2>, scalar_prefetch = 0 : i64, scratch_operands = 0 : i64, tpu.core_type = #tpu.core_type<tc>, window_params = [{transform_indices = @transform_0, window_bounds = array<i64: 1, 4, 16, 16>}, {pipeline_mode = #tpu.pipeline_mode<synchronous>, transform_indices = @transform_1, window_bounds = array<i64: 3, 4, 16, 128>}, {pipeline_mode = #tpu.pipeline_mode<synchronous>, transform_indices = @transform_2, window_bounds = array<i64: 128, 8>}, {transform_indices = @transform_3, window_bounds = array<i64: 1, 16, 128>}, {transform_indices = @transform_4, window_bounds = array<i64: 1, 2, 8>}]} {
    %cst = arith.constant 0.000000e+00 : f32
    %0 = vector.broadcast %cst : f32 to vector<1x16xf32>
    %cst_0 = arith.constant 0.000000e+00 : f32
    %1 = vector.broadcast %cst_0 : f32 to vector<16x128xf32>
    %c0 = arith.constant 0 : index
    %c0_1 = arith.constant 0 : index
    %c0_2 = arith.constant 0 : index
    %c0_3 = arith.constant 0 : index
    %2 = vector.load %arg1[%c0, %c0_1, %c0_2, %c0_3] : memref<1x4x16x16xf32, #tpu.memory_space<vmem>>, vector<1x1x16x16xf32>
    %3 = vector.shape_cast %2 : vector<1x1x16x16xf32> to vector<16x16xf32>
    %4 = tpu.concatenate %0, %3, %0 in 0 : vector<1x16xf32>, vector<16x16xf32>, vector<1x16xf32> -> vector<18x16xf32>
    %5 = vector.extract_strided_slice %4 {offsets = [0, 0], sizes = [16, 16], strides = [1, 1]} : vector<18x16xf32> to vector<16x16xf32>
    %c0_4 = arith.constant 0 : index
    %c0_5 = arith.constant 0 : index
    %c0_6 = arith.constant 0 : index
    %c0_7 = arith.constant 0 : index
    %6 = vector.load %arg2[%c0_4, %c0_5, %c0_6, %c0_7] : memref<3x4x16x128xf32, #tpu.memory_space<vmem>>, vector<1x1x16x128xf32>
    %7 = vector.shape_cast %6 : vector<1x1x16x128xf32> to vector<16x128xf32>
    %cst_8 = arith.constant dense<0.000000e+00> : vector<16x128xf32>
    %8 = tpu.matmul %5, %7, %cst_8 {dimension_numbers = #tpu.dot_dimension_numbers<[1], [0], [0], [1], [0, 0, 1, 1], [], []>} : vector<16x16xf32>, vector<16x128xf32>, vector<16x128xf32> -> vector<16x128xf32>
    %9 = arith.addf %1, %8 : vector<16x128xf32>
    %10 = vector.extract_strided_slice %4 {offsets = [1, 0], sizes = [16, 16], strides = [1, 1]} : vector<18x16xf32> to vector<16x16xf32>
    %c1 = arith.constant 1 : index
    %c0_9 = arith.constant 0 : index
    %c0_10 = arith.constant 0 : index
    %c0_11 = arith.constant 0 : index
    %11 = vector.load %arg2[%c1, %c0_9, %c0_10, %c0_11] : memref<3x4x16x128xf32, #tpu.memory_space<vmem>>, vector<1x1x16x128xf32>
    %12 = vector.shape_cast %11 : vector<1x1x16x128xf32> to vector<16x128xf32>
    %cst_12 = arith.constant dense<0.000000e+00> : vector<16x128xf32>
    %13 = tpu.matmul %10, %12, %cst_12 {dimension_numbers = #tpu.dot_dimension_numbers<[1], [0], [0], [1], [0, 0, 1, 1], [], []>} : vector<16x16xf32>, vector<16x128xf32>, vector<16x128xf32> -> vector<16x128xf32>
    %14 = arith.addf %9, %13 : vector<16x128xf32>
    %15 = vector.extract_strided_slice %4 {offsets = [2, 0], sizes = [16, 16], strides = [1, 1]} : vector<18x16xf32> to vector<16x16xf32>
    %c2 = arith.constant 2 : index
    %c0_13 = arith.constant 0 : index
    %c0_14 = arith.constant 0 : index
    %c0_15 = arith.constant 0 : index
    %16 = vector.load %arg2[%c2, %c0_13, %c0_14, %c0_15] : memref<3x4x16x128xf32, #tpu.memory_space<vmem>>, vector<1x1x16x128xf32>
    %17 = vector.shape_cast %16 : vector<1x1x16x128xf32> to vector<16x128xf32>
    %cst_16 = arith.constant dense<0.000000e+00> : vector<16x128xf32>
    %18 = tpu.matmul %15, %17, %cst_16 {dimension_numbers = #tpu.dot_dimension_numbers<[1], [0], [0], [1], [0, 0, 1, 1], [], []>} : vector<16x16xf32>, vector<16x128xf32>, vector<16x128xf32> -> vector<16x128xf32>
    %19 = arith.addf %14, %18 : vector<16x128xf32>
    %c0_17 = arith.constant 0 : index
    %c1_18 = arith.constant 1 : index
    %c0_19 = arith.constant 0 : index
    %c0_20 = arith.constant 0 : index
    %20 = vector.load %arg1[%c0_17, %c1_18, %c0_19, %c0_20] : memref<1x4x16x16xf32, #tpu.memory_space<vmem>>, vector<1x1x16x16xf32>
    %21 = vector.shape_cast %20 : vector<1x1x16x16xf32> to vector<16x16xf32>
    %22 = tpu.concatenate %0, %21, %0 in 0 : vector<1x16xf32>, vector<16x16xf32>, vector<1x16xf32> -> vector<18x16xf32>
    %23 = vector.extract_strided_slice %22 {offsets = [0, 0], sizes = [16, 16], strides = [1, 1]} : vector<18x16xf32> to vector<16x16xf32>
    %c0_21 = arith.constant 0 : index
    %c1_22 = arith.constant 1 : index
    %c0_23 = arith.constant 0 : index
    %c0_24 = arith.constant 0 : index
    %24 = vector.load %arg2[%c0_21, %c1_22, %c0_23, %c0_24] : memref<3x4x16x128xf32, #tpu.memory_space<vmem>>, vector<1x1x16x128xf32>
    %25 = vector.shape_cast %24 : vector<1x1x16x128xf32> to vector<16x128xf32>
    %cst_25 = arith.constant dense<0.000000e+00> : vector<16x128xf32>
    %26 = tpu.matmul %23, %25, %cst_25 {dimension_numbers = #tpu.dot_dimension_numbers<[1], [0], [0], [1], [0, 0, 1, 1], [], []>} : vector<16x16xf32>, vector<16x128xf32>, vector<16x128xf32> -> vector<16x128xf32>
    %27 = arith.addf %19, %26 : vector<16x128xf32>
    %28 = vector.extract_strided_slice %22 {offsets = [1, 0], sizes = [16, 16], strides = [1, 1]} : vector<18x16xf32> to vector<16x16xf32>
    %c1_26 = arith.constant 1 : index
    %c1_27 = arith.constant 1 : index
    %c0_28 = arith.constant 0 : index
    %c0_29 = arith.constant 0 : index
    %29 = vector.load %arg2[%c1_26, %c1_27, %c0_28, %c0_29] : memref<3x4x16x128xf32, #tpu.memory_space<vmem>>, vector<1x1x16x128xf32>
    %30 = vector.shape_cast %29 : vector<1x1x16x128xf32> to vector<16x128xf32>
    %cst_30 = arith.constant dense<0.000000e+00> : vector<16x128xf32>
    %31 = tpu.matmul %28, %30, %cst_30 {dimension_numbers = #tpu.dot_dimension_numbers<[1], [0], [0], [1], [0, 0, 1, 1], [], []>} : vector<16x16xf32>, vector<16x128xf32>, vector<16x128xf32> -> vector<16x128xf32>
    %32 = arith.addf %27, %31 : vector<16x128xf32>
    %33 = vector.extract_strided_slice %22 {offsets = [2, 0], sizes = [16, 16], strides = [1, 1]} : vector<18x16xf32> to vector<16x16xf32>
    %c2_31 = arith.constant 2 : index
    %c1_32 = arith.constant 1 : index
    %c0_33 = arith.constant 0 : index
    %c0_34 = arith.constant 0 : index
    %34 = vector.load %arg2[%c2_31, %c1_32, %c0_33, %c0_34] : memref<3x4x16x128xf32, #tpu.memory_space<vmem>>, vector<1x1x16x128xf32>
    %35 = vector.shape_cast %34 : vector<1x1x16x128xf32> to vector<16x128xf32>
    %cst_35 = arith.constant dense<0.000000e+00> : vector<16x128xf32>
    %36 = tpu.matmul %33, %35, %cst_35 {dimension_numbers = #tpu.dot_dimension_numbers<[1], [0], [0], [1], [0, 0, 1, 1], [], []>} : vector<16x16xf32>, vector<16x128xf32>, vector<16x128xf32> -> vector<16x128xf32>
    %37 = arith.addf %32, %36 : vector<16x128xf32>
    %c0_36 = arith.constant 0 : index
    %c2_37 = arith.constant 2 : index
    %c0_38 = arith.constant 0 : index
    %c0_39 = arith.constant 0 : index
    %38 = vector.load %arg1[%c0_36, %c2_37, %c0_38, %c0_39] : memref<1x4x16x16xf32, #tpu.memory_space<vmem>>, vector<1x1x16x16xf32>
    %39 = vector.shape_cast %38 : vector<1x1x16x16xf32> to vector<16x16xf32>
    %40 = tpu.concatenate %0, %39, %0 in 0 : vector<1x16xf32>, vector<16x16xf32>, vector<1x16xf32> -> vector<18x16xf32>
    %41 = vector.extract_strided_slice %40 {offsets = [0, 0], sizes = [16, 16], strides = [1, 1]} : vector<18x16xf32> to vector<16x16xf32>
    %c0_40 = arith.constant 0 : index
    %c2_41 = arith.constant 2 : index
    %c0_42 = arith.constant 0 : index
    %c0_43 = arith.constant 0 : index
    %42 = vector.load %arg2[%c0_40, %c2_41, %c0_42, %c0_43] : memref<3x4x16x128xf32, #tpu.memory_space<vmem>>, vector<1x1x16x128xf32>
    %43 = vector.shape_cast %42 : vector<1x1x16x128xf32> to vector<16x128xf32>
    %cst_44 = arith.constant dense<0.000000e+00> : vector<16x128xf32>
    %44 = tpu.matmul %41, %43, %cst_44 {dimension_numbers = #tpu.dot_dimension_numbers<[1], [0], [0], [1], [0, 0, 1, 1], [], []>} : vector<16x16xf32>, vector<16x128xf32>, vector<16x128xf32> -> vector<16x128xf32>
    %45 = arith.addf %37, %44 : vector<16x128xf32>
    %46 = vector.extract_strided_slice %40 {offsets = [1, 0], sizes = [16, 16], strides = [1, 1]} : vector<18x16xf32> to vector<16x16xf32>
    %c1_45 = arith.constant 1 : index
    %c2_46 = arith.constant 2 : index
    %c0_47 = arith.constant 0 : index
    %c0_48 = arith.constant 0 : index
    %47 = vector.load %arg2[%c1_45, %c2_46, %c0_47, %c0_48] : memref<3x4x16x128xf32, #tpu.memory_space<vmem>>, vector<1x1x16x128xf32>
    %48 = vector.shape_cast %47 : vector<1x1x16x128xf32> to vector<16x128xf32>
    %cst_49 = arith.constant dense<0.000000e+00> : vector<16x128xf32>
    %49 = tpu.matmul %46, %48, %cst_49 {dimension_numbers = #tpu.dot_dimension_numbers<[1], [0], [0], [1], [0, 0, 1, 1], [], []>} : vector<16x16xf32>, vector<16x128xf32>, vector<16x128xf32> -> vector<16x128xf32>
    %50 = arith.addf %45, %49 : vector<16x128xf32>
    %51 = vector.extract_strided_slice %40 {offsets = [2, 0], sizes = [16, 16], strides = [1, 1]} : vector<18x16xf32> to vector<16x16xf32>
    %c2_50 = arith.constant 2 : index
    %c2_51 = arith.constant 2 : index
    %c0_52 = arith.constant 0 : index
    %c0_53 = arith.constant 0 : index
    %52 = vector.load %arg2[%c2_50, %c2_51, %c0_52, %c0_53] : memref<3x4x16x128xf32, #tpu.memory_space<vmem>>, vector<1x1x16x128xf32>
    %53 = vector.shape_cast %52 : vector<1x1x16x128xf32> to vector<16x128xf32>
    %cst_54 = arith.constant dense<0.000000e+00> : vector<16x128xf32>
    %54 = tpu.matmul %51, %53, %cst_54 {dimension_numbers = #tpu.dot_dimension_numbers<[1], [0], [0], [1], [0, 0, 1, 1], [], []>} : vector<16x16xf32>, vector<16x128xf32>, vector<16x128xf32> -> vector<16x128xf32>
    %55 = arith.addf %50, %54 : vector<16x128xf32>
    %c0_55 = arith.constant 0 : index
    %c3 = arith.constant 3 : index
    %c0_56 = arith.constant 0 : index
    %c0_57 = arith.constant 0 : index
    %56 = vector.load %arg1[%c0_55, %c3, %c0_56, %c0_57] : memref<1x4x16x16xf32, #tpu.memory_space<vmem>>, vector<1x1x16x16xf32>
    %57 = vector.shape_cast %56 : vector<1x1x16x16xf32> to vector<16x16xf32>
    %58 = tpu.concatenate %0, %57, %0 in 0 : vector<1x16xf32>, vector<16x16xf32>, vector<1x16xf32> -> vector<18x16xf32>
    %59 = vector.extract_strided_slice %58 {offsets = [0, 0], sizes = [16, 16], strides = [1, 1]} : vector<18x16xf32> to vector<16x16xf32>
    %c0_58 = arith.constant 0 : index
    %c3_59 = arith.constant 3 : index
    %c0_60 = arith.constant 0 : index
    %c0_61 = arith.constant 0 : index
    %60 = vector.load %arg2[%c0_58, %c3_59, %c0_60, %c0_61] : memref<3x4x16x128xf32, #tpu.memory_space<vmem>>, vector<1x1x16x128xf32>
    %61 = vector.shape_cast %60 : vector<1x1x16x128xf32> to vector<16x128xf32>
    %cst_62 = arith.constant dense<0.000000e+00> : vector<16x128xf32>
    %62 = tpu.matmul %59, %61, %cst_62 {dimension_numbers = #tpu.dot_dimension_numbers<[1], [0], [0], [1], [0, 0, 1, 1], [], []>} : vector<16x16xf32>, vector<16x128xf32>, vector<16x128xf32> -> vector<16x128xf32>
    %63 = arith.addf %55, %62 : vector<16x128xf32>
    %64 = vector.extract_strided_slice %58 {offsets = [1, 0], sizes = [16, 16], strides = [1, 1]} : vector<18x16xf32> to vector<16x16xf32>
    %c1_63 = arith.constant 1 : index
    %c3_64 = arith.constant 3 : index
    %c0_65 = arith.constant 0 : index
    %c0_66 = arith.constant 0 : index
    %65 = vector.load %arg2[%c1_63, %c3_64, %c0_65, %c0_66] : memref<3x4x16x128xf32, #tpu.memory_space<vmem>>, vector<1x1x16x128xf32>
    %66 = vector.shape_cast %65 : vector<1x1x16x128xf32> to vector<16x128xf32>
    %cst_67 = arith.constant dense<0.000000e+00> : vector<16x128xf32>
    %67 = tpu.matmul %64, %66, %cst_67 {dimension_numbers = #tpu.dot_dimension_numbers<[1], [0], [0], [1], [0, 0, 1, 1], [], []>} : vector<16x16xf32>, vector<16x128xf32>, vector<16x128xf32> -> vector<16x128xf32>
    %68 = arith.addf %63, %67 : vector<16x128xf32>
    %69 = vector.extract_strided_slice %58 {offsets = [2, 0], sizes = [16, 16], strides = [1, 1]} : vector<18x16xf32> to vector<16x16xf32>
    %c2_68 = arith.constant 2 : index
    %c3_69 = arith.constant 3 : index
    %c0_70 = arith.constant 0 : index
    %c0_71 = arith.constant 0 : index
    %70 = vector.load %arg2[%c2_68, %c3_69, %c0_70, %c0_71] : memref<3x4x16x128xf32, #tpu.memory_space<vmem>>, vector<1x1x16x128xf32>
    %71 = vector.shape_cast %70 : vector<1x1x16x128xf32> to vector<16x128xf32>
    %cst_72 = arith.constant dense<0.000000e+00> : vector<16x128xf32>
    %72 = tpu.matmul %69, %71, %cst_72 {dimension_numbers = #tpu.dot_dimension_numbers<[1], [0], [0], [1], [0, 0, 1, 1], [], []>} : vector<16x16xf32>, vector<16x128xf32>, vector<16x128xf32> -> vector<16x128xf32>
    %73 = arith.addf %68, %72 : vector<16x128xf32>
    %cst_73 = arith.constant dense<0.000000e+00> : vector<128xf32>
    %74 = vector.multi_reduction <add>, %73, %cst_73 [0] : vector<16x128xf32> to vector<128xf32>
    %75 = vector.shape_cast %74 : vector<128xf32> to vector<1x128xf32>
    %76 = arith.mulf %73, %73 : vector<16x128xf32>
    %cst_74 = arith.constant dense<0.000000e+00> : vector<128xf32>
    %77 = vector.multi_reduction <add>, %76, %cst_74 [0] : vector<16x128xf32> to vector<128xf32>
    %78 = vector.shape_cast %77 : vector<128xf32> to vector<1x128xf32>
    %79 = tpu.concatenate %75, %78 in 0 : vector<1x128xf32>, vector<1x128xf32> -> vector<2x128xf32>
    %c0_75 = arith.constant 0 : index
    %c0_76 = arith.constant 0 : index
    %80 = vector.load %arg3[%c0_75, %c0_76] : memref<128x8xf32, #tpu.memory_space<vmem>>, vector<128x8xf32>
    %cst_77 = arith.constant dense<0.000000e+00> : vector<2x8xf32>
    %81 = tpu.matmul %79, %80, %cst_77 {dimension_numbers = #tpu.dot_dimension_numbers<[1], [0], [0], [1], [0, 0, 1, 1], [], []>} : vector<2x128xf32>, vector<128x8xf32>, vector<2x8xf32> -> vector<2x8xf32>
    %c0_78 = arith.constant 0 : index
    %c0_79 = arith.constant 0 : index
    %c0_80 = arith.constant 0 : index
    %82 = vector.load %arg5[%c0_78, %c0_79, %c0_80] : memref<1x2x8xf32, #tpu.memory_space<vmem>>, vector<1x2x8xf32>
    %83 = vector.shape_cast %82 : vector<1x2x8xf32> to vector<2x8xf32>
    %84 = vector.shape_cast %81 : vector<2x8xf32> to vector<1x2x8xf32>
    tpu.vector_store %arg5[%c0_78, %c0_79, %c0_80], %84 {strides = array<i32>} : memref<1x2x8xf32, #tpu.memory_space<vmem>>, vector<1x2x8xf32>,
    %c0_81 = arith.constant 0 : index
    %c0_82 = arith.constant 0 : index
    %c0_83 = arith.constant 0 : index
    %85 = vector.load %arg4[%c0_81, %c0_82, %c0_83] : memref<1x16x128xf32, #tpu.memory_space<vmem>>, vector<1x16x128xf32>
    %86 = vector.shape_cast %85 : vector<1x16x128xf32> to vector<16x128xf32>
    %87 = vector.shape_cast %73 : vector<16x128xf32> to vector<1x16x128xf32>
    tpu.vector_store %arg4[%c0_81, %c0_82, %c0_83], %87 {strides = array<i32>} : memref<1x16x128xf32, #tpu.memory_space<vmem>>, vector<1x16x128xf32>,
    return
  }
  func.func @transform_0(%arg0: i32) -> (i32, i32, i32, i32) {
    %c0_i32 = arith.constant 0 : i32
    %c0_i32_0 = arith.constant 0 : i32
    %c0_i32_1 = arith.constant 0 : i32
    %c0_i32_2 = arith.constant 0 : i32
    return %arg0, %c0_i32, %c0_i32_0, %c0_i32_1 : i32, i32, i32, i32
  }
  func.func @transform_1(%arg0: i32) -> (i32, i32, i32, i32) {
    %c0_i32 = arith.constant 0 : i32
    %c0_i32_0 = arith.constant 0 : i32
    %c0_i32_1 = arith.constant 0 : i32
    %c0_i32_2 = arith.constant 0 : i32
    %c0_i32_3 = arith.constant 0 : i32
    return %c0_i32, %c0_i32_0, %c0_i32_1, %c0_i32_2 : i32, i32, i32, i32
  }
  func.func @transform_2(%arg0: i32) -> (i32, i32) {
    %c0_i32 = arith.constant 0 : i32
    %c0_i32_0 = arith.constant 0 : i32
    %c0_i32_1 = arith.constant 0 : i32
    return %c0_i32, %c0_i32_0 : i32, i32
  }
  func.func @transform_3(%arg0: i32) -> (i32, i32, i32) {
    %c0_i32 = arith.constant 0 : i32
    %c0_i32_0 = arith.constant 0 : i32
    %c0_i32_1 = arith.constant 0 : i32
    return %arg0, %c0_i32, %c0_i32_0 : i32, i32, i32
  }
  func.func @transform_4(%arg0: i32) -> (i32, i32, i32) {
    %c0_i32 = arith.constant 0 : i32
    %c0_i32_0 = arith.constant 0 : i32
    %c0_i32_1 = arith.constant 0 : i32
    return %arg0, %c0_i32, %c0_i32_0 : i32, i32, i32
  }
}

module attributes {stable_mosaic.version = 11 : i64} {
  func.func @_conv2_kernel(%arg0: i32, %arg1: memref<1x16x128xf32, #tpu.memory_space<vmem>>, %arg2: memref<3x128x128xf32, #tpu.memory_space<vmem>>, %arg3: memref<2x128xf32, #tpu.memory_space<vmem>>, %arg4: memref<128x8xf32, #tpu.memory_space<vmem>>, %arg5: memref<1x16x128xf32, #tpu.memory_space<vmem>>, %arg6: memref<1x2x8xf32, #tpu.memory_space<vmem>>) attributes {dimension_semantics = [#tpu.dimension_semantics<parallel>], iteration_bounds = array<i64: 2>, scalar_prefetch = 0 : i64, scratch_operands = 0 : i64, tpu.core_type = #tpu.core_type<tc>, window_params = [{transform_indices = @transform_0, window_bounds = array<i64: 1, 16, 128>}, {pipeline_mode = #tpu.pipeline_mode<synchronous>, transform_indices = @transform_1, window_bounds = array<i64: 3, 128, 128>}, {pipeline_mode = #tpu.pipeline_mode<synchronous>, transform_indices = @transform_2, window_bounds = array<i64: 2, 128>}, {pipeline_mode = #tpu.pipeline_mode<synchronous>, transform_indices = @transform_3, window_bounds = array<i64: 128, 8>}, {transform_indices = @transform_4, window_bounds = array<i64: 1, 16, 128>}, {transform_indices = @transform_5, window_bounds = array<i64: 1, 2, 8>}]} {
    %c0 = arith.constant 0 : index
    %c0_0 = arith.constant 0 : index
    %c0_1 = arith.constant 0 : index
    %0 = vector.load %arg1[%c0, %c0_0, %c0_1] : memref<1x16x128xf32, #tpu.memory_space<vmem>>, vector<1x16x128xf32>
    %1 = vector.shape_cast %0 : vector<1x16x128xf32> to vector<16x128xf32>
    %c0_2 = arith.constant 0 : index
    %c0_3 = arith.constant 0 : index
    %2 = vector.load %arg3[%c0_2, %c0_3] : memref<2x128xf32, #tpu.memory_space<vmem>>, vector<1x128xf32>
    %3 = vector.broadcast %2 : vector<1x128xf32> to vector<16x128xf32>
    %4 = arith.mulf %1, %3 : vector<16x128xf32>
    %c1 = arith.constant 1 : index
    %c0_4 = arith.constant 0 : index
    %5 = vector.load %arg3[%c1, %c0_4] : memref<2x128xf32, #tpu.memory_space<vmem>>, vector<1x128xf32>
    %6 = vector.broadcast %5 : vector<1x128xf32> to vector<16x128xf32>
    %7 = arith.addf %4, %6 : vector<16x128xf32>
    %cst = arith.constant 0.000000e+00 : f32
    %8 = vector.broadcast %cst : f32 to vector<16x128xf32>
    %9 = arith.maximumf %7, %8 : vector<16x128xf32>
    %cst_5 = arith.constant 0.000000e+00 : f32
    %10 = vector.broadcast %cst_5 : f32 to vector<1x128xf32>
    %11 = tpu.concatenate %10, %9, %10 in 0 : vector<1x128xf32>, vector<16x128xf32>, vector<1x128xf32> -> vector<18x128xf32>
    %cst_6 = arith.constant 0.000000e+00 : f32
    %12 = vector.broadcast %cst_6 : f32 to vector<16x128xf32>
    %13 = vector.extract_strided_slice %11 {offsets = [0, 0], sizes = [16, 128], strides = [1, 1]} : vector<18x128xf32> to vector<16x128xf32>
    %c0_7 = arith.constant 0 : index
    %c0_8 = arith.constant 0 : index
    %c0_9 = arith.constant 0 : index
    %14 = vector.load %arg2[%c0_7, %c0_8, %c0_9] : memref<3x128x128xf32, #tpu.memory_space<vmem>>, vector<1x128x128xf32>
    %15 = vector.shape_cast %14 : vector<1x128x128xf32> to vector<128x128xf32>
    %cst_10 = arith.constant dense<0.000000e+00> : vector<16x128xf32>
    %16 = tpu.matmul %13, %15, %cst_10 {dimension_numbers = #tpu.dot_dimension_numbers<[1], [0], [0], [1], [0, 0, 1, 1], [], []>} : vector<16x128xf32>, vector<128x128xf32>, vector<16x128xf32> -> vector<16x128xf32>
    %17 = arith.addf %12, %16 : vector<16x128xf32>
    %18 = vector.extract_strided_slice %11 {offsets = [1, 0], sizes = [16, 128], strides = [1, 1]} : vector<18x128xf32> to vector<16x128xf32>
    %c1_11 = arith.constant 1 : index
    %c0_12 = arith.constant 0 : index
    %c0_13 = arith.constant 0 : index
    %19 = vector.load %arg2[%c1_11, %c0_12, %c0_13] : memref<3x128x128xf32, #tpu.memory_space<vmem>>, vector<1x128x128xf32>
    %20 = vector.shape_cast %19 : vector<1x128x128xf32> to vector<128x128xf32>
    %cst_14 = arith.constant dense<0.000000e+00> : vector<16x128xf32>
    %21 = tpu.matmul %18, %20, %cst_14 {dimension_numbers = #tpu.dot_dimension_numbers<[1], [0], [0], [1], [0, 0, 1, 1], [], []>} : vector<16x128xf32>, vector<128x128xf32>, vector<16x128xf32> -> vector<16x128xf32>
    %22 = arith.addf %17, %21 : vector<16x128xf32>
    %23 = vector.extract_strided_slice %11 {offsets = [2, 0], sizes = [16, 128], strides = [1, 1]} : vector<18x128xf32> to vector<16x128xf32>
    %c2 = arith.constant 2 : index
    %c0_15 = arith.constant 0 : index
    %c0_16 = arith.constant 0 : index
    %24 = vector.load %arg2[%c2, %c0_15, %c0_16] : memref<3x128x128xf32, #tpu.memory_space<vmem>>, vector<1x128x128xf32>
    %25 = vector.shape_cast %24 : vector<1x128x128xf32> to vector<128x128xf32>
    %cst_17 = arith.constant dense<0.000000e+00> : vector<16x128xf32>
    %26 = tpu.matmul %23, %25, %cst_17 {dimension_numbers = #tpu.dot_dimension_numbers<[1], [0], [0], [1], [0, 0, 1, 1], [], []>} : vector<16x128xf32>, vector<128x128xf32>, vector<16x128xf32> -> vector<16x128xf32>
    %27 = arith.addf %22, %26 : vector<16x128xf32>
    %cst_18 = arith.constant dense<0.000000e+00> : vector<128xf32>
    %28 = vector.multi_reduction <add>, %27, %cst_18 [0] : vector<16x128xf32> to vector<128xf32>
    %29 = vector.shape_cast %28 : vector<128xf32> to vector<1x128xf32>
    %30 = arith.mulf %27, %27 : vector<16x128xf32>
    %cst_19 = arith.constant dense<0.000000e+00> : vector<128xf32>
    %31 = vector.multi_reduction <add>, %30, %cst_19 [0] : vector<16x128xf32> to vector<128xf32>
    %32 = vector.shape_cast %31 : vector<128xf32> to vector<1x128xf32>
    %33 = tpu.concatenate %29, %32 in 0 : vector<1x128xf32>, vector<1x128xf32> -> vector<2x128xf32>
    %c0_20 = arith.constant 0 : index
    %c0_21 = arith.constant 0 : index
    %34 = vector.load %arg4[%c0_20, %c0_21] : memref<128x8xf32, #tpu.memory_space<vmem>>, vector<128x8xf32>
    %cst_22 = arith.constant dense<0.000000e+00> : vector<2x8xf32>
    %35 = tpu.matmul %33, %34, %cst_22 {dimension_numbers = #tpu.dot_dimension_numbers<[1], [0], [0], [1], [0, 0, 1, 1], [], []>} : vector<2x128xf32>, vector<128x8xf32>, vector<2x8xf32> -> vector<2x8xf32>
    %c0_23 = arith.constant 0 : index
    %c0_24 = arith.constant 0 : index
    %c0_25 = arith.constant 0 : index
    %36 = vector.load %arg6[%c0_23, %c0_24, %c0_25] : memref<1x2x8xf32, #tpu.memory_space<vmem>>, vector<1x2x8xf32>
    %37 = vector.shape_cast %36 : vector<1x2x8xf32> to vector<2x8xf32>
    %38 = vector.shape_cast %35 : vector<2x8xf32> to vector<1x2x8xf32>
    tpu.vector_store %arg6[%c0_23, %c0_24, %c0_25], %38 {strides = array<i32>} : memref<1x2x8xf32, #tpu.memory_space<vmem>>, vector<1x2x8xf32>,
    %c0_26 = arith.constant 0 : index
    %c0_27 = arith.constant 0 : index
    %c0_28 = arith.constant 0 : index
    %39 = vector.load %arg5[%c0_26, %c0_27, %c0_28] : memref<1x16x128xf32, #tpu.memory_space<vmem>>, vector<1x16x128xf32>
    %40 = vector.shape_cast %39 : vector<1x16x128xf32> to vector<16x128xf32>
    %41 = vector.shape_cast %27 : vector<16x128xf32> to vector<1x16x128xf32>
    tpu.vector_store %arg5[%c0_26, %c0_27, %c0_28], %41 {strides = array<i32>} : memref<1x16x128xf32, #tpu.memory_space<vmem>>, vector<1x16x128xf32>,
    return
  }
  func.func @transform_0(%arg0: i32) -> (i32, i32, i32) {
    %c0_i32 = arith.constant 0 : i32
    %c0_i32_0 = arith.constant 0 : i32
    %c0_i32_1 = arith.constant 0 : i32
    return %arg0, %c0_i32, %c0_i32_0 : i32, i32, i32
  }
  func.func @transform_1(%arg0: i32) -> (i32, i32, i32) {
    %c0_i32 = arith.constant 0 : i32
    %c0_i32_0 = arith.constant 0 : i32
    %c0_i32_1 = arith.constant 0 : i32
    %c0_i32_2 = arith.constant 0 : i32
    return %c0_i32, %c0_i32_0, %c0_i32_1 : i32, i32, i32
  }
  func.func @transform_2(%arg0: i32) -> (i32, i32) {
    %c0_i32 = arith.constant 0 : i32
    %c0_i32_0 = arith.constant 0 : i32
    %c0_i32_1 = arith.constant 0 : i32
    return %c0_i32, %c0_i32_0 : i32, i32
  }
  func.func @transform_3(%arg0: i32) -> (i32, i32) {
    %c0_i32 = arith.constant 0 : i32
    %c0_i32_0 = arith.constant 0 : i32
    %c0_i32_1 = arith.constant 0 : i32
    return %c0_i32, %c0_i32_0 : i32, i32
  }
  func.func @transform_4(%arg0: i32) -> (i32, i32, i32) {
    %c0_i32 = arith.constant 0 : i32
    %c0_i32_0 = arith.constant 0 : i32
    %c0_i32_1 = arith.constant 0 : i32
    return %arg0, %c0_i32, %c0_i32_0 : i32, i32, i32
  }
  func.func @transform_5(%arg0: i32) -> (i32, i32, i32) {
    %c0_i32 = arith.constant 0 : i32
    %c0_i32_0 = arith.constant 0 : i32
    %c0_i32_1 = arith.constant 0 : i32
    return %arg0, %c0_i32, %c0_i32_0 : i32, i32, i32
  }
}

module attributes {stable_mosaic.version = 11 : i64} {
  func.func @_bn_relu_to_nchw_kernel(%arg0: i32, %arg1: memref<1x16x128xf32, #tpu.memory_space<vmem>>, %arg2: memref<2x128xf32, #tpu.memory_space<vmem>>, %arg3: memref<8x128x16xf32, #tpu.memory_space<vmem>>, %arg4: memref<1x8x16x16xf32, #tpu.memory_space<vmem>>) attributes {dimension_semantics = [#tpu.dimension_semantics<parallel>], iteration_bounds = array<i64: 2>, scalar_prefetch = 0 : i64, scratch_operands = 0 : i64, tpu.core_type = #tpu.core_type<tc>, window_params = [{transform_indices = @transform_0, window_bounds = array<i64: 1, 16, 128>}, {pipeline_mode = #tpu.pipeline_mode<synchronous>, transform_indices = @transform_1, window_bounds = array<i64: 2, 128>}, {pipeline_mode = #tpu.pipeline_mode<synchronous>, transform_indices = @transform_2, window_bounds = array<i64: 8, 128, 16>}, {transform_indices = @transform_3, window_bounds = array<i64: 1, 8, 16, 16>}]} {
    %c0 = arith.constant 0 : index
    %c0_0 = arith.constant 0 : index
    %c0_1 = arith.constant 0 : index
    %0 = vector.load %arg1[%c0, %c0_0, %c0_1] : memref<1x16x128xf32, #tpu.memory_space<vmem>>, vector<1x16x128xf32>
    %1 = vector.shape_cast %0 : vector<1x16x128xf32> to vector<16x128xf32>
    %c0_2 = arith.constant 0 : index
    %c0_3 = arith.constant 0 : index
    %2 = vector.load %arg2[%c0_2, %c0_3] : memref<2x128xf32, #tpu.memory_space<vmem>>, vector<1x128xf32>
    %3 = vector.broadcast %2 : vector<1x128xf32> to vector<16x128xf32>
    %4 = arith.mulf %1, %3 : vector<16x128xf32>
    %c1 = arith.constant 1 : index
    %c0_4 = arith.constant 0 : index
    %5 = vector.load %arg2[%c1, %c0_4] : memref<2x128xf32, #tpu.memory_space<vmem>>, vector<1x128xf32>
    %6 = vector.broadcast %5 : vector<1x128xf32> to vector<16x128xf32>
    %7 = arith.addf %4, %6 : vector<16x128xf32>
    %cst = arith.constant 0.000000e+00 : f32
    %8 = vector.broadcast %cst : f32 to vector<16x128xf32>
    %9 = arith.maximumf %7, %8 : vector<16x128xf32>
    %c0_5 = arith.constant 0 : index
    %c0_6 = arith.constant 0 : index
    %c0_7 = arith.constant 0 : index
    %10 = vector.load %arg3[%c0_5, %c0_6, %c0_7] : memref<8x128x16xf32, #tpu.memory_space<vmem>>, vector<1x128x16xf32>
    %11 = vector.shape_cast %10 : vector<1x128x16xf32> to vector<128x16xf32>
    %cst_8 = arith.constant dense<0.000000e+00> : vector<16x16xf32>
    %12 = tpu.matmul %9, %11, %cst_8 {dimension_numbers = #tpu.dot_dimension_numbers<[1], [0], [0], [1], [0, 0, 1, 1], [], []>} : vector<16x128xf32>, vector<128x16xf32>, vector<16x16xf32> -> vector<16x16xf32>
    %c0_9 = arith.constant 0 : index
    %c0_10 = arith.constant 0 : index
    %c0_11 = arith.constant 0 : index
    %c0_12 = arith.constant 0 : index
    %13 = vector.load %arg4[%c0_9, %c0_10, %c0_11, %c0_12] : memref<1x8x16x16xf32, #tpu.memory_space<vmem>>, vector<1x1x16x16xf32>
    %14 = vector.shape_cast %13 : vector<1x1x16x16xf32> to vector<16x16xf32>
    %15 = vector.shape_cast %12 : vector<16x16xf32> to vector<1x1x16x16xf32>
    tpu.vector_store %arg4[%c0_9, %c0_10, %c0_11, %c0_12], %15 {strides = array<i32>} : memref<1x8x16x16xf32, #tpu.memory_space<vmem>>, vector<1x1x16x16xf32>,
    %c1_13 = arith.constant 1 : index
    %c0_14 = arith.constant 0 : index
    %c0_15 = arith.constant 0 : index
    %16 = vector.load %arg3[%c1_13, %c0_14, %c0_15] : memref<8x128x16xf32, #tpu.memory_space<vmem>>, vector<1x128x16xf32>
    %17 = vector.shape_cast %16 : vector<1x128x16xf32> to vector<128x16xf32>
    %cst_16 = arith.constant dense<0.000000e+00> : vector<16x16xf32>
    %18 = tpu.matmul %9, %17, %cst_16 {dimension_numbers = #tpu.dot_dimension_numbers<[1], [0], [0], [1], [0, 0, 1, 1], [], []>} : vector<16x128xf32>, vector<128x16xf32>, vector<16x16xf32> -> vector<16x16xf32>
    %c0_17 = arith.constant 0 : index
    %c1_18 = arith.constant 1 : index
    %c0_19 = arith.constant 0 : index
    %c0_20 = arith.constant 0 : index
    %19 = vector.load %arg4[%c0_17, %c1_18, %c0_19, %c0_20] : memref<1x8x16x16xf32, #tpu.memory_space<vmem>>, vector<1x1x16x16xf32>
    %20 = vector.shape_cast %19 : vector<1x1x16x16xf32> to vector<16x16xf32>
    %21 = vector.shape_cast %18 : vector<16x16xf32> to vector<1x1x16x16xf32>
    tpu.vector_store %arg4[%c0_17, %c1_18, %c0_19, %c0_20], %21 {strides = array<i32>} : memref<1x8x16x16xf32, #tpu.memory_space<vmem>>, vector<1x1x16x16xf32>,
    %c2 = arith.constant 2 : index
    %c0_21 = arith.constant 0 : index
    %c0_22 = arith.constant 0 : index
    %22 = vector.load %arg3[%c2, %c0_21, %c0_22] : memref<8x128x16xf32, #tpu.memory_space<vmem>>, vector<1x128x16xf32>
    %23 = vector.shape_cast %22 : vector<1x128x16xf32> to vector<128x16xf32>
    %cst_23 = arith.constant dense<0.000000e+00> : vector<16x16xf32>
    %24 = tpu.matmul %9, %23, %cst_23 {dimension_numbers = #tpu.dot_dimension_numbers<[1], [0], [0], [1], [0, 0, 1, 1], [], []>} : vector<16x128xf32>, vector<128x16xf32>, vector<16x16xf32> -> vector<16x16xf32>
    %c0_24 = arith.constant 0 : index
    %c2_25 = arith.constant 2 : index
    %c0_26 = arith.constant 0 : index
    %c0_27 = arith.constant 0 : index
    %25 = vector.load %arg4[%c0_24, %c2_25, %c0_26, %c0_27] : memref<1x8x16x16xf32, #tpu.memory_space<vmem>>, vector<1x1x16x16xf32>
    %26 = vector.shape_cast %25 : vector<1x1x16x16xf32> to vector<16x16xf32>
    %27 = vector.shape_cast %24 : vector<16x16xf32> to vector<1x1x16x16xf32>
    tpu.vector_store %arg4[%c0_24, %c2_25, %c0_26, %c0_27], %27 {strides = array<i32>} : memref<1x8x16x16xf32, #tpu.memory_space<vmem>>, vector<1x1x16x16xf32>,
    %c3 = arith.constant 3 : index
    %c0_28 = arith.constant 0 : index
    %c0_29 = arith.constant 0 : index
    %28 = vector.load %arg3[%c3, %c0_28, %c0_29] : memref<8x128x16xf32, #tpu.memory_space<vmem>>, vector<1x128x16xf32>
    %29 = vector.shape_cast %28 : vector<1x128x16xf32> to vector<128x16xf32>
    %cst_30 = arith.constant dense<0.000000e+00> : vector<16x16xf32>
    %30 = tpu.matmul %9, %29, %cst_30 {dimension_numbers = #tpu.dot_dimension_numbers<[1], [0], [0], [1], [0, 0, 1, 1], [], []>} : vector<16x128xf32>, vector<128x16xf32>, vector<16x16xf32> -> vector<16x16xf32>
    %c0_31 = arith.constant 0 : index
    %c3_32 = arith.constant 3 : index
    %c0_33 = arith.constant 0 : index
    %c0_34 = arith.constant 0 : index
    %31 = vector.load %arg4[%c0_31, %c3_32, %c0_33, %c0_34] : memref<1x8x16x16xf32, #tpu.memory_space<vmem>>, vector<1x1x16x16xf32>
    %32 = vector.shape_cast %31 : vector<1x1x16x16xf32> to vector<16x16xf32>
    %33 = vector.shape_cast %30 : vector<16x16xf32> to vector<1x1x16x16xf32>
    tpu.vector_store %arg4[%c0_31, %c3_32, %c0_33, %c0_34], %33 {strides = array<i32>} : memref<1x8x16x16xf32, #tpu.memory_space<vmem>>, vector<1x1x16x16xf32>,
    %c4 = arith.constant 4 : index
    %c0_35 = arith.constant 0 : index
    %c0_36 = arith.constant 0 : index
    %34 = vector.load %arg3[%c4, %c0_35, %c0_36] : memref<8x128x16xf32, #tpu.memory_space<vmem>>, vector<1x128x16xf32>
    %35 = vector.shape_cast %34 : vector<1x128x16xf32> to vector<128x16xf32>
    %cst_37 = arith.constant dense<0.000000e+00> : vector<16x16xf32>
    %36 = tpu.matmul %9, %35, %cst_37 {dimension_numbers = #tpu.dot_dimension_numbers<[1], [0], [0], [1], [0, 0, 1, 1], [], []>} : vector<16x128xf32>, vector<128x16xf32>, vector<16x16xf32> -> vector<16x16xf32>
    %c0_38 = arith.constant 0 : index
    %c4_39 = arith.constant 4 : index
    %c0_40 = arith.constant 0 : index
    %c0_41 = arith.constant 0 : index
    %37 = vector.load %arg4[%c0_38, %c4_39, %c0_40, %c0_41] : memref<1x8x16x16xf32, #tpu.memory_space<vmem>>, vector<1x1x16x16xf32>
    %38 = vector.shape_cast %37 : vector<1x1x16x16xf32> to vector<16x16xf32>
    %39 = vector.shape_cast %36 : vector<16x16xf32> to vector<1x1x16x16xf32>
    tpu.vector_store %arg4[%c0_38, %c4_39, %c0_40, %c0_41], %39 {strides = array<i32>} : memref<1x8x16x16xf32, #tpu.memory_space<vmem>>, vector<1x1x16x16xf32>,
    %c5 = arith.constant 5 : index
    %c0_42 = arith.constant 0 : index
    %c0_43 = arith.constant 0 : index
    %40 = vector.load %arg3[%c5, %c0_42, %c0_43] : memref<8x128x16xf32, #tpu.memory_space<vmem>>, vector<1x128x16xf32>
    %41 = vector.shape_cast %40 : vector<1x128x16xf32> to vector<128x16xf32>
    %cst_44 = arith.constant dense<0.000000e+00> : vector<16x16xf32>
    %42 = tpu.matmul %9, %41, %cst_44 {dimension_numbers = #tpu.dot_dimension_numbers<[1], [0], [0], [1], [0, 0, 1, 1], [], []>} : vector<16x128xf32>, vector<128x16xf32>, vector<16x16xf32> -> vector<16x16xf32>
    %c0_45 = arith.constant 0 : index
    %c5_46 = arith.constant 5 : index
    %c0_47 = arith.constant 0 : index
    %c0_48 = arith.constant 0 : index
    %43 = vector.load %arg4[%c0_45, %c5_46, %c0_47, %c0_48] : memref<1x8x16x16xf32, #tpu.memory_space<vmem>>, vector<1x1x16x16xf32>
    %44 = vector.shape_cast %43 : vector<1x1x16x16xf32> to vector<16x16xf32>
    %45 = vector.shape_cast %42 : vector<16x16xf32> to vector<1x1x16x16xf32>
    tpu.vector_store %arg4[%c0_45, %c5_46, %c0_47, %c0_48], %45 {strides = array<i32>} : memref<1x8x16x16xf32, #tpu.memory_space<vmem>>, vector<1x1x16x16xf32>,
    %c6 = arith.constant 6 : index
    %c0_49 = arith.constant 0 : index
    %c0_50 = arith.constant 0 : index
    %46 = vector.load %arg3[%c6, %c0_49, %c0_50] : memref<8x128x16xf32, #tpu.memory_space<vmem>>, vector<1x128x16xf32>
    %47 = vector.shape_cast %46 : vector<1x128x16xf32> to vector<128x16xf32>
    %cst_51 = arith.constant dense<0.000000e+00> : vector<16x16xf32>
    %48 = tpu.matmul %9, %47, %cst_51 {dimension_numbers = #tpu.dot_dimension_numbers<[1], [0], [0], [1], [0, 0, 1, 1], [], []>} : vector<16x128xf32>, vector<128x16xf32>, vector<16x16xf32> -> vector<16x16xf32>
    %c0_52 = arith.constant 0 : index
    %c6_53 = arith.constant 6 : index
    %c0_54 = arith.constant 0 : index
    %c0_55 = arith.constant 0 : index
    %49 = vector.load %arg4[%c0_52, %c6_53, %c0_54, %c0_55] : memref<1x8x16x16xf32, #tpu.memory_space<vmem>>, vector<1x1x16x16xf32>
    %50 = vector.shape_cast %49 : vector<1x1x16x16xf32> to vector<16x16xf32>
    %51 = vector.shape_cast %48 : vector<16x16xf32> to vector<1x1x16x16xf32>
    tpu.vector_store %arg4[%c0_52, %c6_53, %c0_54, %c0_55], %51 {strides = array<i32>} : memref<1x8x16x16xf32, #tpu.memory_space<vmem>>, vector<1x1x16x16xf32>,
    %c7 = arith.constant 7 : index
    %c0_56 = arith.constant 0 : index
    %c0_57 = arith.constant 0 : index
    %52 = vector.load %arg3[%c7, %c0_56, %c0_57] : memref<8x128x16xf32, #tpu.memory_space<vmem>>, vector<1x128x16xf32>
    %53 = vector.shape_cast %52 : vector<1x128x16xf32> to vector<128x16xf32>
    %cst_58 = arith.constant dense<0.000000e+00> : vector<16x16xf32>
    %54 = tpu.matmul %9, %53, %cst_58 {dimension_numbers = #tpu.dot_dimension_numbers<[1], [0], [0], [1], [0, 0, 1, 1], [], []>} : vector<16x128xf32>, vector<128x16xf32>, vector<16x16xf32> -> vector<16x16xf32>
    %c0_59 = arith.constant 0 : index
    %c7_60 = arith.constant 7 : index
    %c0_61 = arith.constant 0 : index
    %c0_62 = arith.constant 0 : index
    %55 = vector.load %arg4[%c0_59, %c7_60, %c0_61, %c0_62] : memref<1x8x16x16xf32, #tpu.memory_space<vmem>>, vector<1x1x16x16xf32>
    %56 = vector.shape_cast %55 : vector<1x1x16x16xf32> to vector<16x16xf32>
    %57 = vector.shape_cast %54 : vector<16x16xf32> to vector<1x1x16x16xf32>
    tpu.vector_store %arg4[%c0_59, %c7_60, %c0_61, %c0_62], %57 {strides = array<i32>} : memref<1x8x16x16xf32, #tpu.memory_space<vmem>>, vector<1x1x16x16xf32>,
    return
  }
  func.func @transform_0(%arg0: i32) -> (i32, i32, i32) {
    %c0_i32 = arith.constant 0 : i32
    %c0_i32_0 = arith.constant 0 : i32
    %c0_i32_1 = arith.constant 0 : i32
    return %arg0, %c0_i32, %c0_i32_0 : i32, i32, i32
  }
  func.func @transform_1(%arg0: i32) -> (i32, i32) {
    %c0_i32 = arith.constant 0 : i32
    %c0_i32_0 = arith.constant 0 : i32
    %c0_i32_1 = arith.constant 0 : i32
    return %c0_i32, %c0_i32_0 : i32, i32
  }
  func.func @transform_2(%arg0: i32) -> (i32, i32, i32) {
    %c0_i32 = arith.constant 0 : i32
    %c0_i32_0 = arith.constant 0 : i32
    %c0_i32_1 = arith.constant 0 : i32
    %c0_i32_2 = arith.constant 0 : i32
    return %c0_i32, %c0_i32_0, %c0_i32_1 : i32, i32, i32
  }
  func.func @transform_3(%arg0: i32) -> (i32, i32, i32, i32) {
    %c0_i32 = arith.constant 0 : i32
    %c0_i32_0 = arith.constant 0 : i32
    %c0_i32_1 = arith.constant 0 : i32
    %c0_i32_2 = arith.constant 0 : i32
    return %arg0, %c0_i32, %c0_i32_0, %c0_i32_1 : i32, i32, i32, i32
  }
}

</mosaic_0001>

<llo_original>
// kernel: tile.28
$region0: #{tile.28}
  %s0 = inlined_call_operand.vmem [shape: f32[16,8], index: 0, kind: input, shape index: {}]
  %s1 = inlined_call_operand.vmem [shape: f32[1,128], index: 1, kind: output, shape index: {}]
  $region1: #{tile.28} parent=0
    #allocation0 [shape = 'u8[4096]{0}', space=vmem, size = 0x1000, scoped, tag = 'scoped mem for output reshape']
    %v2 = vld [vmem:[%s0] sm:$0x1]
    %vm3 = vcmask 64512
    %4 = vst.msk [vmem:[#allocation0] sm:$0x1] %vm3, %v2
    %s5 = scalar_lea.vmem %s0, 15
    %v6 = vld [vmem:[%s5] sm:$0x1]
    %7 = vrot.lane.b32.xlu0 %v6, 120
    %v8 = vpop.permute.xlu0 %7
    %vm9 = vcmask 1048512
    %10 = vst.msk [vmem:[#allocation0] sm:$0x1] %vm9, %v8
    %s11 = scalar_lea.vmem %s0, 14
    %v12 = vld [vmem:[%s11] sm:$0x1]
    %13 = vrot.lane.b32.xlu0 %v12, 112
    %v14 = vpop.permute.xlu0 %13
    %vm15 = vcmask 982912
    %16 = vst.msk [vmem:[#allocation0] sm:$0x1] %vm15, %v14
    %s17 = scalar_lea.vmem %s0, 13
    %v18 = vld [vmem:[%s17] sm:$0x1]
    %19 = vrot.lane.b32.xlu0 %v18, 104
    %v20 = vpop.permute.xlu0 %19
    %vm21 = vcmask 917312
    %22 = vst.msk [vmem:[#allocation0] sm:$0x1] %vm21, %v20
    %s23 = scalar_lea.vmem %s0, 12
    %v24 = vld [vmem:[%s23] sm:$0x1]
    %25 = vrot.lane.b32.xlu0 %v24, 96
    %v26 = vpop.permute.xlu0 %25
    %vm27 = vcmask 851712
    %28 = vst.msk [vmem:[#allocation0] sm:$0x1] %vm27, %v26
    %s29 = scalar_lea.vmem %s0, 11
    %v30 = vld [vmem:[%s29] sm:$0x1]
    %31 = vrot.lane.b32.xlu0 %v30, 88
    %v32 = vpop.permute.xlu0 %31
    %vm33 = vcmask 786112
    %34 = vst.msk [vmem:[#allocation0] sm:$0x1] %vm33, %v32
    %s35 = scalar_lea.vmem %s0, 10
    %v36 = vld [vmem:[%s35] sm:$0x1]
    %37 = vrot.lane.b32.xlu0 %v36, 80
    %v38 = vpop.permute.xlu0 %37
    %vm39 = vcmask 720512
    %40 = vst.msk [vmem:[#allocation0] sm:$0x1] %vm39, %v38
    %s41 = scalar_lea.vmem %s0, 9
    %v42 = vld [vmem:[%s41] sm:$0x1]
    %43 = vrot.lane.b32.xlu0 %v42, 72
    %v44 = vpop.permute.xlu0 %43
    %vm45 = vcmask 654912
    %46 = vst.msk [vmem:[#allocation0] sm:$0x1] %vm45, %v44
    %s47 = scalar_lea.vmem %s0, 8
    %v48 = vld [vmem:[%s47] sm:$0x1]
    %49 = vrot.lane.b32.xlu0 %v48, 64
    %v50 = vpop.permute.xlu0 %49
    %vm51 = vcmask 589312
    %52 = vst.msk [vmem:[#allocation0] sm:$0x1] %vm51, %v50
    %s53 = scalar_lea.vmem %s0, 7
    %v54 = vld [vmem:[%s53] sm:$0x1]
    %55 = vrot.lane.b32.xlu0 %v54, 56
    %v56 = vpop.permute.xlu0 %55
    %vm57 = vcmask 523712
    %58 = vst.msk [vmem:[#allocation0] sm:$0x1] %vm57, %v56
    %s59 = scalar_lea.vmem %s0, 6
    %v60 = vld [vmem:[%s59] sm:$0x1]
    %61 = vrot.lane.b32.xlu0 %v60, 48
    %v62 = vpop.permute.xlu0 %61
    %vm63 = vcmask 458112
    %64 = vst.msk [vmem:[#allocation0] sm:$0x1] %vm63, %v62
    %s65 = scalar_lea.vmem %s0, 5
    %v66 = vld [vmem:[%s65] sm:$0x1]
    %67 = vrot.lane.b32.xlu0 %v66, 40
    %v68 = vpop.permute.xlu0 %67
    %vm69 = vcmask 392512
    %70 = vst.msk [vmem:[#allocation0] sm:$0x1] %vm69, %v68
    %s71 = scalar_lea.vmem %s0, 4
    %v72 = vld [vmem:[%s71] sm:$0x1]
    %73 = vrot.lane.b32.xlu0 %v72, 32
    %v74 = vpop.permute.xlu0 %73
    %vm75 = vcmask 326912
    %76 = vst.msk [vmem:[#allocation0] sm:$0x1] %vm75, %v74
    %s77 = scalar_lea.vmem %s0, 3
    %v78 = vld [vmem:[%s77] sm:$0x1]
    %79 = vrot.lane.b32.xlu0 %v78, 24
    %v80 = vpop.permute.xlu0 %79
    %vm81 = vcmask 261312
    %82 = vst.msk [vmem:[#allocation0] sm:$0x1] %vm81, %v80
    %s83 = scalar_lea.vmem %s0, 2
    %v84 = vld [vmem:[%s83] sm:$0x1]
    %85 = vrot.lane.b32.xlu0 %v84, 16
    %v86 = vpop.permute.xlu0 %85
    %vm87 = vcmask 195712
    %88 = vst.msk [vmem:[#allocation0] sm:$0x1] %vm87, %v86
    %s89 = scalar_lea.vmem %s0, 1
    %v90 = vld [vmem:[%s89] sm:$0x1]
    %91 = vrot.lane.b32.xlu0 %v90, 8
    %v92 = vpop.permute.xlu0 %91
    %vm93 = vcmask 130112
    %94 = vst.msk [vmem:[#allocation0] sm:$0x1] %vm93, %v92
    %s96 = sshllo.u32 0, 1
    %v98 = vld [vmem:[#allocation0] sm:%s96]
    %s99 = sshllo.u32 0, 1
    %100 = vst [vmem:[%s1] sm:%s99] %v98

// kernel: double_conv.4
$region0: #{double_conv.4}
  #allocation0 [shape = 'u32[]', space=smem, size = 0x4, offset = 0x4, fixed_abs, tag = 'smem constant byte address 0x4 - core index']
  #allocation1 [shape = 'u32[144,128]{1,0:T(1,128)}', space=vmem, size = 0x12000, scoped, tag = 'internal scratch']
  %s0 = inlined_call_operand.vmem [shape: f32[2,16,128], index: 0, kind: input, shape index: {}]
  %s1 = inlined_call_operand.vmem [shape: f32[3,128,128], index: 1, kind: input, shape index: {}]
  %s2 = inlined_call_operand.vmem [shape: f32[2,128], index: 2, kind: input, shape index: {}]
  %s3 = inlined_call_operand.vmem [shape: f32[128,8], index: 3, kind: input, shape index: {}]
  %s4 = inlined_call_operand.vmem [shape: f32[2,16,128], index: 4, kind: output, shape index: {0}]
  %s5 = inlined_call_operand.vmem [shape: f32[2,2,8], index: 5, kind: output, shape index: {1}]
  %6 = xla_tuple %s4, %s5
  %s7 = sld [smem:[#allocation0]]
  $region57: #{double_conv.4} parent=0
    _
  %s9 = ssub.s32 1, %s7
  %s10 = scalar_select 0, %s9, %s7
  loop: start=0, step=1, limit=4
  $region2: #{double_conv.4} parent=0 // loop_pre_header
    _
  $region3: #{double_conv.4} parent=0 // loop_header
    %s12 = sphi 0, %s16
    %p13 = scmp.ge.s32.totalorder %s12, 4
    %s22 = sphi 0, %s24
    %s25 = sphi 0, %s22
    %s26 = sphi 0, %s25
    %s42 = sphi 0, %s26
    %s46 = sphi 0, %s46
    %s48 = sphi 0, %s46
    %s49 = sphi 0, %s48
    %s63 = sphi 0, %s49
    %s67 = sphi 0, %s67
    %s69 = sphi 0, %s67
    %s70 = sphi 0, %s69
    %s84 = sphi 0, %s70
    %s88 = sphi 0, %s88
    %s90 = sphi 0, %s88
    %s91 = sphi 0, %s90
    %s105 = sphi 0, %s91
    %s111 = sphi 0, %s113
    %s114 = sphi 0, %s111
    %s115 = sphi 0, %s114
    %s131 = sphi 0, %s115
    %s137 = sphi 0, %s139
    %s140 = sphi 0, %s137
    %s141 = sphi 0, %s140
    %s157 = sphi 0, %s141
  $region4: #{double_conv.4} parent=0 // loop_header_branch
    %15 = sbr.rel (%p13) target = $region8
  $region5: #{double_conv.4} parent=0 // loop_body
    %s17 = ssub.s32 %s12, 1
    %s18 = ssub.s32 %s12, 2
    %s19 = sadd.s32 %s12, 1
    %s20 = ssub.s32 %s12, %s19
    %p21 = scmp.eq.s32.totalorder %s20, 0
    %s23 = sadd.s32 %s22, 1
    %s24 = scalar_select %p21, %s22, %s23
    %p27 = pneg %p21
    %p28 = scmp.eq.s32.totalorder %s12, 1
    %p29 = por %p27, %p28
    %p30 = scmp.ne.s32.totalorder %s22, %s25
    %p31 = scmp.eq.s32.totalorder %s12, 0
    %p32 = por %p30, %p31
    %p33 = scmp.ne.s32.totalorder %s22, %s25
    %p34 = scmp.eq.s32.totalorder %s17, 1
    %p35 = por %p33, %p34
    %p36 = scmp.ne.s32.totalorder %s25, %s26
    %p37 = scmp.eq.s32.totalorder %s17, 0
    %p38 = por %p36, %p37
    %p39 = scmp.ne.s32.totalorder %s25, %s26
    %p40 = scmp.eq.s32.totalorder %s18, 1
    %p41 = por %p39, %p40
    %p43 = scmp.ne.s32.totalorder %s26, %s42
    %p44 = scmp.eq.s32.totalorder %s18, 0
    %p45 = por %p43, %p44
    %s47 = sadd.s32 %s46, 1
    %p50 = scmp.eq.s32.totalorder %s12, 1
    %p51 = scmp.ne.s32.totalorder %s46, %s48
    %p52 = scmp.eq.s32.totalorder %s12, 0
    %p53 = por %p51, %p52
    %p54 = scmp.ne.s32.totalorder %s46, %s48
    %p55 = scmp.eq.s32.totalorder %s17, 1
    %p56 = por %p54, %p55
    %p57 = scmp.ne.s32.totalorder %s48, %s49
    %p58 = scmp.eq.s32.totalorder %s17, 0
    %p59 = por %p57, %p58
    %p60 = scmp.ne.s32.totalorder %s48, %s49
    %p61 = scmp.eq.s32.totalorder %s18, 1
    %p62 = por %p60, %p61
    %p64 = scmp.ne.s32.totalorder %s49, %s63
    %p65 = scmp.eq.s32.totalorder %s18, 0
    %p66 = por %p64, %p65
    %s68 = sadd.s32 %s67, 1
    %p71 = scmp.eq.s32.totalorder %s12, 1
    %p72 = scmp.ne.s32.totalorder %s67, %s69
    %p73 = scmp.eq.s32.totalorder %s12, 0
    %p74 = por %p72, %p73
    %p75 = scmp.ne.s32.totalorder %s67, %s69
    %p76 = scmp.eq.s32.totalorder %s17, 1
    %p77 = por %p75, %p76
    %p78 = scmp.ne.s32.totalorder %s69, %s70
    %p79 = scmp.eq.s32.totalorder %s17, 0
    %p80 = por %p78, %p79
    %p81 = scmp.ne.s32.totalorder %s69, %s70
    %p82 = scmp.eq.s32.totalorder %s18, 1
    %p83 = por %p81, %p82
    %p85 = scmp.ne.s32.totalorder %s70, %s84
    %p86 = scmp.eq.s32.totalorder %s18, 0
    %p87 = por %p85, %p86
    %s89 = sadd.s32 %s88, 1
    %p92 = scmp.eq.s32.totalorder %s12, 1
    %p93 = scmp.ne.s32.totalorder %s88, %s90
    %p94 = scmp.eq.s32.totalorder %s12, 0
    %p95 = por %p93, %p94
    %p96 = scmp.ne.s32.totalorder %s88, %s90
    %p97 = scmp.eq.s32.totalorder %s17, 1
    %p98 = por %p96, %p97
    %p99 = scmp.ne.s32.totalorder %s90, %s91
    %p100 = scmp.eq.s32.totalorder %s17, 0
    %p101 = por %p99, %p100
    %p102 = scmp.ne.s32.totalorder %s90, %s91
    %p103 = scmp.eq.s32.totalorder %s18, 1
    %p104 = por %p102, %p103
    %p106 = scmp.ne.s32.totalorder %s91, %s105
    %p107 = scmp.eq.s32.totalorder %s18, 0
    %p108 = por %p106, %p107
    %s109 = ssub.s32 %s12, %s19
    %p110 = scmp.eq.s32.totalorder %s109, 0
    %s112 = sadd.s32 %s111, 1
    %s113 = scalar_select %p110, %s111, %s112
    %p116 = pneg %p110
    %p117 = scmp.eq.s32.totalorder %s12, 1
    %p118 = por %p116, %p117
    %p119 = scmp.ne.s32.totalorder %s111, %s114
    %p120 = scmp.eq.s32.totalorder %s12, 0
    %p121 = por %p119, %p120
    %p122 = scmp.ne.s32.totalorder %s111, %s114
    %p123 = scmp.eq.s32.totalorder %s17, 1
    %p124 = por %p122, %p123
    %p125 = scmp.ne.s32.totalorder %s114, %s115
    %p126 = scmp.eq.s32.totalorder %s17, 0
    %p127 = por %p125, %p126
    %p128 = scmp.ne.s32.totalorder %s114, %s115
    %p129 = scmp.eq.s32.totalorder %s18, 1
    %p130 = por %p128, %p129
    %p132 = scmp.ne.s32.totalorder %s115, %s131
    %p133 = scmp.eq.s32.totalorder %s18, 0
    %p134 = por %p132, %p133
    %s135 = ssub.s32 %s12, %s19
    %p136 = scmp.eq.s32.totalorder %s135, 0
    %s138 = sadd.s32 %s137, 1
    %s139 = scalar_select %p136, %s137, %s138
    %p142 = pneg %p136
    %p143 = scmp.eq.s32.totalorder %s12, 1
    %p144 = por %p142, %p143
    %p145 = scmp.ne.s32.totalorder %s137, %s140
    %p146 = scmp.eq.s32.totalorder %s12, 0
    %p147 = por %p145, %p146
    %p148 = scmp.ne.s32.totalorder %s137, %s140
    %p149 = scmp.eq.s32.totalorder %s17, 1
    %p150 = por %p148, %p149
    %p151 = scmp.ne.s32.totalorder %s140, %s141
    %p152 = scmp.eq.s32.totalorder %s17, 0
    %p153 = por %p151, %p152
    %p154 = scmp.ne.s32.totalorder %s140, %s141
    %p155 = scmp.eq.s32.totalorder %s18, 1
    %p156 = por %p154, %p155
    %p158 = scmp.ne.s32.totalorder %s141, %s157
    %p159 = scmp.eq.s32.totalorder %s18, 0
    %p160 = por %p158, %p159
    %p161 = scmp.le.s32.totalorder 1, %s12
    %p162 = scmp.lt.s32.totalorder %s12, 3
    %p163 = pnand %p161, %p162
    %p164 = pneg %p163
    // Predicated region
    $region9: #{double_conv.4} parent=5 // pred_check
      _
    $region10: #{double_conv.4} parent=5 // pred_check_branch
      %166 = sbr.rel (%p163) target = $region12
    $region11: #{double_conv.4} parent=5 // pred_region
      %s167 = ssub.s32 %s12, 1
      // Predicated region
      $region13: #{double_conv.4} parent=11 // pred_check
        %p168 = pneg %p59
      $region14: #{double_conv.4} parent=11 // pred_check_branch
        %170 = sbr.rel (%p168) target = $region16
      $region15: #{double_conv.4} parent=11 // pred_region
        _
      $region16: #{double_conv.4} parent=11 // pred_fallthru
        _
      // Predicated region
      $region17: #{double_conv.4} parent=11 // pred_check
        %p171 = pneg %p80
      $region18: #{double_conv.4} parent=11 // pred_check_branch
        %173 = sbr.rel (%p171) target = $region20
      $region19: #{double_conv.4} parent=11 // pred_region
        _
      $region20: #{double_conv.4} parent=11 // pred_fallthru
        _
      // Predicated region
      $region21: #{double_conv.4} parent=11 // pred_check
        %p174 = pneg %p101
      $region22: #{double_conv.4} parent=11 // pred_check_branch
        %176 = sbr.rel (%p174) target = $region24
      $region23: #{double_conv.4} parent=11 // pred_region
        _
      $region24: #{double_conv.4} parent=11 // pred_fallthru
        _
    $region12: #{double_conv.4} parent=5 // pred_fallthru
      _
    %p177 = scmp.lt.s32.totalorder %s12, 2
    // Predicated region
    $region25: #{double_conv.4} parent=5 // pred_check
      %p178 = pneg %p177
    $region26: #{double_conv.4} parent=5 // pred_check_branch
      %180 = sbr.rel (%p178) target = $region28
    $region27: #{double_conv.4} parent=5 // pred_region
      // Predicated region
      $region29: #{double_conv.4} parent=27 // pred_check
        %p181 = pneg %p32
      $region30: #{double_conv.4} parent=27 // pred_check_branch
        %183 = sbr.rel (%p181) target = $region32
      $region31: #{double_conv.4} parent=27 // pred_region
        %p184 = scmp.lt.s32.totalorder %s12, 1
        %s185 = scalar_select %p184, %s12, 1
        %s186 = smul.addr %s185, 2
        %s187 = smul.addr %s186, 8
        %s188 = scalar_lea.vmem %s0, %s187
      $region32: #{double_conv.4} parent=27 // pred_fallthru
        _
    $region28: #{double_conv.4} parent=5 // pred_fallthru
      _
    %p189 = scmp.le.s32.totalorder 1, %s12
    %p190 = scmp.lt.s32.totalorder %s12, 3
    %p191 = pnand %p189, %p190
    %p192 = pneg %p191
    // Predicated region
    $region33: #{double_conv.4} parent=5 // pred_check
      _
    $region34: #{double_conv.4} parent=5 // pred_check_branch
      %194 = sbr.rel (%p191) target = $region36
    $region35: #{double_conv.4} parent=5 // pred_region
      %s195 = ssub.s32 %s12, 1
      %p196 = scmp.lt.s32.totalorder %s17, 1
      %s197 = scalar_select %p196, %s17, 1
      %s198 = smul.addr %s197, 2
      %s199 = smul.addr %s198, 8
      %s200 = scalar_lea.vmem %s0, %s199
      %p201 = pneg %p38
      %p202 = pneg %p35
      %p203 = pneg %p59
      %p204 = pneg %p56
      %p205 = pneg %p80
      %p206 = pneg %p77
      %p207 = pneg %p101
      %p208 = pneg %p98
      %p209 = pneg %p127
      %p210 = pneg %p124
      %p211 = scmp.lt.s32.totalorder %s17, 1
      %s212 = scalar_select %p211, %s17, 1
      %s213 = smul.addr %s212, 2
      %s214 = smul.addr %s213, 8
      %s215 = scalar_lea.vmem %s4, %s214
      %p216 = pneg %p153
      %p217 = pneg %p150
      %p218 = scmp.lt.s32.totalorder %s17, 1
      %s219 = scalar_select %p218, %s17, 1
      %s220 = smul.addr %s219, 2
      %s221 = scalar_lea.vmem %s5, %s220
      %p222 = scmp.lt.s32.totalorder %s17, 1
      %s223 = scalar_select %p222, %s17, 1
      %s224 = smul.addr %s223, 2
      %s225 = smul.addr %s224, 8
      %s226 = scalar_lea.vmem %s0, %s225
      %p227 = scmp.lt.s32.totalorder %s17, 1
      %s228 = scalar_select %p227, %s17, 1
      %s229 = smul.addr %s228, 2
      %s230 = smul.addr %s229, 8
      %s231 = scalar_lea.vmem %s4, %s230
      %p232 = scmp.lt.s32.totalorder %s17, 1
      %s233 = scalar_select %p232, %s17, 1
      %s234 = smul.addr %s233, 2
      %s235 = scalar_lea.vmem %s5, %s234
      %v236 = vld [vmem:[%s226] sm:$0xff]
      %v237 = vld [vmem:[%s226 + $0x8] sm:$0xff]
      %v238 = vld [vmem:[%s2] sm:$0x1]
      %v239 = vlaneseq
      %v240 = vshrl.u32 %v239, 7
      %v241 = vsub.s32 0, %v240
      %v242 = vrot.slane %v238, %v241
      %v243 = vmul.f32 %v236, %v242
      %v244 = vmul.f32 %v237, %v242
      %v245 = vld [vmem:[%s2 + $0x1] sm:$0x1]
      %v246 = vlaneseq
      %v247 = vshrl.u32 %v246, 7
      %v248 = vsub.s32 0, %v247
      %v249 = vrot.slane %v245, %v248
      %v250 = vadd.f32 %v243, %v249
      %v251 = vadd.f32 %v244, %v249
      %v252 = vmax.f32 %v250, 0.0
      %v253 = vmax.f32 %v251, 0.0
      %vm256 = vcmask 1040384
      %v257 = vrot.slane %v252, 7
      %v258 = vrot.slane %v253, 7
      %v259 = vsel %vm256, %v257, %v258
      %v263 = vsel %vm256, 0.0, %v257
      %v264 = vsel %vm256, %v258, 0.0
      %v265 = vld [vmem:[%s1] sm:$0xff]
      %v266 = vld [vmem:[%s1 + $0x8] sm:$0xff]
      %v267 = vld [vmem:[%s1 + $0x10] sm:$0xff]
      %v268 = vld [vmem:[%s1 + $0x18] sm:$0xff]
      %v269 = vld [vmem:[%s1 + $0x20] sm:$0xff]
      %v270 = vld [vmem:[%s1 + $0x28] sm:$0xff]
      %v271 = vld [vmem:[%s1 + $0x30] sm:$0xff]
      %v272 = vld [vmem:[%s1 + $0x38] sm:$0xff]
      %v273 = vld [vmem:[%s1 + $0x40] sm:$0xff]
      %v274 = vld [vmem:[%s1 + $0x48] sm:$0xff]
      %v275 = vld [vmem:[%s1 + $0x50] sm:$0xff]
      %v276 = vld [vmem:[%s1 + $0x58] sm:$0xff]
      %v277 = vld [vmem:[%s1 + $0x60] sm:$0xff]
      %v278 = vld [vmem:[%s1 + $0x68] sm:$0xff]
      %v279 = vld [vmem:[%s1 + $0x70] sm:$0xff]
      %v280 = vld [vmem:[%s1 + $0x78] sm:$0xff]
      %s281 = scalar_lea.vmem %s1, 128
      %v282 = vld [vmem:[%s281] sm:$0xff]
      %v283 = vld [vmem:[%s281 + $0x8] sm:$0xff]
      %v284 = vld [vmem:[%s281 + $0x10] sm:$0xff]
      %v285 = vld [vmem:[%s281 + $0x18] sm:$0xff]
      %v286 = vld [vmem:[%s281 + $0x20] sm:$0xff]
      %v287 = vld [vmem:[%s281 + $0x28] sm:$0xff]
      %v288 = vld [vmem:[%s281 + $0x30] sm:$0xff]
      %v289 = vld [vmem:[%s281 + $0x38] sm:$0xff]
      %v290 = vld [vmem:[%s281 + $0x40] sm:$0xff]
      %v291 = vld [vmem:[%s281 + $0x48] sm:$0xff]
      %v292 = vld [vmem:[%s281 + $0x50] sm:$0xff]
      %v293 = vld [vmem:[%s281 + $0x58] sm:$0xff]
      %v294 = vld [vmem:[%s281 + $0x60] sm:$0xff]
      %v295 = vld [vmem:[%s281 + $0x68] sm:$0xff]
      %v296 = vld [vmem:[%s281 + $0x70] sm:$0xff]
      %v297 = vld [vmem:[%s281 + $0x78] sm:$0xff]
      %vm300 = vcmask 1046528
      %v301 = vrot.slane %v263, 1
      %v302 = vrot.slane %v259, 1
      %v303 = vsel %vm300, %v301, %v302
      %v304 = vrot.slane %v264, 1
      %v305 = vsel %vm300, %v302, %v304
      %308 = vmatprep.subr.mxu0 0.0
      %309 = vmatpush1.msra.mxu0 %v282
      %310 = vmatprep.subr.mxu0 0.0
      %311 = vmatpush1.msra.mxu0 %v283
      %312 = vmatprep.subr.mxu0 0.0
      %313 = vmatpush1.msra.mxu0 %v284
      %314 = vmatprep.subr.mxu0 0.0
      %315 = vmatpush1.msra.mxu0 %v285
      %316 = vmatprep.subr.mxu0 0.0
      %317 = vmatpush1.msra.mxu0 %v286
      %318 = vmatprep.subr.mxu0 0.0
      %319 = vmatpush1.msra.mxu0 %v287
      %320 = vmatprep.subr.mxu0 0.0
      %321 = vmatpush1.msra.mxu0 %v288
      %322 = vmatprep.subr.mxu0 0.0
      %323 = vmatpush1.msra.mxu0 %v289
      %324 = vmatprep.subr.mxu0 0.0
      %325 = vmatpush1.msra.mxu0 %v290
      %326 = vmatprep.subr.mxu0 0.0
      %327 = vmatpush1.msra.mxu0 %v291
      %328 = vmatprep.subr.mxu0 0.0
      %329 = vmatpush1.msra.mxu0 %v292
      %330 = vmatprep.subr.mxu0 0.0
      %331 = vmatpush1.msra.mxu0 %v293
      %332 = vmatprep.subr.mxu0 0.0
      %333 = vmatpush1.msra.mxu0 %v294
      %334 = vmatprep.subr.mxu0 0.0
      %335 = vmatpush1.msra.mxu0 %v295
      %336 = vmatprep.subr.mxu0 0.0
      %337 = vmatpush1.msra.mxu0 %v296
      %338 = vmatprep.subr.mxu0 0.0
      %339 = vmatpush1.msra.mxu0 %v297
      %340 = vmatprep.subr.mxu0 0.0
      %341 = vmatpush1.msra.mxu0 0.0
      %342 = vmatprep.subr.mxu0 0.0
      %343 = vmatpush1.msra.mxu0 0.0
      %344 = vmatprep.subr.mxu0 0.0
      %345 = vmatpush1.msra.mxu0 0.0
      %346 = vmatprep.subr.mxu0 0.0
      %347 = vmatpush1.msra.mxu0 0.0
      %348 = vmatprep.subr.mxu0 0.0
      %349 = vmatpush1.msra.mxu0 0.0
      %350 = vmatprep.subr.mxu0 0.0
      %351 = vmatpush1.msra.mxu0 0.0
      %352 = vmatprep.subr.mxu0 0.0
      %353 = vmatpush1.msra.mxu0 0.0
      %354 = vmatprep.subr.mxu0 0.0
      %355 = vmatpush1.msra.mxu0 0.0
      %356 = vmatprep.subr.mxu0 0.0
      %357 = vmatpush1.msra.mxu0 0.0
      %358 = vmatprep.subr.mxu0 0.0
      %359 = vmatpush1.msra.mxu0 0.0
      %360 = vmatprep.subr.mxu0 0.0
      %361 = vmatpush1.msra.mxu0 0.0
      %362 = vmatprep.subr.mxu0 0.0
      %363 = vmatpush1.msra.mxu0 0.0
      %364 = vmatprep.subr.mxu0 0.0
      %365 = vmatpush1.msra.mxu0 0.0
      %366 = vmatprep.subr.mxu0 0.0
      %367 = vmatpush1.msra.mxu0 0.0
      %368 = vmatprep.subr.mxu0 0.0
      %369 = vmatpush1.msra.mxu0 0.0
      %370 = vmatprep.subr.mxu0 0.0
      %371 = vmatpush1.msra.mxu0 0.0
      %372 = vmatprep.mubr.f32.mxu0 0.0
      %373 = vmatmul.mubr.f32.gmra.mrb[0].mxu0 %v303
      %v374 = vpop.f32.mrb[0].mxu0
      %v375 = vadd.f32 0.0, %v374
      %v376 = vpop.f32.mrb[0].mxu0
      %377 = vmatprep.mubr.f32.mxu0 0.0
      %378 = vmatmul.mubr.f32.gmra.mrb[0].mxu0 %v305
      %v379 = vpop.f32.mrb[0].mxu0
      %v380 = vadd.f32 0.0, %v379
      %v381 = vpop.f32.mrb[0].mxu0
      %382 = vdwg.mxu0
      %383 = vmatprep.subr.mxu0 0.0
      %384 = vmatpush1.msra.mxu0 %v265
      %385 = vmatprep.subr.mxu0 0.0
      %386 = vmatpush1.msra.mxu0 %v266
      %387 = vmatprep.subr.mxu0 0.0
      %388 = vmatpush1.msra.mxu0 %v267
      %389 = vmatprep.subr.mxu0 0.0
      %390 = vmatpush1.msra.mxu0 %v268
      %391 = vmatprep.subr.mxu0 0.0
      %392 = vmatpush1.msra.mxu0 %v269
      %393 = vmatprep.subr.mxu0 0.0
      %394 = vmatpush1.msra.mxu0 %v270
      %395 = vmatprep.subr.mxu0 0.0
      %396 = vmatpush1.msra.mxu0 %v271
      %397 = vmatprep.subr.mxu0 0.0
      %398 = vmatpush1.msra.mxu0 %v272
      %399 = vmatprep.subr.mxu0 0.0
      %400 = vmatpush1.msra.mxu0 %v273
      %401 = vmatprep.subr.mxu0 0.0
      %402 = vmatpush1.msra.mxu0 %v274
      %403 = vmatprep.subr.mxu0 0.0
      %404 = vmatpush1.msra.mxu0 %v275
      %405 = vmatprep.subr.mxu0 0.0
      %406 = vmatpush1.msra.mxu0 %v276
      %407 = vmatprep.subr.mxu0 0.0
      %408 = vmatpush1.msra.mxu0 %v277
      %409 = vmatprep.subr.mxu0 0.0
      %410 = vmatpush1.msra.mxu0 %v278
      %411 = vmatprep.subr.mxu0 0.0
      %412 = vmatpush1.msra.mxu0 %v279
      %413 = vmatprep.subr.mxu0 0.0
      %414 = vmatpush1.msra.mxu0 %v280
      %415 = vmatprep.subr.mxu0 0.0
      %416 = vmatpush1.msra.mxu0 0.0
      %417 = vmatprep.subr.mxu0 0.0
      %418 = vmatpush1.msra.mxu0 0.0
      %419 = vmatprep.subr.mxu0 0.0
      %420 = vmatpush1.msra.mxu0 0.0
      %421 = vmatprep.subr.mxu0 0.0
      %422 = vmatpush1.msra.mxu0 0.0
      %423 = vmatprep.subr.mxu0 0.0
      %424 = vmatpush1.msra.mxu0 0.0
      %425 = vmatprep.subr.mxu0 0.0
      %426 = vmatpush1.msra.mxu0 0.0
      %427 = vmatprep.subr.mxu0 0.0
      %428 = vmatpush1.msra.mxu0 0.0
      %429 = vmatprep.subr.mxu0 0.0
      %430 = vmatpush1.msra.mxu0 0.0
      %431 = vmatprep.subr.mxu0 0.0
      %432 = vmatpush1.msra.mxu0 0.0
      %433 = vmatprep.subr.mxu0 0.0
      %434 = vmatpush1.msra.mxu0 0.0
      %435 = vmatprep.subr.mxu0 0.0
      %436 = vmatpush1.msra.mxu0 0.0
      %437 = vmatprep.subr.mxu0 0.0
      %438 = vmatpush1.msra.mxu0 0.0
      %439 = vmatprep.subr.mxu0 0.0
      %440 = vmatpush1.msra.mxu0 0.0
      %441 = vmatprep.subr.mxu0 0.0
      %442 = vmatpush1.msra.mxu0 0.0
      %443 = vmatprep.subr.mxu0 0.0
      %444 = vmatpush1.msra.mxu0 0.0
      %445 = vmatprep.subr.mxu0 0.0
      %446 = vmatpush1.msra.mxu0 0.0
      %447 = vmatprep.mubr.f32.mxu0 0.0
      %448 = vmatmul.mubr.f32.gmra.mrb[0].mxu0 %v263
      %v449 = vpop.f32.mrb[0].mxu0
      %v450 = vadd.f32 %v375, %v449
      %v451 = vpop.f32.mrb[0].mxu0
      %452 = vmatprep.mubr.f32.mxu0 0.0
      %453 = vmatmul.mubr.f32.gmra.mrb[0].mxu0 %v259
      %v454 = vpop.f32.mrb[0].mxu0
      %v455 = vadd.f32 %v380, %v454
      %v456 = vpop.f32.mrb[0].mxu0
      %457 = vdwg.mxu0
      %s458 = scalar_lea.vmem %s1, 256
      %v459 = vld [vmem:[%s458] sm:$0xff]
      %v460 = vld [vmem:[%s458 + $0x8] sm:$0xff]
      %v461 = vld [vmem:[%s458 + $0x10] sm:$0xff]
      %v462 = vld [vmem:[%s458 + $0x18] sm:$0xff]
      %v463 = vld [vmem:[%s458 + $0x20] sm:$0xff]
      %v464 = vld [vmem:[%s458 + $0x28] sm:$0xff]
      %v465 = vld [vmem:[%s458 + $0x30] sm:$0xff]
      %v466 = vld [vmem:[%s458 + $0x38] sm:$0xff]
      %v467 = vld [vmem:[%s458 + $0x40] sm:$0xff]
      %v468 = vld [vmem:[%s458 + $0x48] sm:$0xff]
      %v469 = vld [vmem:[%s458 + $0x50] sm:$0xff]
      %v470 = vld [vmem:[%s458 + $0x58] sm:$0xff]
      %v471 = vld [vmem:[%s458 + $0x60] sm:$0xff]
      %v472 = vld [vmem:[%s458 + $0x68] sm:$0xff]
      %v473 = vld [vmem:[%s458 + $0x70] sm:$0xff]
      %v474 = vld [vmem:[%s458 + $0x78] sm:$0xff]
      %vm475 = vcmask 1045504
      %v476 = vrot.slane %v263, 2
      %v477 = vrot.slane %v259, 2
      %v478 = vsel %vm475, %v476, %v477
      %v479 = vrot.slane %v264, 2
      %v480 = vsel %vm475, %v477, %v479
      %483 = vmatprep.subr.mxu0 0.0
      %484 = vmatpush1.msra.mxu0 %v459
      %485 = vmatprep.subr.mxu0 0.0
      %486 = vmatpush1.msra.mxu0 %v460
      %487 = vmatprep.subr.mxu0 0.0
      %488 = vmatpush1.msra.mxu0 %v461
      %489 = vmatprep.subr.mxu0 0.0
      %490 = vmatpush1.msra.mxu0 %v462
      %491 = vmatprep.subr.mxu0 0.0
      %492 = vmatpush1.msra.mxu0 %v463
      %493 = vmatprep.subr.mxu0 0.0
      %494 = vmatpush1.msra.mxu0 %v464
      %495 = vmatprep.subr.mxu0 0.0
      %496 = vmatpush1.msra.mxu0 %v465
      %497 = vmatprep.subr.mxu0 0.0
      %498 = vmatpush1.msra.mxu0 %v466
      %499 = vmatprep.subr.mxu0 0.0
      %500 = vmatpush1.msra.mxu0 %v467
      %501 = vmatprep.subr.mxu0 0.0
      %502 = vmatpush1.msra.mxu0 %v468
      %503 = vmatprep.subr.mxu0 0.0
      %504 = vmatpush1.msra.mxu0 %v469
      %505 = vmatprep.subr.mxu0 0.0
      %506 = vmatpush1.msra.mxu0 %v470
      %507 = vmatprep.subr.mxu0 0.0
      %508 = vmatpush1.msra.mxu0 %v471
      %509 = vmatprep.subr.mxu0 0.0
      %510 = vmatpush1.msra.mxu0 %v472
      %511 = vmatprep.subr.mxu0 0.0
      %512 = vmatpush1.msra.mxu0 %v473
      %513 = vmatprep.subr.mxu0 0.0
      %514 = vmatpush1.msra.mxu0 %v474
      %515 = vmatprep.subr.mxu0 0.0
      %516 = vmatpush1.msra.mxu0 0.0
      %517 = vmatprep.subr.mxu0 0.0
      %518 = vmatpush1.msra.mxu0 0.0
      %519 = vmatprep.subr.mxu0 0.0
      %520 = vmatpush1.msra.mxu0 0.0
      %521 = vmatprep.subr.mxu0 0.0
      %522 = vmatpush1.msra.mxu0 0.0
      %523 = vmatprep.subr.mxu0 0.0
      %524 = vmatpush1.msra.mxu0 0.0
      %525 = vmatprep.subr.mxu0 0.0
      %526 = vmatpush1.msra.mxu0 0.0
      %527 = vmatprep.subr.mxu0 0.0
      %528 = vmatpush1.msra.mxu0 0.0
      %529 = vmatprep.subr.mxu0 0.0
      %530 = vmatpush1.msra.mxu0 0.0
      %531 = vmatprep.subr.mxu0 0.0
      %532 = vmatpush1.msra.mxu0 0.0
      %533 = vmatprep.subr.mxu0 0.0
      %534 = vmatpush1.msra.mxu0 0.0
      %535 = vmatprep.subr.mxu0 0.0
      %536 = vmatpush1.msra.mxu0 0.0
      %537 = vmatprep.subr.mxu0 0.0
      %538 = vmatpush1.msra.mxu0 0.0
      %539 = vmatprep.subr.mxu0 0.0
      %540 = vmatpush1.msra.mxu0 0.0
      %541 = vmatprep.subr.mxu0 0.0
      %542 = vmatpush1.msra.mxu0 0.0
      %543 = vmatprep.subr.mxu0 0.0
      %544 = vmatpush1.msra.mxu0 0.0
      %545 = vmatprep.subr.mxu0 0.0
      %546 = vmatpush1.msra.mxu0 0.0
      %547 = vmatprep.mubr.f32.mxu0 0.0
      %548 = vmatmul.mubr.f32.gmra.mrb[0].mxu0 %v478
      %v549 = vpop.f32.mrb[0].mxu0
      %v550 = vadd.f32 0.0, %v549
      %v551 = vpop.f32.mrb[0].mxu0
      %552 = vmatprep.mubr.f32.mxu0 0.0
      %553 = vmatmul.mubr.f32.gmra.mrb[0].mxu0 %v480
      %v554 = vpop.f32.mrb[0].mxu0
      %v555 = vadd.f32 0.0, %v554
      %v556 = vpop.f32.mrb[0].mxu0
      %557 = vdwg.mxu0
      %v558 = vadd.f32 %v450, %v550
      %v559 = vadd.f32 %v455, %v555
      %v560 = vadd.f32 %v558, %v559
      %v561 = vrot.slane %v560, 4
      %v562 = vadd.f32 %v560, %v561
      %v563 = vrot.slane %v562, 2
      %v564 = vadd.f32 %v562, %v563
      %v565 = vrot.slane %v564, 1
      %v566 = vadd.f32 %v564, %v565
      %v567 = vmul.f32 %v558, %v558
      %v568 = vmul.f32 %v559, %v559
      %v569 = vadd.f32 %v567, %v568
      %v570 = vrot.slane %v569, 4
      %v571 = vadd.f32 %v569, %v570
      %v572 = vrot.slane %v571, 2
      %v573 = vadd.f32 %v571, %v572
      %v574 = vrot.slane %v573, 1
      %v575 = vadd.f32 %v573, %v574
      %v576 = vsel %vm256, %v566, %v575
      %v577 = vld [vmem:[%s3] sm:$0xff]
      %v578 = vld [vmem:[%s3 + $0x8] sm:$0xff]
      %v579 = vld [vmem:[%s3 + $0x10] sm:$0xff]
      %v580 = vld [vmem:[%s3 + $0x18] sm:$0xff]
      %v581 = vld [vmem:[%s3 + $0x20] sm:$0xff]
      %v582 = vld [vmem:[%s3 + $0x28] sm:$0xff]
      %v583 = vld [vmem:[%s3 + $0x30] sm:$0xff]
      %v584 = vld [vmem:[%s3 + $0x38] sm:$0xff]
      %v585 = vld [vmem:[%s3 + $0x40] sm:$0xff]
      %v586 = vld [vmem:[%s3 + $0x48] sm:$0xff]
      %v587 = vld [vmem:[%s3 + $0x50] sm:$0xff]
      %v588 = vld [vmem:[%s3 + $0x58] sm:$0xff]
      %v589 = vld [vmem:[%s3 + $0x60] sm:$0xff]
      %v590 = vld [vmem:[%s3 + $0x68] sm:$0xff]
      %v591 = vld [vmem:[%s3 + $0x70] sm:$0xff]
      %v592 = vld [vmem:[%s3 + $0x78] sm:$0xff]
      %593 = vmatprep.subr.mxu0 0.0
      %594 = vmatpush1.msra.mxu0 %v577
      %595 = vmatprep.subr.mxu0 0.0
      %596 = vmatpush1.msra.mxu0 %v578
      %597 = vmatprep.subr.mxu0 0.0
      %598 = vmatpush1.msra.mxu0 %v579
      %599 = vmatprep.subr.mxu0 0.0
      %600 = vmatpush1.msra.mxu0 %v580
      %601 = vmatprep.subr.mxu0 0.0
      %602 = vmatpush1.msra.mxu0 %v581
      %603 = vmatprep.subr.mxu0 0.0
      %604 = vmatpush1.msra.mxu0 %v582
      %605 = vmatprep.subr.mxu0 0.0
      %606 = vmatpush1.msra.mxu0 %v583
      %607 = vmatprep.subr.mxu0 0.0
      %608 = vmatpush1.msra.mxu0 %v584
      %609 = vmatprep.subr.mxu0 0.0
      %610 = vmatpush1.msra.mxu0 %v585
      %611 = vmatprep.subr.mxu0 0.0
      %612 = vmatpush1.msra.mxu0 %v586
      %613 = vmatprep.subr.mxu0 0.0
      %614 = vmatpush1.msra.mxu0 %v587
      %615 = vmatprep.subr.mxu0 0.0
      %616 = vmatpush1.msra.mxu0 %v588
      %617 = vmatprep.subr.mxu0 0.0
      %618 = vmatpush1.msra.mxu0 %v589
      %619 = vmatprep.subr.mxu0 0.0
      %620 = vmatpush1.msra.mxu0 %v590
      %621 = vmatprep.subr.mxu0 0.0
      %622 = vmatpush1.msra.mxu0 %v591
      %623 = vmatprep.subr.mxu0 0.0
      %624 = vmatpush1.msra.mxu0 %v592
      %625 = vmatprep.subr.mxu0 0.0
      %626 = vmatpush1.msra.mxu0 0.0
      %627 = vmatprep.subr.mxu0 0.0
      %628 = vmatpush1.msra.mxu0 0.0
      %629 = vmatprep.subr.mxu0 0.0
      %630 = vmatpush1.msra.mxu0 0.0
      %631 = vmatprep.subr.mxu0 0.0
      %632 = vmatpush1.msra.mxu0 0.0
      %633 = vmatprep.subr.mxu0 0.0
      %634 = vmatpush1.msra.mxu0 0.0
      %635 = vmatprep.subr.mxu0 0.0
      %636 = vmatpush1.msra.mxu0 0.0
      %637 = vmatprep.subr.mxu0 0.0
      %638 = vmatpush1.msra.mxu0 0.0
      %639 = vmatprep.subr.mxu0 0.0
      %640 = vmatpush1.msra.mxu0 0.0
      %641 = vmatprep.subr.mxu0 0.0
      %642 = vmatpush1.msra.mxu0 0.0
      %643 = vmatprep.subr.mxu0 0.0
      %644 = vmatpush1.msra.mxu0 0.0
      %645 = vmatprep.subr.mxu0 0.0
      %646 = vmatpush1.msra.mxu0 0.0
      %647 = vmatprep.subr.mxu0 0.0
      %648 = vmatpush1.msra.mxu0 0.0
      %649 = vmatprep.subr.mxu0 0.0
      %650 = vmatpush1.msra.mxu0 0.0
      %651 = vmatprep.subr.mxu0 0.0
      %652 = vmatpush1.msra.mxu0 0.0
      %653 = vmatprep.subr.mxu0 0.0
      %654 = vmatpush1.msra.mxu0 0.0
      %655 = vmatprep.subr.mxu0 0.0
      %656 = vmatpush1.msra.mxu0 0.0
      %657 = vmatprep.mubr.f32.mxu0 0.0
      %658 = vmatmul.mubr.f32.gmra.mrb[0].mxu0 %v576
      %v659 = vpop.f32.mrb[0].mxu0
      %v660 = vadd.f32 0.0, %v659
      %v661 = vpop.f32.mrb[0].mxu0
      %662 = vdwg.mxu0
      %vm663 = vcmask 58368
      %664 = vst.msk [vmem:[%s235] sm:$0x3] %vm663, %v660
      %665 = vst [vmem:[%s231] sm:$0xff] %v558
      %666 = vst [vmem:[%s231 + $0x8] sm:$0xff] %v559
      %p667 = scmp.lt.s32.totalorder %s17, 1
      %s668 = scalar_select %p667, %s17, 1
      %s669 = smul.addr %s668, 2
      %s670 = smul.addr %s669, 8
      %s671 = scalar_lea.vmem %s4, %s670
      %p672 = scmp.lt.s32.totalorder %s17, 1
      %s673 = scalar_select %p672, %s17, 1
      %s674 = smul.addr %s673, 2
      %s675 = scalar_lea.vmem %s5, %s674
      // Predicated region
      $region37: #{double_conv.4} parent=35 // pred_check
        %p676 = pneg %p124
      $region38: #{double_conv.4} parent=35 // pred_check_branch
        %678 = sbr.rel (%p676) target = $region40
      $region39: #{double_conv.4} parent=35 // pred_region
        _
      $region40: #{double_conv.4} parent=35 // pred_fallthru
        _
      // Predicated region
      $region41: #{double_conv.4} parent=35 // pred_check
        %p679 = pneg %p150
      $region42: #{double_conv.4} parent=35 // pred_check_branch
        %681 = sbr.rel (%p679) target = $region44
      $region43: #{double_conv.4} parent=35 // pred_region
        _
      $region44: #{double_conv.4} parent=35 // pred_fallthru
        _
    $region36: #{double_conv.4} parent=5 // pred_fallthru
      _
    %p682 = scmp.le.s32.totalorder 2, %s12
    // Predicated region
    $region45: #{double_conv.4} parent=5 // pred_check
      %p683 = pneg %p682
    $region46: #{double_conv.4} parent=5 // pred_check_branch
      %685 = sbr.rel (%p683) target = $region48
    $region47: #{double_conv.4} parent=5 // pred_region
      %s686 = ssub.s32 %s12, 2
      // Predicated region
      $region49: #{double_conv.4} parent=47 // pred_check
        %p687 = pneg %p130
      $region50: #{double_conv.4} parent=47 // pred_check_branch
        %689 = sbr.rel (%p687) target = $region52
      $region51: #{double_conv.4} parent=47 // pred_region
        %p690 = scmp.lt.s32.totalorder %s18, 1
        %s691 = scalar_select %p690, %s18, 1
        %s692 = smul.addr %s691, 2
        %s693 = smul.addr %s692, 8
        %s694 = scalar_lea.vmem %s4, %s693
      $region52: #{double_conv.4} parent=47 // pred_fallthru
        _
      // Predicated region
      $region53: #{double_conv.4} parent=47 // pred_check
        %p695 = pneg %p156
      $region54: #{double_conv.4} parent=47 // pred_check_branch
        %697 = sbr.rel (%p695) target = $region56
      $region55: #{double_conv.4} parent=47 // pred_region
        %p698 = scmp.lt.s32.totalorder %s18, 1
        %s699 = scalar_select %p698, %s18, 1
        %s700 = smul.addr %s699, 2
        %s701 = scalar_lea.vmem %s5, %s700
      $region56: #{double_conv.4} parent=47 // pred_fallthru
        _
    $region48: #{double_conv.4} parent=5 // pred_fallthru
      _
  $region6: #{double_conv.4} parent=0 // loop_footer
    %s16 = sadd.s32 1, %s12
  $region7: #{double_conv.4} parent=0 // loop_footer_branch
    %11 = sbr.rel target = $region3
  $region8: #{double_conv.4} parent=0 // loop_exit
    _

// kernel: double_conv.3
$region0: #{double_conv.3}
  #allocation0 [shape = 'u32[]', space=smem, size = 0x4, offset = 0x4, fixed_abs, tag = 'smem constant byte address 0x4 - core index']
  #allocation1 [shape = 'u32[144,128]{1,0:T(1,128)}', space=vmem, size = 0x12000, scoped, tag = 'internal scratch']
  %s0 = inlined_call_operand.vmem [shape: f32[2,4,16,16], index: 0, kind: input, shape index: {}]
  %s1 = inlined_call_operand.vmem [shape: f32[3,4,16,128], index: 1, kind: input, shape index: {}]
  %s2 = inlined_call_operand.vmem [shape: f32[128,8], index: 2, kind: input, shape index: {}]
  %s3 = inlined_call_operand.vmem [shape: f32[2,16,128], index: 3, kind: output, shape index: {0}]
  %s4 = inlined_call_operand.vmem [shape: f32[2,2,8], index: 4, kind: output, shape index: {1}]
  %5 = xla_tuple %s3, %s4
  %s6 = sld [smem:[#allocation0]]
  $region53: #{double_conv.3} parent=0
    _
  %s8 = ssub.s32 1, %s6
  %s9 = scalar_select 0, %s8, %s6
  loop: start=0, step=1, limit=4
  $region2: #{double_conv.3} parent=0 // loop_pre_header
    _
  $region3: #{double_conv.3} parent=0 // loop_header
    %s11 = sphi 0, %s15
    %p12 = scmp.ge.s32.totalorder %s11, 4
    %s21 = sphi 0, %s23
    %s24 = sphi 0, %s21
    %s25 = sphi 0, %s24
    %s41 = sphi 0, %s25
    %s45 = sphi 0, %s45
    %s47 = sphi 0, %s45
    %s48 = sphi 0, %s47
    %s62 = sphi 0, %s48
    %s66 = sphi 0, %s66
    %s68 = sphi 0, %s66
    %s69 = sphi 0, %s68
    %s83 = sphi 0, %s69
    %s89 = sphi 0, %s91
    %s92 = sphi 0, %s89
    %s93 = sphi 0, %s92
    %s109 = sphi 0, %s93
    %s115 = sphi 0, %s117
    %s118 = sphi 0, %s115
    %s119 = sphi 0, %s118
    %s135 = sphi 0, %s119
  $region4: #{double_conv.3} parent=0 // loop_header_branch
    %14 = sbr.rel (%p12) target = $region8
  $region5: #{double_conv.3} parent=0 // loop_body
    %s16 = ssub.s32 %s11, 1
    %s17 = ssub.s32 %s11, 2
    %s18 = sadd.s32 %s11, 1
    %s19 = ssub.s32 %s11, %s18
    %p20 = scmp.eq.s32.totalorder %s19, 0
    %s22 = sadd.s32 %s21, 1
    %s23 = scalar_select %p20, %s21, %s22
    %p26 = pneg %p20
    %p27 = scmp.eq.s32.totalorder %s11, 1
    %p28 = por %p26, %p27
    %p29 = scmp.ne.s32.totalorder %s21, %s24
    %p30 = scmp.eq.s32.totalorder %s11, 0
    %p31 = por %p29, %p30
    %p32 = scmp.ne.s32.totalorder %s21, %s24
    %p33 = scmp.eq.s32.totalorder %s16, 1
    %p34 = por %p32, %p33
    %p35 = scmp.ne.s32.totalorder %s24, %s25
    %p36 = scmp.eq.s32.totalorder %s16, 0
    %p37 = por %p35, %p36
    %p38 = scmp.ne.s32.totalorder %s24, %s25
    %p39 = scmp.eq.s32.totalorder %s17, 1
    %p40 = por %p38, %p39
    %p42 = scmp.ne.s32.totalorder %s25, %s41
    %p43 = scmp.eq.s32.totalorder %s17, 0
    %p44 = por %p42, %p43
    %s46 = sadd.s32 %s45, 1
    %p49 = scmp.eq.s32.totalorder %s11, 1
    %p50 = scmp.ne.s32.totalorder %s45, %s47
    %p51 = scmp.eq.s32.totalorder %s11, 0
    %p52 = por %p50, %p51
    %p53 = scmp.ne.s32.totalorder %s45, %s47
    %p54 = scmp.eq.s32.totalorder %s16, 1
    %p55 = por %p53, %p54
    %p56 = scmp.ne.s32.totalorder %s47, %s48
    %p57 = scmp.eq.s32.totalorder %s16, 0
    %p58 = por %p56, %p57
    %p59 = scmp.ne.s32.totalorder %s47, %s48
    %p60 = scmp.eq.s32.totalorder %s17, 1
    %p61 = por %p59, %p60
    %p63 = scmp.ne.s32.totalorder %s48, %s62
    %p64 = scmp.eq.s32.totalorder %s17, 0
    %p65 = por %p63, %p64
    %s67 = sadd.s32 %s66, 1
    %p70 = scmp.eq.s32.totalorder %s11, 1
    %p71 = scmp.ne.s32.totalorder %s66, %s68
    %p72 = scmp.eq.s32.totalorder %s11, 0
    %p73 = por %p71, %p72
    %p74 = scmp.ne.s32.totalorder %s66, %s68
    %p75 = scmp.eq.s32.totalorder %s16, 1
    %p76 = por %p74, %p75
    %p77 = scmp.ne.s32.totalorder %s68, %s69
    %p78 = scmp.eq.s32.totalorder %s16, 0
    %p79 = por %p77, %p78
    %p80 = scmp.ne.s32.totalorder %s68, %s69
    %p81 = scmp.eq.s32.totalorder %s17, 1
    %p82 = por %p80, %p81
    %p84 = scmp.ne.s32.totalorder %s69, %s83
    %p85 = scmp.eq.s32.totalorder %s17, 0
    %p86 = por %p84, %p85
    %s87 = ssub.s32 %s11, %s18
    %p88 = scmp.eq.s32.totalorder %s87, 0
    %s90 = sadd.s32 %s89, 1
    %s91 = scalar_select %p88, %s89, %s90
    %p94 = pneg %p88
    %p95 = scmp.eq.s32.totalorder %s11, 1
    %p96 = por %p94, %p95
    %p97 = scmp.ne.s32.totalorder %s89, %s92
    %p98 = scmp.eq.s32.totalorder %s11, 0
    %p99 = por %p97, %p98
    %p100 = scmp.ne.s32.totalorder %s89, %s92
    %p101 = scmp.eq.s32.totalorder %s16, 1
    %p102 = por %p100, %p101
    %p103 = scmp.ne.s32.totalorder %s92, %s93
    %p104 = scmp.eq.s32.totalorder %s16, 0
    %p105 = por %p103, %p104
    %p106 = scmp.ne.s32.totalorder %s92, %s93
    %p107 = scmp.eq.s32.totalorder %s17, 1
    %p108 = por %p106, %p107
    %p110 = scmp.ne.s32.totalorder %s93, %s109
    %p111 = scmp.eq.s32.totalorder %s17, 0
    %p112 = por %p110, %p111
    %s113 = ssub.s32 %s11, %s18
    %p114 = scmp.eq.s32.totalorder %s113, 0
    %s116 = sadd.s32 %s115, 1
    %s117 = scalar_select %p114, %s115, %s116
    %p120 = pneg %p114
    %p121 = scmp.eq.s32.totalorder %s11, 1
    %p122 = por %p120, %p121
    %p123 = scmp.ne.s32.totalorder %s115, %s118
    %p124 = scmp.eq.s32.totalorder %s11, 0
    %p125 = por %p123, %p124
    %p126 = scmp.ne.s32.totalorder %s115, %s118
    %p127 = scmp.eq.s32.totalorder %s16, 1
    %p128 = por %p126, %p127
    %p129 = scmp.ne.s32.totalorder %s118, %s119
    %p130 = scmp.eq.s32.totalorder %s16, 0
    %p131 = por %p129, %p130
    %p132 = scmp.ne.s32.totalorder %s118, %s119
    %p133 = scmp.eq.s32.totalorder %s17, 1
    %p134 = por %p132, %p133
    %p136 = scmp.ne.s32.totalorder %s119, %s135
    %p137 = scmp.eq.s32.totalorder %s17, 0
    %p138 = por %p136, %p137
    %p139 = scmp.le.s32.totalorder 1, %s11
    %p140 = scmp.lt.s32.totalorder %s11, 3
    %p141 = pnand %p139, %p140
    %p142 = pneg %p141
    // Predicated region
    $region9: #{double_conv.3} parent=5 // pred_check
      _
    $region10: #{double_conv.3} parent=5 // pred_check_branch
      %144 = sbr.rel (%p141) target = $region12
    $region11: #{double_conv.3} parent=5 // pred_region
      %s145 = ssub.s32 %s11, 1
      // Predicated region
      $region13: #{double_conv.3} parent=11 // pred_check
        %p146 = pneg %p58
      $region14: #{double_conv.3} parent=11 // pred_check_branch
        %148 = sbr.rel (%p146) target = $region16
      $region15: #{double_conv.3} parent=11 // pred_region
        _
      $region16: #{double_conv.3} parent=11 // pred_fallthru
        _
      // Predicated region
      $region17: #{double_conv.3} parent=11 // pred_check
        %p149 = pneg %p79
      $region18: #{double_conv.3} parent=11 // pred_check_branch
        %151 = sbr.rel (%p149) target = $region20
      $region19: #{double_conv.3} parent=11 // pred_region
        _
      $region20: #{double_conv.3} parent=11 // pred_fallthru
        _
    $region12: #{double_conv.3} parent=5 // pred_fallthru
      _
    %p152 = scmp.lt.s32.totalorder %s11, 2
    // Predicated region
    $region21: #{double_conv.3} parent=5 // pred_check
      %p153 = pneg %p152
    $region22: #{double_conv.3} parent=5 // pred_check_branch
      %155 = sbr.rel (%p153) target = $region24
    $region23: #{double_conv.3} parent=5 // pred_region
      // Predicated region
      $region25: #{double_conv.3} parent=23 // pred_check
        %p156 = pneg %p31
      $region26: #{double_conv.3} parent=23 // pred_check_branch
        %158 = sbr.rel (%p156) target = $region28
      $region27: #{double_conv.3} parent=23 // pred_region
        %p159 = scmp.lt.s32.totalorder %s11, 1
        %s160 = scalar_select %p159, %s11, 1
        %s161 = smul.addr %s160, 8
        %s162 = smul.addr %s161, 8
        %s163 = scalar_lea.vmem %s0, %s162
      $region28: #{double_conv.3} parent=23 // pred_fallthru
        _
    $region24: #{double_conv.3} parent=5 // pred_fallthru
      _
    %p164 = scmp.le.s32.totalorder 1, %s11
    %p165 = scmp.lt.s32.totalorder %s11, 3
    %p166 = pnand %p164, %p165
    %p167 = pneg %p166
    // Predicated region
    $region29: #{double_conv.3} parent=5 // pred_check
      _
    $region30: #{double_conv.3} parent=5 // pred_check_branch
      %169 = sbr.rel (%p166) target = $region32
    $region31: #{double_conv.3} parent=5 // pred_region
      %s170 = ssub.s32 %s11, 1
      %p171 = scmp.lt.s32.totalorder %s16, 1
      %s172 = scalar_select %p171, %s16, 1
      %s173 = smul.addr %s172, 8
      %s174 = smul.addr %s173, 8
      %s175 = scalar_lea.vmem %s0, %s174
      %p176 = pneg %p37
      %p177 = pneg %p34
      %p178 = pneg %p58
      %p179 = pneg %p55
      %p180 = pneg %p79
      %p181 = pneg %p76
      %p182 = pneg %p105
      %p183 = pneg %p102
      %p184 = scmp.lt.s32.totalorder %s16, 1
      %s185 = scalar_select %p184, %s16, 1
      %s186 = smul.addr %s185, 2
      %s187 = smul.addr %s186, 8
      %s188 = scalar_lea.vmem %s3, %s187
      %p189 = pneg %p131
      %p190 = pneg %p128
      %p191 = scmp.lt.s32.totalorder %s16, 1
      %s192 = scalar_select %p191, %s16, 1
      %s193 = smul.addr %s192, 2
      %s194 = scalar_lea.vmem %s4, %s193
      %p195 = scmp.lt.s32.totalorder %s16, 1
      %s196 = scalar_select %p195, %s16, 1
      %s197 = smul.addr %s196, 8
      %s198 = smul.addr %s197, 8
      %s199 = scalar_lea.vmem %s0, %s198
      %p200 = scmp.lt.s32.totalorder %s16, 1
      %s201 = scalar_select %p200, %s16, 1
      %s202 = smul.addr %s201, 2
      %s203 = smul.addr %s202, 8
      %s204 = scalar_lea.vmem %s3, %s203
      %p205 = scmp.lt.s32.totalorder %s16, 1
      %s206 = scalar_select %p205, %s16, 1
      %s207 = smul.addr %s206, 2
      %s208 = scalar_lea.vmem %s4, %s207
      %v209 = vld [vmem:[%s199] sm:$0xff]
      %v210 = vld [vmem:[%s199 + $0x8] sm:$0xff]
      %vm213 = vcmask 1040384
      %v214 = vrot.slane %v209, 7
      %v215 = vrot.slane %v210, 7
      %v216 = vsel %vm213, %v214, %v215
      %v219 = vsel %vm213, 0.0, %v214
      %v220 = vsel %vm213, %v215, 0.0
      %v221 = vld [vmem:[%s1] sm:$0xff]
      %v222 = vld [vmem:[%s1 + $0x8] sm:$0xff]
      %s223 = scalar_lea.vmem %s1, 64
      %v224 = vld [vmem:[%s223] sm:$0xff]
      %v225 = vld [vmem:[%s223 + $0x8] sm:$0xff]
      %vm228 = vcmask 1046528
      %v229 = vrot.slane %v219, 1
      %v230 = vrot.slane %v216, 1
      %v231 = vsel %vm228, %v229, %v230
      %v232 = vrot.slane %v220, 1
      %v233 = vsel %vm228, %v230, %v232
      %vm234 = vcmask 130048
      %v235 = vsel %vm234, %v231, 0
      %v237 = vsel %vm234, %v233, 0
      %239 = vmatprep.subr.mxu0 0.0
      %240 = vmatpush1.msra.mxu0 %v224
      %241 = vmatprep.subr.mxu0 0.0
      %242 = vmatpush1.msra.mxu0 %v225
      %243 = vmatprep.subr.mxu0 0.0
      %244 = vmatpush1.msra.mxu0 0.0
      %245 = vmatprep.subr.mxu0 0.0
      %246 = vmatpush1.msra.mxu0 0.0
      %247 = vmatprep.subr.mxu0 0.0
      %248 = vmatpush1.msra.mxu0 0.0
      %249 = vmatprep.subr.mxu0 0.0
      %250 = vmatpush1.msra.mxu0 0.0
      %251 = vmatprep.subr.mxu0 0.0
      %252 = vmatpush1.msra.mxu0 0.0
      %253 = vmatprep.subr.mxu0 0.0
      %254 = vmatpush1.msra.mxu0 0.0
      %255 = vmatprep.subr.mxu0 0.0
      %256 = vmatpush1.msra.mxu0 0.0
      %257 = vmatprep.subr.mxu0 0.0
      %258 = vmatpush1.msra.mxu0 0.0
      %259 = vmatprep.subr.mxu0 0.0
      %260 = vmatpush1.msra.mxu0 0.0
      %261 = vmatprep.subr.mxu0 0.0
      %262 = vmatpush1.msra.mxu0 0.0
      %263 = vmatprep.subr.mxu0 0.0
      %264 = vmatpush1.msra.mxu0 0.0
      %265 = vmatprep.subr.mxu0 0.0
      %266 = vmatpush1.msra.mxu0 0.0
      %267 = vmatprep.subr.mxu0 0.0
      %268 = vmatpush1.msra.mxu0 0.0
      %269 = vmatprep.subr.mxu0 0.0
      %270 = vmatpush1.msra.mxu0 0.0
      %271 = vmatprep.subr.mxu0 0.0
      %272 = vmatpush1.msra.mxu0 0.0
      %273 = vmatprep.subr.mxu0 0.0
      %274 = vmatpush1.msra.mxu0 0.0
      %275 = vmatprep.subr.mxu0 0.0
      %276 = vmatpush1.msra.mxu0 0.0
      %277 = vmatprep.subr.mxu0 0.0
      %278 = vmatpush1.msra.mxu0 0.0
      %279 = vmatprep.subr.mxu0 0.0
      %280 = vmatpush1.msra.mxu0 0.0
      %281 = vmatprep.subr.mxu0 0.0
      %282 = vmatpush1.msra.mxu0 0.0
      %283 = vmatprep.subr.mxu0 0.0
      %284 = vmatpush1.msra.mxu0 0.0
      %285 = vmatprep.subr.mxu0 0.0
      %286 = vmatpush1.msra.mxu0 0.0
      %287 = vmatprep.subr.mxu0 0.0
      %288 = vmatpush1.msra.mxu0 0.0
      %289 = vmatprep.subr.mxu0 0.0
      %290 = vmatpush1.msra.mxu0 0.0
      %291 = vmatprep.subr.mxu0 0.0
      %292 = vmatpush1.msra.mxu0 0.0
      %293 = vmatprep.subr.mxu0 0.0
      %294 = vmatpush1.msra.mxu0 0.0
      %295 = vmatprep.subr.mxu0 0.0
      %296 = vmatpush1.msra.mxu0 0.0
      %297 = vmatprep.subr.mxu0 0.0
      %298 = vmatpush1.msra.mxu0 0.0
      %299 = vmatprep.subr.mxu0 0.0
      %300 = vmatpush1.msra.mxu0 0.0
      %301 = vmatprep.subr.mxu0 0.0
      %302 = vmatpush1.msra.mxu0 0.0
      %303 = vmatprep.mubr.f32.mxu0 0.0
      %304 = vmatmul.mubr.f32.gmra.mrb[0].mxu0 %v235
      %v305 = vpop.f32.mrb[0].mxu0
      %v306 = vadd.f32 0.0, %v305
      %v307 = vpop.f32.mrb[0].mxu0
      %308 = vmatprep.mubr.f32.mxu0 0.0
      %309 = vmatmul.mubr.f32.gmra.mrb[0].mxu0 %v237
      %v310 = vpop.f32.mrb[0].mxu0
      %v311 = vadd.f32 0.0, %v310
      %v312 = vpop.f32.mrb[0].mxu0
      %313 = vdwg.mxu0
      %v314 = vsel %vm234, %v219, 0
      %v316 = vsel %vm234, %v216, 0
      %318 = vmatprep.subr.mxu0 0.0
      %319 = vmatpush1.msra.mxu0 %v221
      %320 = vmatprep.subr.mxu0 0.0
      %321 = vmatpush1.msra.mxu0 %v222
      %322 = vmatprep.subr.mxu0 0.0
      %323 = vmatpush1.msra.mxu0 0.0
      %324 = vmatprep.subr.mxu0 0.0
      %325 = vmatpush1.msra.mxu0 0.0
      %326 = vmatprep.subr.mxu0 0.0
      %327 = vmatpush1.msra.mxu0 0.0
      %328 = vmatprep.subr.mxu0 0.0
      %329 = vmatpush1.msra.mxu0 0.0
      %330 = vmatprep.subr.mxu0 0.0
      %331 = vmatpush1.msra.mxu0 0.0
      %332 = vmatprep.subr.mxu0 0.0
      %333 = vmatpush1.msra.mxu0 0.0
      %334 = vmatprep.subr.mxu0 0.0
      %335 = vmatpush1.msra.mxu0 0.0
      %336 = vmatprep.subr.mxu0 0.0
      %337 = vmatpush1.msra.mxu0 0.0
      %338 = vmatprep.subr.mxu0 0.0
      %339 = vmatpush1.msra.mxu0 0.0
      %340 = vmatprep.subr.mxu0 0.0
      %341 = vmatpush1.msra.mxu0 0.0
      %342 = vmatprep.subr.mxu0 0.0
      %343 = vmatpush1.msra.mxu0 0.0
      %344 = vmatprep.subr.mxu0 0.0
      %345 = vmatpush1.msra.mxu0 0.0
      %346 = vmatprep.subr.mxu0 0.0
      %347 = vmatpush1.msra.mxu0 0.0
      %348 = vmatprep.subr.mxu0 0.0
      %349 = vmatpush1.msra.mxu0 0.0
      %350 = vmatprep.subr.mxu0 0.0
      %351 = vmatpush1.msra.mxu0 0.0
      %352 = vmatprep.subr.mxu0 0.0
      %353 = vmatpush1.msra.mxu0 0.0
      %354 = vmatprep.subr.mxu0 0.0
      %355 = vmatpush1.msra.mxu0 0.0
      %356 = vmatprep.subr.mxu0 0.0
      %357 = vmatpush1.msra.mxu0 0.0
      %358 = vmatprep.subr.mxu0 0.0
      %359 = vmatpush1.msra.mxu0 0.0
      %360 = vmatprep.subr.mxu0 0.0
      %361 = vmatpush1.msra.mxu0 0.0
      %362 = vmatprep.subr.mxu0 0.0
      %363 = vmatpush1.msra.mxu0 0.0
      %364 = vmatprep.subr.mxu0 0.0
      %365 = vmatpush1.msra.mxu0 0.0
      %366 = vmatprep.subr.mxu0 0.0
      %367 = vmatpush1.msra.mxu0 0.0
      %368 = vmatprep.subr.mxu0 0.0
      %369 = vmatpush1.msra.mxu0 0.0
      %370 = vmatprep.subr.mxu0 0.0
      %371 = vmatpush1.msra.mxu0 0.0
      %372 = vmatprep.subr.mxu0 0.0
      %373 = vmatpush1.msra.mxu0 0.0
      %374 = vmatprep.subr.mxu0 0.0
      %375 = vmatpush1.msra.mxu0 0.0
      %376 = vmatprep.subr.mxu0 0.0
      %377 = vmatpush1.msra.mxu0 0.0
      %378 = vmatprep.subr.mxu0 0.0
      %379 = vmatpush1.msra.mxu0 0.0
      %380 = vmatprep.subr.mxu0 0.0
      %381 = vmatpush1.msra.mxu0 0.0
      %382 = vmatprep.mubr.f32.mxu0 0.0
      %383 = vmatmul.mubr.f32.gmra.mrb[0].mxu0 %v314
      %v384 = vpop.f32.mrb[0].mxu0
      %v385 = vadd.f32 %v306, %v384
      %v386 = vpop.f32.mrb[0].mxu0
      %387 = vmatprep.mubr.f32.mxu0 0.0
      %388 = vmatmul.mubr.f32.gmra.mrb[0].mxu0 %v316
      %v389 = vpop.f32.mrb[0].mxu0
      %v390 = vadd.f32 %v311, %v389
      %v391 = vpop.f32.mrb[0].mxu0
      %392 = vdwg.mxu0
      %s393 = scalar_lea.vmem %s1, 128
      %v394 = vld [vmem:[%s393] sm:$0xff]
      %v395 = vld [vmem:[%s393 + $0x8] sm:$0xff]
      %vm396 = vcmask 1045504
      %v397 = vrot.slane %v219, 2
      %v398 = vrot.slane %v216, 2
      %v399 = vsel %vm396, %v397, %v398
      %v400 = vrot.slane %v220, 2
      %v401 = vsel %vm396, %v398, %v400
      %v402 = vsel %vm234, %v399, 0
      %v404 = vsel %vm234, %v401, 0
      %406 = vmatprep.subr.mxu0 0.0
      %407 = vmatpush1.msra.mxu0 %v394
      %408 = vmatprep.subr.mxu0 0.0
      %409 = vmatpush1.msra.mxu0 %v395
      %410 = vmatprep.subr.mxu0 0.0
      %411 = vmatpush1.msra.mxu0 0.0
      %412 = vmatprep.subr.mxu0 0.0
      %413 = vmatpush1.msra.mxu0 0.0
      %414 = vmatprep.subr.mxu0 0.0
      %415 = vmatpush1.msra.mxu0 0.0
      %416 = vmatprep.subr.mxu0 0.0
      %417 = vmatpush1.msra.mxu0 0.0
      %418 = vmatprep.subr.mxu0 0.0
      %419 = vmatpush1.msra.mxu0 0.0
      %420 = vmatprep.subr.mxu0 0.0
      %421 = vmatpush1.msra.mxu0 0.0
      %422 = vmatprep.subr.mxu0 0.0
      %423 = vmatpush1.msra.mxu0 0.0
      %424 = vmatprep.subr.mxu0 0.0
      %425 = vmatpush1.msra.mxu0 0.0
      %426 = vmatprep.subr.mxu0 0.0
      %427 = vmatpush1.msra.mxu0 0.0
      %428 = vmatprep.subr.mxu0 0.0
      %429 = vmatpush1.msra.mxu0 0.0
      %430 = vmatprep.subr.mxu0 0.0
      %431 = vmatpush1.msra.mxu0 0.0
      %432 = vmatprep.subr.mxu0 0.0
      %433 = vmatpush1.msra.mxu0 0.0
      %434 = vmatprep.subr.mxu0 0.0
      %435 = vmatpush1.msra.mxu0 0.0
      %436 = vmatprep.subr.mxu0 0.0
      %437 = vmatpush1.msra.mxu0 0.0
      %438 = vmatprep.subr.mxu0 0.0
      %439 = vmatpush1.msra.mxu0 0.0
      %440 = vmatprep.subr.mxu0 0.0
      %441 = vmatpush1.msra.mxu0 0.0
      %442 = vmatprep.subr.mxu0 0.0
      %443 = vmatpush1.msra.mxu0 0.0
      %444 = vmatprep.subr.mxu0 0.0
      %445 = vmatpush1.msra.mxu0 0.0
      %446 = vmatprep.subr.mxu0 0.0
      %447 = vmatpush1.msra.mxu0 0.0
      %448 = vmatprep.subr.mxu0 0.0
      %449 = vmatpush1.msra.mxu0 0.0
      %450 = vmatprep.subr.mxu0 0.0
      %451 = vmatpush1.msra.mxu0 0.0
      %452 = vmatprep.subr.mxu0 0.0
      %453 = vmatpush1.msra.mxu0 0.0
      %454 = vmatprep.subr.mxu0 0.0
      %455 = vmatpush1.msra.mxu0 0.0
      %456 = vmatprep.subr.mxu0 0.0
      %457 = vmatpush1.msra.mxu0 0.0
      %458 = vmatprep.subr.mxu0 0.0
      %459 = vmatpush1.msra.mxu0 0.0
      %460 = vmatprep.subr.mxu0 0.0
      %461 = vmatpush1.msra.mxu0 0.0
      %462 = vmatprep.subr.mxu0 0.0
      %463 = vmatpush1.msra.mxu0 0.0
      %464 = vmatprep.subr.mxu0 0.0
      %465 = vmatpush1.msra.mxu0 0.0
      %466 = vmatprep.subr.mxu0 0.0
      %467 = vmatpush1.msra.mxu0 0.0
      %468 = vmatprep.subr.mxu0 0.0
      %469 = vmatpush1.msra.mxu0 0.0
      %470 = vmatprep.mubr.f32.mxu0 0.0
      %471 = vmatmul.mubr.f32.gmra.mrb[0].mxu0 %v402
      %v472 = vpop.f32.mrb[0].mxu0
      %v473 = vadd.f32 0.0, %v472
      %v474 = vpop.f32.mrb[0].mxu0
      %475 = vmatprep.mubr.f32.mxu0 0.0
      %476 = vmatmul.mubr.f32.gmra.mrb[0].mxu0 %v404
      %v477 = vpop.f32.mrb[0].mxu0
      %v478 = vadd.f32 0.0, %v477
      %v479 = vpop.f32.mrb[0].mxu0
      %480 = vdwg.mxu0
      %v481 = vadd.f32 %v385, %v473
      %v482 = vadd.f32 %v390, %v478
      %s483 = scalar_lea.vmem %s199, 16
      %v484 = vld [vmem:[%s483] sm:$0xff]
      %v485 = vld [vmem:[%s483 + $0x8] sm:$0xff]
      %v488 = vrot.slane %v484, 7
      %v489 = vrot.slane %v485, 7
      %v490 = vsel %vm213, %v488, %v489
      %v493 = vsel %vm213, 0.0, %v488
      %v494 = vsel %vm213, %v489, 0.0
      %s495 = scalar_lea.vmem %s1, 16
      %v496 = vld [vmem:[%s495] sm:$0xff]
      %v497 = vld [vmem:[%s495 + $0x8] sm:$0xff]
      %v499 = vsel %vm234, %v493, 0
      %v501 = vsel %vm234, %v490, 0
      %503 = vmatprep.subr.mxu0 0.0
      %504 = vmatpush1.msra.mxu0 %v496
      %505 = vmatprep.subr.mxu0 0.0
      %506 = vmatpush1.msra.mxu0 %v497
      %507 = vmatprep.subr.mxu0 0.0
      %508 = vmatpush1.msra.mxu0 0.0
      %509 = vmatprep.subr.mxu0 0.0
      %510 = vmatpush1.msra.mxu0 0.0
      %511 = vmatprep.subr.mxu0 0.0
      %512 = vmatpush1.msra.mxu0 0.0
      %513 = vmatprep.subr.mxu0 0.0
      %514 = vmatpush1.msra.mxu0 0.0
      %515 = vmatprep.subr.mxu0 0.0
      %516 = vmatpush1.msra.mxu0 0.0
      %517 = vmatprep.subr.mxu0 0.0
      %518 = vmatpush1.msra.mxu0 0.0
      %519 = vmatprep.subr.mxu0 0.0
      %520 = vmatpush1.msra.mxu0 0.0
      %521 = vmatprep.subr.mxu0 0.0
      %522 = vmatpush1.msra.mxu0 0.0
      %523 = vmatprep.subr.mxu0 0.0
      %524 = vmatpush1.msra.mxu0 0.0
      %525 = vmatprep.subr.mxu0 0.0
      %526 = vmatpush1.msra.mxu0 0.0
      %527 = vmatprep.subr.mxu0 0.0
      %528 = vmatpush1.msra.mxu0 0.0
      %529 = vmatprep.subr.mxu0 0.0
      %530 = vmatpush1.msra.mxu0 0.0
      %531 = vmatprep.subr.mxu0 0.0
      %532 = vmatpush1.msra.mxu0 0.0
      %533 = vmatprep.subr.mxu0 0.0
      %534 = vmatpush1.msra.mxu0 0.0
      %535 = vmatprep.subr.mxu0 0.0
      %536 = vmatpush1.msra.mxu0 0.0
      %537 = vmatprep.subr.mxu0 0.0
      %538 = vmatpush1.msra.mxu0 0.0
      %539 = vmatprep.subr.mxu0 0.0
      %540 = vmatpush1.msra.mxu0 0.0
      %541 = vmatprep.subr.mxu0 0.0
      %542 = vmatpush1.msra.mxu0 0.0
      %543 = vmatprep.subr.mxu0 0.0
      %544 = vmatpush1.msra.mxu0 0.0
      %545 = vmatprep.subr.mxu0 0.0
      %546 = vmatpush1.msra.mxu0 0.0
      %547 = vmatprep.subr.mxu0 0.0
      %548 = vmatpush1.msra.mxu0 0.0
      %549 = vmatprep.subr.mxu0 0.0
      %550 = vmatpush1.msra.mxu0 0.0
      %551 = vmatprep.subr.mxu0 0.0
      %552 = vmatpush1.msra.mxu0 0.0
      %553 = vmatprep.subr.mxu0 0.0
      %554 = vmatpush1.msra.mxu0 0.0
      %555 = vmatprep.subr.mxu0 0.0
      %556 = vmatpush1.msra.mxu0 0.0
      %557 = vmatprep.subr.mxu0 0.0
      %558 = vmatpush1.msra.mxu0 0.0
      %559 = vmatprep.subr.mxu0 0.0
      %560 = vmatpush1.msra.mxu0 0.0
      %561 = vmatprep.subr.mxu0 0.0
      %562 = vmatpush1.msra.mxu0 0.0
      %563 = vmatprep.subr.mxu0 0.0
      %564 = vmatpush1.msra.mxu0 0.0
      %565 = vmatprep.subr.mxu0 0.0
      %566 = vmatpush1.msra.mxu0 0.0
      %567 = vmatprep.mubr.f32.mxu0 0.0
      %568 = vmatmul.mubr.f32.gmra.mrb[0].mxu0 %v499
      %v569 = vpop.f32.mrb[0].mxu0
      %v570 = vadd.f32 0.0, %v569
      %v571 = vpop.f32.mrb[0].mxu0
      %572 = vmatprep.mubr.f32.mxu0 0.0
      %573 = vmatmul.mubr.f32.gmra.mrb[0].mxu0 %v501
      %v574 = vpop.f32.mrb[0].mxu0
      %v575 = vadd.f32 0.0, %v574
      %v576 = vpop.f32.mrb[0].mxu0
      %577 = vdwg.mxu0
      %v578 = vadd.f32 %v481, %v570
      %v579 = vadd.f32 %v482, %v575
      %s580 = scalar_lea.vmem %s1, 80
      %v581 = vld [vmem:[%s580] sm:$0xff]
      %v582 = vld [vmem:[%s580 + $0x8] sm:$0xff]
      %v584 = vrot.slane %v493, 1
      %v585 = vrot.slane %v490, 1
      %v586 = vsel %vm228, %v584, %v585
      %v587 = vrot.slane %v494, 1
      %v588 = vsel %vm228, %v585, %v587
      %v589 = vsel %vm234, %v586, 0
      %v591 = vsel %vm234, %v588, 0
      %593 = vmatprep.subr.mxu0 0.0
      %594 = vmatpush1.msra.mxu0 %v581
      %595 = vmatprep.subr.mxu0 0.0
      %596 = vmatpush1.msra.mxu0 %v582
      %597 = vmatprep.subr.mxu0 0.0
      %598 = vmatpush1.msra.mxu0 0.0
      %599 = vmatprep.subr.mxu0 0.0
      %600 = vmatpush1.msra.mxu0 0.0
      %601 = vmatprep.subr.mxu0 0.0
      %602 = vmatpush1.msra.mxu0 0.0
      %603 = vmatprep.subr.mxu0 0.0
      %604 = vmatpush1.msra.mxu0 0.0
      %605 = vmatprep.subr.mxu0 0.0
      %606 = vmatpush1.msra.mxu0 0.0
      %607 = vmatprep.subr.mxu0 0.0
      %608 = vmatpush1.msra.mxu0 0.0
      %609 = vmatprep.subr.mxu0 0.0
      %610 = vmatpush1.msra.mxu0 0.0
      %611 = vmatprep.subr.mxu0 0.0
      %612 = vmatpush1.msra.mxu0 0.0
      %613 = vmatprep.subr.mxu0 0.0
      %614 = vmatpush1.msra.mxu0 0.0
      %615 = vmatprep.subr.mxu0 0.0
      %616 = vmatpush1.msra.mxu0 0.0
      %617 = vmatprep.subr.mxu0 0.0
      %618 = vmatpush1.msra.mxu0 0.0
      %619 = vmatprep.subr.mxu0 0.0
      %620 = vmatpush1.msra.mxu0 0.0
      %621 = vmatprep.subr.mxu0 0.0
      %622 = vmatpush1.msra.mxu0 0.0
      %623 = vmatprep.subr.mxu0 0.0
      %624 = vmatpush1.msra.mxu0 0.0
      %625 = vmatprep.subr.mxu0 0.0
      %626 = vmatpush1.msra.mxu0 0.0
      %627 = vmatprep.subr.mxu0 0.0
      %628 = vmatpush1.msra.mxu0 0.0
      %629 = vmatprep.subr.mxu0 0.0
      %630 = vmatpush1.msra.mxu0 0.0
      %631 = vmatprep.subr.mxu0 0.0
      %632 = vmatpush1.msra.mxu0 0.0
      %633 = vmatprep.subr.mxu0 0.0
      %634 = vmatpush1.msra.mxu0 0.0
      %635 = vmatprep.subr.mxu0 0.0
      %636 = vmatpush1.msra.mxu0 0.0
      %637 = vmatprep.subr.mxu0 0.0
      %638 = vmatpush1.msra.mxu0 0.0
      %639 = vmatprep.subr.mxu0 0.0
      %640 = vmatpush1.msra.mxu0 0.0
      %641 = vmatprep.subr.mxu0 0.0
      %642 = vmatpush1.msra.mxu0 0.0
      %643 = vmatprep.subr.mxu0 0.0
      %644 = vmatpush1.msra.mxu0 0.0
      %645 = vmatprep.subr.mxu0 0.0
      %646 = vmatpush1.msra.mxu0 0.0
      %647 = vmatprep.subr.mxu0 0.0
      %648 = vmatpush1.msra.mxu0 0.0
      %649 = vmatprep.subr.mxu0 0.0
      %650 = vmatpush1.msra.mxu0 0.0
      %651 = vmatprep.subr.mxu0 0.0
      %652 = vmatpush1.msra.mxu0 0.0
      %653 = vmatprep.subr.mxu0 0.0
      %654 = vmatpush1.msra.mxu0 0.0
      %655 = vmatprep.subr.mxu0 0.0
      %656 = vmatpush1.msra.mxu0 0.0
      %657 = vmatprep.mubr.f32.mxu0 0.0
      %658 = vmatmul.mubr.f32.gmra.mrb[0].mxu0 %v589
      %v659 = vpop.f32.mrb[0].mxu0
      %v660 = vadd.f32 0.0, %v659
      %v661 = vpop.f32.mrb[0].mxu0
      %662 = vmatprep.mubr.f32.mxu0 0.0
      %663 = vmatmul.mubr.f32.gmra.mrb[0].mxu0 %v591
      %v664 = vpop.f32.mrb[0].mxu0
      %v665 = vadd.f32 0.0, %v664
      %v666 = vpop.f32.mrb[0].mxu0
      %667 = vdwg.mxu0
      %v668 = vadd.f32 %v578, %v660
      %v669 = vadd.f32 %v579, %v665
      %s670 = scalar_lea.vmem %s1, 144
      %v671 = vld [vmem:[%s670] sm:$0xff]
      %v672 = vld [vmem:[%s670 + $0x8] sm:$0xff]
      %v673 = vrot.slane %v493, 2
      %v674 = vrot.slane %v490, 2
      %v675 = vsel %vm396, %v673, %v674
      %v676 = vrot.slane %v494, 2
      %v677 = vsel %vm396, %v674, %v676
      %v678 = vsel %vm234, %v675, 0
      %v680 = vsel %vm234, %v677, 0
      %682 = vmatprep.subr.mxu0 0.0
      %683 = vmatpush1.msra.mxu0 %v671
      %684 = vmatprep.subr.mxu0 0.0
      %685 = vmatpush1.msra.mxu0 %v672
      %686 = vmatprep.subr.mxu0 0.0
      %687 = vmatpush1.msra.mxu0 0.0
      %688 = vmatprep.subr.mxu0 0.0
      %689 = vmatpush1.msra.mxu0 0.0
      %690 = vmatprep.subr.mxu0 0.0
      %691 = vmatpush1.msra.mxu0 0.0
      %692 = vmatprep.subr.mxu0 0.0
      %693 = vmatpush1.msra.mxu0 0.0
      %694 = vmatprep.subr.mxu0 0.0
      %695 = vmatpush1.msra.mxu0 0.0
      %696 = vmatprep.subr.mxu0 0.0
      %697 = vmatpush1.msra.mxu0 0.0
      %698 = vmatprep.subr.mxu0 0.0
      %699 = vmatpush1.msra.mxu0 0.0
      %700 = vmatprep.subr.mxu0 0.0
      %701 = vmatpush1.msra.mxu0 0.0
      %702 = vmatprep.subr.mxu0 0.0
      %703 = vmatpush1.msra.mxu0 0.0
      %704 = vmatprep.subr.mxu0 0.0
      %705 = vmatpush1.msra.mxu0 0.0
      %706 = vmatprep.subr.mxu0 0.0
      %707 = vmatpush1.msra.mxu0 0.0
      %708 = vmatprep.subr.mxu0 0.0
      %709 = vmatpush1.msra.mxu0 0.0
      %710 = vmatprep.subr.mxu0 0.0
      %711 = vmatpush1.msra.mxu0 0.0
      %712 = vmatprep.subr.mxu0 0.0
      %713 = vmatpush1.msra.mxu0 0.0
      %714 = vmatprep.subr.mxu0 0.0
      %715 = vmatpush1.msra.mxu0 0.0
      %716 = vmatprep.subr.mxu0 0.0
      %717 = vmatpush1.msra.mxu0 0.0
      %718 = vmatprep.subr.mxu0 0.0
      %719 = vmatpush1.msra.mxu0 0.0
      %720 = vmatprep.subr.mxu0 0.0
      %721 = vmatpush1.msra.mxu0 0.0
      %722 = vmatprep.subr.mxu0 0.0
      %723 = vmatpush1.msra.mxu0 0.0
      %724 = vmatprep.subr.mxu0 0.0
      %725 = vmatpush1.msra.mxu0 0.0
      %726 = vmatprep.subr.mxu0 0.0
      %727 = vmatpush1.msra.mxu0 0.0
      %728 = vmatprep.subr.mxu0 0.0
      %729 = vmatpush1.msra.mxu0 0.0
      %730 = vmatprep.subr.mxu0 0.0
      %731 = vmatpush1.msra.mxu0 0.0
      %732 = vmatprep.subr.mxu0 0.0
      %733 = vmatpush1.msra.mxu0 0.0
      %734 = vmatprep.subr.mxu0 0.0
      %735 = vmatpush1.msra.mxu0 0.0
      %736 = vmatprep.subr.mxu0 0.0
      %737 = vmatpush1.msra.mxu0 0.0
      %738 = vmatprep.subr.mxu0 0.0
      %739 = vmatpush1.msra.mxu0 0.0
      %740 = vmatprep.subr.mxu0 0.0
      %741 = vmatpush1.msra.mxu0 0.0
      %742 = vmatprep.subr.mxu0 0.0
      %743 = vmatpush1.msra.mxu0 0.0
      %744 = vmatprep.subr.mxu0 0.0
      %745 = vmatpush1.msra.mxu0 0.0
      %746 = vmatprep.mubr.f32.mxu0 0.0
      %747 = vmatmul.mubr.f32.gmra.mrb[0].mxu0 %v678
      %v748 = vpop.f32.mrb[0].mxu0
      %v749 = vadd.f32 0.0, %v748
      %v750 = vpop.f32.mrb[0].mxu0
      %751 = vmatprep.mubr.f32.mxu0 0.0
      %752 = vmatmul.mubr.f32.gmra.mrb[0].mxu0 %v680
      %v753 = vpop.f32.mrb[0].mxu0
      %v754 = vadd.f32 0.0, %v753
      %v755 = vpop.f32.mrb[0].mxu0
      %756 = vdwg.mxu0
      %v757 = vadd.f32 %v668, %v749
      %v758 = vadd.f32 %v669, %v754
      %s759 = scalar_lea.vmem %s199, 32
      %v760 = vld [vmem:[%s759] sm:$0xff]
      %v761 = vld [vmem:[%s759 + $0x8] sm:$0xff]
      %v764 = vrot.slane %v760, 7
      %v765 = vrot.slane %v761, 7
      %v766 = vsel %vm213, %v764, %v765
      %v769 = vsel %vm213, 0.0, %v764
      %v770 = vsel %vm213, %v765, 0.0
      %s771 = scalar_lea.vmem %s1, 32
      %v772 = vld [vmem:[%s771] sm:$0xff]
      %v773 = vld [vmem:[%s771 + $0x8] sm:$0xff]
      %v775 = vsel %vm234, %v769, 0
      %v777 = vsel %vm234, %v766, 0
      %779 = vmatprep.subr.mxu0 0.0
      %780 = vmatpush1.msra.mxu0 %v772
      %781 = vmatprep.subr.mxu0 0.0
      %782 = vmatpush1.msra.mxu0 %v773
      %783 = vmatprep.subr.mxu0 0.0
      %784 = vmatpush1.msra.mxu0 0.0
      %785 = vmatprep.subr.mxu0 0.0
      %786 = vmatpush1.msra.mxu0 0.0
      %787 = vmatprep.subr.mxu0 0.0
      %788 = vmatpush1.msra.mxu0 0.0
      %789 = vmatprep.subr.mxu0 0.0
      %790 = vmatpush1.msra.mxu0 0.0
      %791 = vmatprep.subr.mxu0 0.0
      %792 = vmatpush1.msra.mxu0 0.0
      %793 = vmatprep.subr.mxu0 0.0
      %794 = vmatpush1.msra.mxu0 0.0
      %795 = vmatprep.subr.mxu0 0.0
      %796 = vmatpush1.msra.mxu0 0.0
      %797 = vmatprep.subr.mxu0 0.0
      %798 = vmatpush1.msra.mxu0 0.0
      %799 = vmatprep.subr.mxu0 0.0
      %800 = vmatpush1.msra.mxu0 0.0
      %801 = vmatprep.subr.mxu0 0.0
      %802 = vmatpush1.msra.mxu0 0.0
      %803 = vmatprep.subr.mxu0 0.0
      %804 = vmatpush1.msra.mxu0 0.0
      %805 = vmatprep.subr.mxu0 0.0
      %806 = vmatpush1.msra.mxu0 0.0
      %807 = vmatprep.subr.mxu0 0.0
      %808 = vmatpush1.msra.mxu0 0.0
      %809 = vmatprep.subr.mxu0 0.0
      %810 = vmatpush1.msra.mxu0 0.0
      %811 = vmatprep.subr.mxu0 0.0
      %812 = vmatpush1.msra.mxu0 0.0
      %813 = vmatprep.subr.mxu0 0.0
      %814 = vmatpush1.msra.mxu0 0.0
      %815 = vmatprep.subr.mxu0 0.0
      %816 = vmatpush1.msra.mxu0 0.0
      %817 = vmatprep.subr.mxu0 0.0
      %818 = vmatpush1.msra.mxu0 0.0
      %819 = vmatprep.subr.mxu0 0.0
      %820 = vmatpush1.msra.mxu0 0.0
      %821 = vmatprep.subr.mxu0 0.0
      %822 = vmatpush1.msra.mxu0 0.0
      %823 = vmatprep.subr.mxu0 0.0
      %824 = vmatpush1.msra.mxu0 0.0
      %825 = vmatprep.subr.mxu0 0.0
      %826 = vmatpush1.msra.mxu0 0.0
      %827 = vmatprep.subr.mxu0 0.0
      %828 = vmatpush1.msra.mxu0 0.0
      %829 = vmatprep.subr.mxu0 0.0
      %830 = vmatpush1.msra.mxu0 0.0
      %831 = vmatprep.subr.mxu0 0.0
      %832 = vmatpush1.msra.mxu0 0.0
      %833 = vmatprep.subr.mxu0 0.0
      %834 = vmatpush1.msra.mxu0 0.0
      %835 = vmatprep.subr.mxu0 0.0
      %836 = vmatpush1.msra.mxu0 0.0
      %837 = vmatprep.subr.mxu0 0.0
      %838 = vmatpush1.msra.mxu0 0.0
      %839 = vmatprep.subr.mxu0 0.0
      %840 = vmatpush1.msra.mxu0 0.0
      %841 = vmatprep.subr.mxu0 0.0
      %842 = vmatpush1.msra.mxu0 0.0
      %843 = vmatprep.mubr.f32.mxu0 0.0
      %844 = vmatmul.mubr.f32.gmra.mrb[0].mxu0 %v775
      %v845 = vpop.f32.mrb[0].mxu0
      %v846 = vadd.f32 0.0, %v845
      %v847 = vpop.f32.mrb[0].mxu0
      %848 = vmatprep.mubr.f32.mxu0 0.0
      %849 = vmatmul.mubr.f32.gmra.mrb[0].mxu0 %v777
      %v850 = vpop.f32.mrb[0].mxu0
      %v851 = vadd.f32 0.0, %v850
      %v852 = vpop.f32.mrb[0].mxu0
      %853 = vdwg.mxu0
      %v854 = vadd.f32 %v757, %v846
      %v855 = vadd.f32 %v758, %v851
      %s856 = scalar_lea.vmem %s1, 96
      %v857 = vld [vmem:[%s856] sm:$0xff]
      %v858 = vld [vmem:[%s856 + $0x8] sm:$0xff]
      %v860 = vrot.slane %v769, 1
      %v861 = vrot.slane %v766, 1
      %v862 = vsel %vm228, %v860, %v861
      %v863 = vrot.slane %v770, 1
      %v864 = vsel %vm228, %v861, %v863
      %v865 = vsel %vm234, %v862, 0
      %v867 = vsel %vm234, %v864, 0
      %869 = vmatprep.subr.mxu0 0.0
      %870 = vmatpush1.msra.mxu0 %v857
      %871 = vmatprep.subr.mxu0 0.0
      %872 = vmatpush1.msra.mxu0 %v858
      %873 = vmatprep.subr.mxu0 0.0
      %874 = vmatpush1.msra.mxu0 0.0
      %875 = vmatprep.subr.mxu0 0.0
      %876 = vmatpush1.msra.mxu0 0.0
      %877 = vmatprep.subr.mxu0 0.0
      %878 = vmatpush1.msra.mxu0 0.0
      %879 = vmatprep.subr.mxu0 0.0
      %880 = vmatpush1.msra.mxu0 0.0
      %881 = vmatprep.subr.mxu0 0.0
      %882 = vmatpush1.msra.mxu0 0.0
      %883 = vmatprep.subr.mxu0 0.0
      %884 = vmatpush1.msra.mxu0 0.0
      %885 = vmatprep.subr.mxu0 0.0
      %886 = vmatpush1.msra.mxu0 0.0
      %887 = vmatprep.subr.mxu0 0.0
      %888 = vmatpush1.msra.mxu0 0.0
      %889 = vmatprep.subr.mxu0 0.0
      %890 = vmatpush1.msra.mxu0 0.0
      %891 = vmatprep.subr.mxu0 0.0
      %892 = vmatpush1.msra.mxu0 0.0
      %893 = vmatprep.subr.mxu0 0.0
      %894 = vmatpush1.msra.mxu0 0.0
      %895 = vmatprep.subr.mxu0 0.0
      %896 = vmatpush1.msra.mxu0 0.0
      %897 = vmatprep.subr.mxu0 0.0
      %898 = vmatpush1.msra.mxu0 0.0
      %899 = vmatprep.subr.mxu0 0.0
      %900 = vmatpush1.msra.mxu0 0.0
      %901 = vmatprep.subr.mxu0 0.0
      %902 = vmatpush1.msra.mxu0 0.0
      %903 = vmatprep.subr.mxu0 0.0
      %904 = vmatpush1.msra.mxu0 0.0
      %905 = vmatprep.subr.mxu0 0.0
      %906 = vmatpush1.msra.mxu0 0.0
      %907 = vmatprep.subr.mxu0 0.0
      %908 = vmatpush1.msra.mxu0 0.0
      %909 = vmatprep.subr.mxu0 0.0
      %910 = vmatpush1.msra.mxu0 0.0
      %911 = vmatprep.subr.mxu0 0.0
      %912 = vmatpush1.msra.mxu0 0.0
      %913 = vmatprep.subr.mxu0 0.0
      %914 = vmatpush1.msra.mxu0 0.0
      %915 = vmatprep.subr.mxu0 0.0
      %916 = vmatpush1.msra.mxu0 0.0
      %917 = vmatprep.subr.mxu0 0.0
      %918 = vmatpush1.msra.mxu0 0.0
      %919 = vmatprep.subr.mxu0 0.0
      %920 = vmatpush1.msra.mxu0 0.0
      %921 = vmatprep.subr.mxu0 0.0
      %922 = vmatpush1.msra.mxu0 0.0
      %923 = vmatprep.subr.mxu0 0.0
      %924 = vmatpush1.msra.mxu0 0.0
      %925 = vmatprep.subr.mxu0 0.0
      %926 = vmatpush1.msra.mxu0 0.0
      %927 = vmatprep.subr.mxu0 0.0
      %928 = vmatpush1.msra.mxu0 0.0
      %929 = vmatprep.subr.mxu0 0.0
      %930 = vmatpush1.msra.mxu0 0.0
      %931 = vmatprep.subr.mxu0 0.0
      %932 = vmatpush1.msra.mxu0 0.0
      %933 = vmatprep.mubr.f32.mxu0 0.0
      %934 = vmatmul.mubr.f32.gmra.mrb[0].mxu0 %v865
      %v935 = vpop.f32.mrb[0].mxu0
      %v936 = vadd.f32 0.0, %v935
      %v937 = vpop.f32.mrb[0].mxu0
      %938 = vmatprep.mubr.f32.mxu0 0.0
      %939 = vmatmul.mubr.f32.gmra.mrb[0].mxu0 %v867
      %v940 = vpop.f32.mrb[0].mxu0
      %v941 = vadd.f32 0.0, %v940
      %v942 = vpop.f32.mrb[0].mxu0
      %943 = vdwg.mxu0
      %v944 = vadd.f32 %v854, %v936
      %v945 = vadd.f32 %v855, %v941
      %s946 = scalar_lea.vmem %s1, 160
      %v947 = vld [vmem:[%s946] sm:$0xff]
      %v948 = vld [vmem:[%s946 + $0x8] sm:$0xff]
      %v949 = vrot.slane %v769, 2
      %v950 = vrot.slane %v766, 2
      %v951 = vsel %vm396, %v949, %v950
      %v952 = vrot.slane %v770, 2
      %v953 = vsel %vm396, %v950, %v952
      %v954 = vsel %vm234, %v951, 0
      %v956 = vsel %vm234, %v953, 0
      %958 = vmatprep.subr.mxu0 0.0
      %959 = vmatpush1.msra.mxu0 %v947
      %960 = vmatprep.subr.mxu0 0.0
      %961 = vmatpush1.msra.mxu0 %v948
      %962 = vmatprep.subr.mxu0 0.0
      %963 = vmatpush1.msra.mxu0 0.0
      %964 = vmatprep.subr.mxu0 0.0
      %965 = vmatpush1.msra.mxu0 0.0
      %966 = vmatprep.subr.mxu0 0.0
      %967 = vmatpush1.msra.mxu0 0.0
      %968 = vmatprep.subr.mxu0 0.0
      %969 = vmatpush1.msra.mxu0 0.0
      %970 = vmatprep.subr.mxu0 0.0
      %971 = vmatpush1.msra.mxu0 0.0
      %972 = vmatprep.subr.mxu0 0.0
      %973 = vmatpush1.msra.mxu0 0.0
      %974 = vmatprep.subr.mxu0 0.0
      %975 = vmatpush1.msra.mxu0 0.0
      %976 = vmatprep.subr.mxu0 0.0
      %977 = vmatpush1.msra.mxu0 0.0
      %978 = vmatprep.subr.mxu0 0.0
      %979 = vmatpush1.msra.mxu0 0.0
      %980 = vmatprep.subr.mxu0 0.0
      %981 = vmatpush1.msra.mxu0 0.0
      %982 = vmatprep.subr.mxu0 0.0
      %983 = vmatpush1.msra.mxu0 0.0
      %984 = vmatprep.subr.mxu0 0.0
      %985 = vmatpush1.msra.mxu0 0.0
      %986 = vmatprep.subr.mxu0 0.0
      %987 = vmatpush1.msra.mxu0 0.0
      %988 = vmatprep.subr.mxu0 0.0
      %989 = vmatpush1.msra.mxu0 0.0
      %990 = vmatprep.subr.mxu0 0.0
      %991 = vmatpush1.msra.mxu0 0.0
      %992 = vmatprep.subr.mxu0 0.0
      %993 = vmatpush1.msra.mxu0 0.0
      %994 = vmatprep.subr.mxu0 0.0
      %995 = vmatpush1.msra.mxu0 0.0
      %996 = vmatprep.subr.mxu0 0.0
      %997 = vmatpush1.msra.mxu0 0.0
      %998 = vmatprep.subr.mxu0 0.0
      %999 = vmatpush1.msra.mxu0 0.0
      %1000 = vmatprep.subr.mxu0 0.0
      %1001 = vmatpush1.msra.mxu0 0.0
      %1002 = vmatprep.subr.mxu0 0.0
      %1003 = vmatpush1.msra.mxu0 0.0
      %1004 = vmatprep.subr.mxu0 0.0
      %1005 = vmatpush1.msra.mxu0 0.0
      %1006 = vmatprep.subr.mxu0 0.0
      %1007 = vmatpush1.msra.mxu0 0.0
      %1008 = vmatprep.subr.mxu0 0.0
      %1009 = vmatpush1.msra.mxu0 0.0
      %1010 = vmatprep.subr.mxu0 0.0
      %1011 = vmatpush1.msra.mxu0 0.0
      %1012 = vmatprep.subr.mxu0 0.0
      %1013 = vmatpush1.msra.mxu0 0.0
      %1014 = vmatprep.subr.mxu0 0.0
      %1015 = vmatpush1.msra.mxu0 0.0
      %1016 = vmatprep.subr.mxu0 0.0
      %1017 = vmatpush1.msra.mxu0 0.0
      %1018 = vmatprep.subr.mxu0 0.0
      %1019 = vmatpush1.msra.mxu0 0.0
      %1020 = vmatprep.subr.mxu0 0.0
      %1021 = vmatpush1.msra.mxu0 0.0
      %1022 = vmatprep.mubr.f32.mxu0 0.0
      %1023 = vmatmul.mubr.f32.gmra.mrb[0].mxu0 %v954
      %v1024 = vpop.f32.mrb[0].mxu0
      %v1025 = vadd.f32 0.0, %v1024
      %v1026 = vpop.f32.mrb[0].mxu0
      %1027 = vmatprep.mubr.f32.mxu0 0.0
      %1028 = vmatmul.mubr.f32.gmra.mrb[0].mxu0 %v956
      %v1029 = vpop.f32.mrb[0].mxu0
      %v1030 = vadd.f32 0.0, %v1029
      %v1031 = vpop.f32.mrb[0].mxu0
      %1032 = vdwg.mxu0
      %v1033 = vadd.f32 %v944, %v1025
      %v1034 = vadd.f32 %v945, %v1030
      %s1035 = scalar_lea.vmem %s199, 48
      %v1036 = vld [vmem:[%s1035] sm:$0xff]
      %v1037 = vld [vmem:[%s1035 + $0x8] sm:$0xff]
      %v1040 = vrot.slane %v1036, 7
      %v1041 = vrot.slane %v1037, 7
      %v1042 = vsel %vm213, %v1040, %v1041
      %v1045 = vsel %vm213, 0.0, %v1040
      %v1046 = vsel %vm213, %v1041, 0.0
      %s1047 = scalar_lea.vmem %s1, 48
      %v1048 = vld [vmem:[%s1047] sm:$0xff]
      %v1049 = vld [vmem:[%s1047 + $0x8] sm:$0xff]
      %v1051 = vsel %vm234, %v1045, 0
      %v1053 = vsel %vm234, %v1042, 0
      %1055 = vmatprep.subr.mxu0 0.0
      %1056 = vmatpush1.msra.mxu0 %v1048
      %1057 = vmatprep.subr.mxu0 0.0
      %1058 = vmatpush1.msra.mxu0 %v1049
      %1059 = vmatprep.subr.mxu0 0.0
      %1060 = vmatpush1.msra.mxu0 0.0
      %1061 = vmatprep.subr.mxu0 0.0
      %1062 = vmatpush1.msra.mxu0 0.0
      %1063 = vmatprep.subr.mxu0 0.0
      %1064 = vmatpush1.msra.mxu0 0.0
      %1065 = vmatprep.subr.mxu0 0.0
      %1066 = vmatpush1.msra.mxu0 0.0
      %1067 = vmatprep.subr.mxu0 0.0
      %1068 = vmatpush1.msra.mxu0 0.0
      %1069 = vmatprep.subr.mxu0 0.0
      %1070 = vmatpush1.msra.mxu0 0.0
      %1071 = vmatprep.subr.mxu0 0.0
      %1072 = vmatpush1.msra.mxu0 0.0
      %1073 = vmatprep.subr.mxu0 0.0
      %1074 = vmatpush1.msra.mxu0 0.0
      %1075 = vmatprep.subr.mxu0 0.0
      %1076 = vmatpush1.msra.mxu0 0.0
      %1077 = vmatprep.subr.mxu0 0.0
      %1078 = vmatpush1.msra.mxu0 0.0
      %1079 = vmatprep.subr.mxu0 0.0
      %1080 = vmatpush1.msra.mxu0 0.0
      %1081 = vmatprep.subr.mxu0 0.0
      %1082 = vmatpush1.msra.mxu0 0.0
      %1083 = vmatprep.subr.mxu0 0.0
      %1084 = vmatpush1.msra.mxu0 0.0
      %1085 = vmatprep.subr.mxu0 0.0
      %1086 = vmatpush1.msra.mxu0 0.0
      %1087 = vmatprep.subr.mxu0 0.0
      %1088 = vmatpush1.msra.mxu0 0.0
      %1089 = vmatprep.subr.mxu0 0.0
      %1090 = vmatpush1.msra.mxu0 0.0
      %1091 = vmatprep.subr.mxu0 0.0
      %1092 = vmatpush1.msra.mxu0 0.0
      %1093 = vmatprep.subr.mxu0 0.0
      %1094 = vmatpush1.msra.mxu0 0.0
      %1095 = vmatprep.subr.mxu0 0.0
      %1096 = vmatpush1.msra.mxu0 0.0
      %1097 = vmatprep.subr.mxu0 0.0
      %1098 = vmatpush1.msra.mxu0 0.0
      %1099 = vmatprep.subr.mxu0 0.0
      %1100 = vmatpush1.msra.mxu0 0.0
      %1101 = vmatprep.subr.mxu0 0.0
      %1102 = vmatpush1.msra.mxu0 0.0
      %1103 = vmatprep.subr.mxu0 0.0
      %1104 = vmatpush1.msra.mxu0 0.0
      %1105 = vmatprep.subr.mxu0 0.0
      %1106 = vmatpush1.msra.mxu0 0.0
      %1107 = vmatprep.subr.mxu0 0.0
      %1108 = vmatpush1.msra.mxu0 0.0
      %1109 = vmatprep.subr.mxu0 0.0
      %1110 = vmatpush1.msra.mxu0 0.0
      %1111 = vmatprep.subr.mxu0 0.0
      %1112 = vmatpush1.msra.mxu0 0.0
      %1113 = vmatprep.subr.mxu0 0.0
      %1114 = vmatpush1.msra.mxu0 0.0
      %1115 = vmatprep.subr.mxu0 0.0
      %1116 = vmatpush1.msra.mxu0 0.0
      %1117 = vmatprep.subr.mxu0 0.0
      %1118 = vmatpush1.msra.mxu0 0.0
      %1119 = vmatprep.mubr.f32.mxu0 0.0
      %1120 = vmatmul.mubr.f32.gmra.mrb[0].mxu0 %v1051
      %v1121 = vpop.f32.mrb[0].mxu0
      %v1122 = vadd.f32 0.0, %v1121
      %v1123 = vpop.f32.mrb[0].mxu0
      %1124 = vmatprep.mubr.f32.mxu0 0.0
      %1125 = vmatmul.mubr.f32.gmra.mrb[0].mxu0 %v1053
      %v1126 = vpop.f32.mrb[0].mxu0
      %v1127 = vadd.f32 0.0, %v1126
      %v1128 = vpop.f32.mrb[0].mxu0
      %1129 = vdwg.mxu0
      %v1130 = vadd.f32 %v1033, %v1122
      %v1131 = vadd.f32 %v1034, %v1127
      %s1132 = scalar_lea.vmem %s1, 112
      %v1133 = vld [vmem:[%s1132] sm:$0xff]
      %v1134 = vld [vmem:[%s1132 + $0x8] sm:$0xff]
      %v1136 = vrot.slane %v1045, 1
      %v1137 = vrot.slane %v1042, 1
      %v1138 = vsel %vm228, %v1136, %v1137
      %v1139 = vrot.slane %v1046, 1
      %v1140 = vsel %vm228, %v1137, %v1139
      %v1141 = vsel %vm234, %v1138, 0
      %v1143 = vsel %vm234, %v1140, 0
      %1145 = vmatprep.subr.mxu0 0.0
      %1146 = vmatpush1.msra.mxu0 %v1133
      %1147 = vmatprep.subr.mxu0 0.0
      %1148 = vmatpush1.msra.mxu0 %v1134
      %1149 = vmatprep.subr.mxu0 0.0
      %1150 = vmatpush1.msra.mxu0 0.0
      %1151 = vmatprep.subr.mxu0 0.0
      %1152 = vmatpush1.msra.mxu0 0.0
      %1153 = vmatprep.subr.mxu0 0.0
      %1154 = vmatpush1.msra.mxu0 0.0
      %1155 = vmatprep.subr.mxu0 0.0
      %1156 = vmatpush1.msra.mxu0 0.0
      %1157 = vmatprep.subr.mxu0 0.0
      %1158 = vmatpush1.msra.mxu0 0.0
      %1159 = vmatprep.subr.mxu0 0.0
      %1160 = vmatpush1.msra.mxu0 0.0
      %1161 = vmatprep.subr.mxu0 0.0
      %1162 = vmatpush1.msra.mxu0 0.0
      %1163 = vmatprep.subr.mxu0 0.0
      %1164 = vmatpush1.msra.mxu0 0.0
      %1165 = vmatprep.subr.mxu0 0.0
      %1166 = vmatpush1.msra.mxu0 0.0
      %1167 = vmatprep.subr.mxu0 0.0
      %1168 = vmatpush1.msra.mxu0 0.0
      %1169 = vmatprep.subr.mxu0 0.0
      %1170 = vmatpush1.msra.mxu0 0.0
      %1171 = vmatprep.subr.mxu0 0.0
      %1172 = vmatpush1.msra.mxu0 0.0
      %1173 = vmatprep.subr.mxu0 0.0
      %1174 = vmatpush1.msra.mxu0 0.0
      %1175 = vmatprep.subr.mxu0 0.0
      %1176 = vmatpush1.msra.mxu0 0.0
      %1177 = vmatprep.subr.mxu0 0.0
      %1178 = vmatpush1.msra.mxu0 0.0
      %1179 = vmatprep.subr.mxu0 0.0
      %1180 = vmatpush1.msra.mxu0 0.0
      %1181 = vmatprep.subr.mxu0 0.0
      %1182 = vmatpush1.msra.mxu0 0.0
      %1183 = vmatprep.subr.mxu0 0.0
      %1184 = vmatpush1.msra.mxu0 0.0
      %1185 = vmatprep.subr.mxu0 0.0
      %1186 = vmatpush1.msra.mxu0 0.0
      %1187 = vmatprep.subr.mxu0 0.0
      %1188 = vmatpush1.msra.mxu0 0.0
      %1189 = vmatprep.subr.mxu0 0.0
      %1190 = vmatpush1.msra.mxu0 0.0
      %1191 = vmatprep.subr.mxu0 0.0
      %1192 = vmatpush1.msra.mxu0 0.0
      %1193 = vmatprep.subr.mxu0 0.0
      %1194 = vmatpush1.msra.mxu0 0.0
      %1195 = vmatprep.subr.mxu0 0.0
      %1196 = vmatpush1.msra.mxu0 0.0
      %1197 = vmatprep.subr.mxu0 0.0
      %1198 = vmatpush1.msra.mxu0 0.0
      %1199 = vmatprep.subr.mxu0 0.0
      %1200 = vmatpush1.msra.mxu0 0.0
      %1201 = vmatprep.subr.mxu0 0.0
      %1202 = vmatpush1.msra.mxu0 0.0
      %1203 = vmatprep.subr.mxu0 0.0
      %1204 = vmatpush1.msra.mxu0 0.0
      %1205 = vmatprep.subr.mxu0 0.0
      %1206 = vmatpush1.msra.mxu0 0.0
      %1207 = vmatprep.subr.mxu0 0.0
      %1208 = vmatpush1.msra.mxu0 0.0
      %1209 = vmatprep.mubr.f32.mxu0 0.0
      %1210 = vmatmul.mubr.f32.gmra.mrb[0].mxu0 %v1141
      %v1211 = vpop.f32.mrb[0].mxu0
      %v1212 = vadd.f32 0.0, %v1211
      %v1213 = vpop.f32.mrb[0].mxu0
      %1214 = vmatprep.mubr.f32.mxu0 0.0
      %1215 = vmatmul.mubr.f32.gmra.mrb[0].mxu0 %v1143
      %v1216 = vpop.f32.mrb[0].mxu0
      %v1217 = vadd.f32 0.0, %v1216
      %v1218 = vpop.f32.mrb[0].mxu0
      %1219 = vdwg.mxu0
      %v1220 = vadd.f32 %v1130, %v1212
      %v1221 = vadd.f32 %v1131, %v1217
      %s1222 = scalar_lea.vmem %s1, 176
      %v1223 = vld [vmem:[%s1222] sm:$0xff]
      %v1224 = vld [vmem:[%s1222 + $0x8] sm:$0xff]
      %v1225 = vrot.slane %v1045, 2
      %v1226 = vrot.slane %v1042, 2
      %v1227 = vsel %vm396, %v1225, %v1226
      %v1228 = vrot.slane %v1046, 2
      %v1229 = vsel %vm396, %v1226, %v1228
      %v1230 = vsel %vm234, %v1227, 0
      %v1232 = vsel %vm234, %v1229, 0
      %1234 = vmatprep.subr.mxu0 0.0
      %1235 = vmatpush1.msra.mxu0 %v1223
      %1236 = vmatprep.subr.mxu0 0.0
      %1237 = vmatpush1.msra.mxu0 %v1224
      %1238 = vmatprep.subr.mxu0 0.0
      %1239 = vmatpush1.msra.mxu0 0.0
      %1240 = vmatprep.subr.mxu0 0.0
      %1241 = vmatpush1.msra.mxu0 0.0
      %1242 = vmatprep.subr.mxu0 0.0
      %1243 = vmatpush1.msra.mxu0 0.0
      %1244 = vmatprep.subr.mxu0 0.0
      %1245 = vmatpush1.msra.mxu0 0.0
      %1246 = vmatprep.subr.mxu0 0.0
      %1247 = vmatpush1.msra.mxu0 0.0
      %1248 = vmatprep.subr.mxu0 0.0
      %1249 = vmatpush1.msra.mxu0 0.0
      %1250 = vmatprep.subr.mxu0 0.0
      %1251 = vmatpush1.msra.mxu0 0.0
      %1252 = vmatprep.subr.mxu0 0.0
      %1253 = vmatpush1.msra.mxu0 0.0
      %1254 = vmatprep.subr.mxu0 0.0
      %1255 = vmatpush1.msra.mxu0 0.0
      %1256 = vmatprep.subr.mxu0 0.0
      %1257 = vmatpush1.msra.mxu0 0.0
      %1258 = vmatprep.subr.mxu0 0.0
      %1259 = vmatpush1.msra.mxu0 0.0
      %1260 = vmatprep.subr.mxu0 0.0
      %1261 = vmatpush1.msra.mxu0 0.0
      %1262 = vmatprep.subr.mxu0 0.0
      %1263 = vmatpush1.msra.mxu0 0.0
      %1264 = vmatprep.subr.mxu0 0.0
      %1265 = vmatpush1.msra.mxu0 0.0
      %1266 = vmatprep.subr.mxu0 0.0
      %1267 = vmatpush1.msra.mxu0 0.0
      %1268 = vmatprep.subr.mxu0 0.0
      %1269 = vmatpush1.msra.mxu0 0.0
      %1270 = vmatprep.subr.mxu0 0.0
      %1271 = vmatpush1.msra.mxu0 0.0
      %1272 = vmatprep.subr.mxu0 0.0
      %1273 = vmatpush1.msra.mxu0 0.0
      %1274 = vmatprep.subr.mxu0 0.0
      %1275 = vmatpush1.msra.mxu0 0.0
      %1276 = vmatprep.subr.mxu0 0.0
      %1277 = vmatpush1.msra.mxu0 0.0
      %1278 = vmatprep.subr.mxu0 0.0
      %1279 = vmatpush1.msra.mxu0 0.0
      %1280 = vmatprep.subr.mxu0 0.0
      %1281 = vmatpush1.msra.mxu0 0.0
      %1282 = vmatprep.subr.mxu0 0.0
      %1283 = vmatpush1.msra.mxu0 0.0
      %1284 = vmatprep.subr.mxu0 0.0
      %1285 = vmatpush1.msra.mxu0 0.0
      %1286 = vmatprep.subr.mxu0 0.0
      %1287 = vmatpush1.msra.mxu0 0.0
      %1288 = vmatprep.subr.mxu0 0.0
      %1289 = vmatpush1.msra.mxu0 0.0
      %1290 = vmatprep.subr.mxu0 0.0
      %1291 = vmatpush1.msra.mxu0 0.0
      %1292 = vmatprep.subr.mxu0 0.0
      %1293 = vmatpush1.msra.mxu0 0.0
      %1294 = vmatprep.subr.mxu0 0.0
      %1295 = vmatpush1.msra.mxu0 0.0
      %1296 = vmatprep.subr.mxu0 0.0
      %1297 = vmatpush1.msra.mxu0 0.0
      %1298 = vmatprep.mubr.f32.mxu0 0.0
      %1299 = vmatmul.mubr.f32.gmra.mrb[0].mxu0 %v1230
      %v1300 = vpop.f32.mrb[0].mxu0
      %v1301 = vadd.f32 0.0, %v1300
      %v1302 = vpop.f32.mrb[0].mxu0
      %1303 = vmatprep.mubr.f32.mxu0 0.0
      %1304 = vmatmul.mubr.f32.gmra.mrb[0].mxu0 %v1232
      %v1305 = vpop.f32.mrb[0].mxu0
      %v1306 = vadd.f32 0.0, %v1305
      %v1307 = vpop.f32.mrb[0].mxu0
      %1308 = vdwg.mxu0
      %v1309 = vadd.f32 %v1220, %v1301
      %v1310 = vadd.f32 %v1221, %v1306
      %v1311 = vadd.f32 %v1309, %v1310
      %v1312 = vrot.slane %v1311, 4
      %v1313 = vadd.f32 %v1311, %v1312
      %v1314 = vrot.slane %v1313, 2
      %v1315 = vadd.f32 %v1313, %v1314
      %v1316 = vrot.slane %v1315, 1
      %v1317 = vadd.f32 %v1315, %v1316
      %v1318 = vmul.f32 %v1309, %v1309
      %v1319 = vmul.f32 %v1310, %v1310
      %v1320 = vadd.f32 %v1318, %v1319
      %v1321 = vrot.slane %v1320, 4
      %v1322 = vadd.f32 %v1320, %v1321
      %v1323 = vrot.slane %v1322, 2
      %v1324 = vadd.f32 %v1322, %v1323
      %v1325 = vrot.slane %v1324, 1
      %v1326 = vadd.f32 %v1324, %v1325
      %v1327 = vsel %vm213, %v1317, %v1326
      %v1328 = vld [vmem:[%s2] sm:$0xff]
      %v1329 = vld [vmem:[%s2 + $0x8] sm:$0xff]
      %v1330 = vld [vmem:[%s2 + $0x10] sm:$0xff]
      %v1331 = vld [vmem:[%s2 + $0x18] sm:$0xff]
      %v1332 = vld [vmem:[%s2 + $0x20] sm:$0xff]
      %v1333 = vld [vmem:[%s2 + $0x28] sm:$0xff]
      %v1334 = vld [vmem:[%s2 + $0x30] sm:$0xff]
      %v1335 = vld [vmem:[%s2 + $0x38] sm:$0xff]
      %v1336 = vld [vmem:[%s2 + $0x40] sm:$0xff]
      %v1337 = vld [vmem:[%s2 + $0x48] sm:$0xff]
      %v1338 = vld [vmem:[%s2 + $0x50] sm:$0xff]
      %v1339 = vld [vmem:[%s2 + $0x58] sm:$0xff]
      %v1340 = vld [vmem:[%s2 + $0x60] sm:$0xff]
      %v1341 = vld [vmem:[%s2 + $0x68] sm:$0xff]
      %v1342 = vld [vmem:[%s2 + $0x70] sm:$0xff]
      %v1343 = vld [vmem:[%s2 + $0x78] sm:$0xff]
      %1344 = vmatprep.subr.mxu0 0.0
      %1345 = vmatpush1.msra.mxu0 %v1328
      %1346 = vmatprep.subr.mxu0 0.0
      %1347 = vmatpush1.msra.mxu0 %v1329
      %1348 = vmatprep.subr.mxu0 0.0
      %1349 = vmatpush1.msra.mxu0 %v1330
      %1350 = vmatprep.subr.mxu0 0.0
      %1351 = vmatpush1.msra.mxu0 %v1331
      %1352 = vmatprep.subr.mxu0 0.0
      %1353 = vmatpush1.msra.mxu0 %v1332
      %1354 = vmatprep.subr.mxu0 0.0
      %1355 = vmatpush1.msra.mxu0 %v1333
      %1356 = vmatprep.subr.mxu0 0.0
      %1357 = vmatpush1.msra.mxu0 %v1334
      %1358 = vmatprep.subr.mxu0 0.0
      %1359 = vmatpush1.msra.mxu0 %v1335
      %1360 = vmatprep.subr.mxu0 0.0
      %1361 = vmatpush1.msra.mxu0 %v1336
      %1362 = vmatprep.subr.mxu0 0.0
      %1363 = vmatpush1.msra.mxu0 %v1337
      %1364 = vmatprep.subr.mxu0 0.0
      %1365 = vmatpush1.msra.mxu0 %v1338
      %1366 = vmatprep.subr.mxu0 0.0
      %1367 = vmatpush1.msra.mxu0 %v1339
      %1368 = vmatprep.subr.mxu0 0.0
      %1369 = vmatpush1.msra.mxu0 %v1340
      %1370 = vmatprep.subr.mxu0 0.0
      %1371 = vmatpush1.msra.mxu0 %v1341
      %1372 = vmatprep.subr.mxu0 0.0
      %1373 = vmatpush1.msra.mxu0 %v1342
      %1374 = vmatprep.subr.mxu0 0.0
      %1375 = vmatpush1.msra.mxu0 %v1343
      %1376 = vmatprep.subr.mxu0 0.0
      %1377 = vmatpush1.msra.mxu0 0.0
      %1378 = vmatprep.subr.mxu0 0.0
      %1379 = vmatpush1.msra.mxu0 0.0
      %1380 = vmatprep.subr.mxu0 0.0
      %1381 = vmatpush1.msra.mxu0 0.0
      %1382 = vmatprep.subr.mxu0 0.0
      %1383 = vmatpush1.msra.mxu0 0.0
      %1384 = vmatprep.subr.mxu0 0.0
      %1385 = vmatpush1.msra.mxu0 0.0
      %1386 = vmatprep.subr.mxu0 0.0
      %1387 = vmatpush1.msra.mxu0 0.0
      %1388 = vmatprep.subr.mxu0 0.0
      %1389 = vmatpush1.msra.mxu0 0.0
      %1390 = vmatprep.subr.mxu0 0.0
      %1391 = vmatpush1.msra.mxu0 0.0
      %1392 = vmatprep.subr.mxu0 0.0
      %1393 = vmatpush1.msra.mxu0 0.0
      %1394 = vmatprep.subr.mxu0 0.0
      %1395 = vmatpush1.msra.mxu0 0.0
      %1396 = vmatprep.subr.mxu0 0.0
      %1397 = vmatpush1.msra.mxu0 0.0
      %1398 = vmatprep.subr.mxu0 0.0
      %1399 = vmatpush1.msra.mxu0 0.0
      %1400 = vmatprep.subr.mxu0 0.0
      %1401 = vmatpush1.msra.mxu0 0.0
      %1402 = vmatprep.subr.mxu0 0.0
      %1403 = vmatpush1.msra.mxu0 0.0
      %1404 = vmatprep.subr.mxu0 0.0
      %1405 = vmatpush1.msra.mxu0 0.0
      %1406 = vmatprep.subr.mxu0 0.0
      %1407 = vmatpush1.msra.mxu0 0.0
      %1408 = vmatprep.mubr.f32.mxu0 0.0
      %1409 = vmatmul.mubr.f32.gmra.mrb[0].mxu0 %v1327
      %v1410 = vpop.f32.mrb[0].mxu0
      %v1411 = vadd.f32 0.0, %v1410
      %v1412 = vpop.f32.mrb[0].mxu0
      %1413 = vdwg.mxu0
      %vm1414 = vcmask 58368
      %1415 = vst.msk [vmem:[%s208] sm:$0x3] %vm1414, %v1411
      %1416 = vst [vmem:[%s204] sm:$0xff] %v1309
      %1417 = vst [vmem:[%s204 + $0x8] sm:$0xff] %v1310
      %p1418 = scmp.lt.s32.totalorder %s16, 1
      %s1419 = scalar_select %p1418, %s16, 1
      %s1420 = smul.addr %s1419, 2
      %s1421 = smul.addr %s1420, 8
      %s1422 = scalar_lea.vmem %s3, %s1421
      %p1423 = scmp.lt.s32.totalorder %s16, 1
      %s1424 = scalar_select %p1423, %s16, 1
      %s1425 = smul.addr %s1424, 2
      %s1426 = scalar_lea.vmem %s4, %s1425
      // Predicated region
      $region33: #{double_conv.3} parent=31 // pred_check
        %p1427 = pneg %p102
      $region34: #{double_conv.3} parent=31 // pred_check_branch
        %1429 = sbr.rel (%p1427) target = $region36
      $region35: #{double_conv.3} parent=31 // pred_region
        _
      $region36: #{double_conv.3} parent=31 // pred_fallthru
        _
      // Predicated region
      $region37: #{double_conv.3} parent=31 // pred_check
        %p1430 = pneg %p128
      $region38: #{double_conv.3} parent=31 // pred_check_branch
        %1432 = sbr.rel (%p1430) target = $region40
      $region39: #{double_conv.3} parent=31 // pred_region
        _
      $region40: #{double_conv.3} parent=31 // pred_fallthru
        _
    $region32: #{double_conv.3} parent=5 // pred_fallthru
      _
    %p1433 = scmp.le.s32.totalorder 2, %s11
    // Predicated region
    $region41: #{double_conv.3} parent=5 // pred_check
      %p1434 = pneg %p1433
    $region42: #{double_conv.3} parent=5 // pred_check_branch
      %1436 = sbr.rel (%p1434) target = $region44
    $region43: #{double_conv.3} parent=5 // pred_region
      %s1437 = ssub.s32 %s11, 2
      // Predicated region
      $region45: #{double_conv.3} parent=43 // pred_check
        %p1438 = pneg %p108
      $region46: #{double_conv.3} parent=43 // pred_check_branch
        %1440 = sbr.rel (%p1438) target = $region48
      $region47: #{double_conv.3} parent=43 // pred_region
        %p1441 = scmp.lt.s32.totalorder %s17, 1
        %s1442 = scalar_select %p1441, %s17, 1
        %s1443 = smul.addr %s1442, 2
        %s1444 = smul.addr %s1443, 8
        %s1445 = scalar_lea.vmem %s3, %s1444
      $region48: #{double_conv.3} parent=43 // pred_fallthru
        _
      // Predicated region
      $region49: #{double_conv.3} parent=43 // pred_check
        %p1446 = pneg %p134
      $region50: #{double_conv.3} parent=43 // pred_check_branch
        %1448 = sbr.rel (%p1446) target = $region52
      $region51: #{double_conv.3} parent=43 // pred_region
        %p1449 = scmp.lt.s32.totalorder %s17, 1
        %s1450 = scalar_select %p1449, %s17, 1
        %s1451 = smul.addr %s1450, 2
        %s1452 = scalar_lea.vmem %s4, %s1451
      $region52: #{double_conv.3} parent=43 // pred_fallthru
        _
    $region44: #{double_conv.3} parent=5 // pred_fallthru
      _
  $region6: #{double_conv.3} parent=0 // loop_footer
    %s15 = sadd.s32 1, %s11
  $region7: #{double_conv.3} parent=0 // loop_footer_branch
    %10 = sbr.rel target = $region3
  $region8: #{double_conv.3} parent=0 // loop_exit
    _

// kernel: double_conv.5
$region0: #{double_conv.5}
  #allocation0 [shape = 'u32[]', space=smem, size = 0x4, offset = 0x4, fixed_abs, tag = 'smem constant byte address 0x4 - core index']
  #allocation1 [shape = 'u32[144,128]{1,0:T(1,128)}', space=vmem, size = 0x12000, scoped, tag = 'internal scratch']
  %s0 = inlined_call_operand.vmem [shape: f32[2,16,128], index: 0, kind: input, shape index: {}]
  %s1 = inlined_call_operand.vmem [shape: f32[2,128], index: 1, kind: input, shape index: {}]
  %s2 = inlined_call_operand.vmem [shape: f32[8,128,16], index: 2, kind: input, shape index: {}]
  %s3 = inlined_call_operand.hbm [shape: f32[2,8,16,16], index: 3, kind: output, shape index: {}]
  %s4 = sld [smem:[#allocation0]]
  $region45: #{double_conv.5} parent=0
    _
  %s6 = ssub.s32 1, %s4
  %s7 = scalar_select 0, %s6, %s4
  $region1: #{double_conv.5} parent=0
    #allocation2 [shape = 'u8[131072]{0}', space=vmem, size = 0x20000, scoped, tag = 'output window, operand 0']
    #allocation3 [shape = 's32[2]{0}', space=sflag, size = 0x8, scoped, tag = 'scoped memory for double_conv.5']
    %8 = vsyncpa [#allocation3], 0
    %s9 = scalar_lea.sflag [#allocation3], 1
    %10 = vsyncpa %s9, 0
    loop: start=0, step=1, limit=4
    $region2: #{double_conv.5} parent=1 // loop_pre_header
      _
    $region3: #{double_conv.5} parent=1 // loop_header
      %s12 = sphi 0, %s16
      %p13 = scmp.ge.s32.totalorder %s12, 4
      %s22 = sphi 0, %s24
      %s25 = sphi 0, %s22
      %s26 = sphi 0, %s25
      %s42 = sphi 0, %s26
      %s46 = sphi 0, %s46
      %s48 = sphi 0, %s46
      %s49 = sphi 0, %s48
      %s63 = sphi 0, %s49
      %s67 = sphi 0, %s67
      %s69 = sphi 0, %s67
      %s70 = sphi 0, %s69
      %s84 = sphi 0, %s70
      %s90 = sphi 0, %s92
      %s93 = sphi 0, %s90
      %s94 = sphi 0, %s93
      %s110 = sphi 0, %s94
    $region4: #{double_conv.5} parent=1 // loop_header_branch
      %15 = sbr.rel (%p13) target = $region8
    $region5: #{double_conv.5} parent=1 // loop_body
      %s17 = ssub.s32 %s12, 1
      %s18 = ssub.s32 %s12, 2
      %s19 = sadd.s32 %s12, 1
      %s20 = ssub.s32 %s12, %s19
      %p21 = scmp.eq.s32.totalorder %s20, 0
      %s23 = sadd.s32 %s22, 1
      %s24 = scalar_select %p21, %s22, %s23
      %p27 = pneg %p21
      %p28 = scmp.eq.s32.totalorder %s12, 1
      %p29 = por %p27, %p28
      %p30 = scmp.ne.s32.totalorder %s22, %s25
      %p31 = scmp.eq.s32.totalorder %s12, 0
      %p32 = por %p30, %p31
      %p33 = scmp.ne.s32.totalorder %s22, %s25
      %p34 = scmp.eq.s32.totalorder %s17, 1
      %p35 = por %p33, %p34
      %p36 = scmp.ne.s32.totalorder %s25, %s26
      %p37 = scmp.eq.s32.totalorder %s17, 0
      %p38 = por %p36, %p37
      %p39 = scmp.ne.s32.totalorder %s25, %s26
      %p40 = scmp.eq.s32.totalorder %s18, 1
      %p41 = por %p39, %p40
      %p43 = scmp.ne.s32.totalorder %s26, %s42
      %p44 = scmp.eq.s32.totalorder %s18, 0
      %p45 = por %p43, %p44
      %s47 = sadd.s32 %s46, 1
      %p50 = scmp.eq.s32.totalorder %s12, 1
      %p51 = scmp.ne.s32.totalorder %s46, %s48
      %p52 = scmp.eq.s32.totalorder %s12, 0
      %p53 = por %p51, %p52
      %p54 = scmp.ne.s32.totalorder %s46, %s48
      %p55 = scmp.eq.s32.totalorder %s17, 1
      %p56 = por %p54, %p55
      %p57 = scmp.ne.s32.totalorder %s48, %s49
      %p58 = scmp.eq.s32.totalorder %s17, 0
      %p59 = por %p57, %p58
      %p60 = scmp.ne.s32.totalorder %s48, %s49
      %p61 = scmp.eq.s32.totalorder %s18, 1
      %p62 = por %p60, %p61
      %p64 = scmp.ne.s32.totalorder %s49, %s63
      %p65 = scmp.eq.s32.totalorder %s18, 0
      %p66 = por %p64, %p65
      %s68 = sadd.s32 %s67, 1
      %p71 = scmp.eq.s32.totalorder %s12, 1
      %p72 = scmp.ne.s32.totalorder %s67, %s69
      %p73 = scmp.eq.s32.totalorder %s12, 0
      %p74 = por %p72, %p73
      %p75 = scmp.ne.s32.totalorder %s67, %s69
      %p76 = scmp.eq.s32.totalorder %s17, 1
      %p77 = por %p75, %p76
      %p78 = scmp.ne.s32.totalorder %s69, %s70
      %p79 = scmp.eq.s32.totalorder %s17, 0
      %p80 = por %p78, %p79
      %p81 = scmp.ne.s32.totalorder %s69, %s70
      %p82 = scmp.eq.s32.totalorder %s18, 1
      %p83 = por %p81, %p82
      %p85 = scmp.ne.s32.totalorder %s70, %s84
      %p86 = scmp.eq.s32.totalorder %s18, 0
      %p87 = por %p85, %p86
      %s88 = ssub.s32 %s12, %s19
      %p89 = scmp.eq.s32.totalorder %s88, 0
      %s91 = sadd.s32 %s90, 1
      %s92 = scalar_select %p89, %s90, %s91
      %p95 = pneg %p89
      %p96 = scmp.eq.s32.totalorder %s12, 1
      %p97 = por %p95, %p96
      %p98 = scmp.ne.s32.totalorder %s90, %s93
      %p99 = scmp.eq.s32.totalorder %s12, 0
      %p100 = por %p98, %p99
      %p101 = scmp.ne.s32.totalorder %s90, %s93
      %p102 = scmp.eq.s32.totalorder %s17, 1
      %p103 = por %p101, %p102
      %p104 = scmp.ne.s32.totalorder %s93, %s94
      %p105 = scmp.eq.s32.totalorder %s17, 0
      %p106 = por %p104, %p105
      %p107 = scmp.ne.s32.totalorder %s93, %s94
      %p108 = scmp.eq.s32.totalorder %s18, 1
      %p109 = por %p107, %p108
      %p111 = scmp.ne.s32.totalorder %s94, %s110
      %p112 = scmp.eq.s32.totalorder %s18, 0
      %p113 = por %p111, %p112
      %p114 = scmp.le.s32.totalorder 1, %s12
      %p115 = scmp.lt.s32.totalorder %s12, 3
      %p116 = pnand %p114, %p115
      %p117 = pneg %p116
      // Predicated region
      $region9: #{double_conv.5} parent=5 // pred_check
        _
      $region10: #{double_conv.5} parent=5 // pred_check_branch
        %119 = sbr.rel (%p116) target = $region12
      $region11: #{double_conv.5} parent=5 // pred_region
        %s120 = ssub.s32 %s12, 1
        // Predicated region
        $region13: #{double_conv.5} parent=11 // pred_check
          %p121 = pneg %p59
        $region14: #{double_conv.5} parent=11 // pred_check_branch
          %123 = sbr.rel (%p121) target = $region16
        $region15: #{double_conv.5} parent=11 // pred_region
          _
        $region16: #{double_conv.5} parent=11 // pred_fallthru
          _
        // Predicated region
        $region17: #{double_conv.5} parent=11 // pred_check
          %p124 = pneg %p80
        $region18: #{double_conv.5} parent=11 // pred_check_branch
          %126 = sbr.rel (%p124) target = $region20
        $region19: #{double_conv.5} parent=11 // pred_region
          _
        $region20: #{double_conv.5} parent=11 // pred_fallthru
          _
      $region12: #{double_conv.5} parent=5 // pred_fallthru
        _
      %p127 = scmp.lt.s32.totalorder %s12, 2
      // Predicated region
      $region21: #{double_conv.5} parent=5 // pred_check
        %p128 = pneg %p127
      $region22: #{double_conv.5} parent=5 // pred_check_branch
        %130 = sbr.rel (%p128) target = $region24
      $region23: #{double_conv.5} parent=5 // pred_region
        // Predicated region
        $region25: #{double_conv.5} parent=23 // pred_check
          %p131 = pneg %p32
        $region26: #{double_conv.5} parent=23 // pred_check_branch
          %133 = sbr.rel (%p131) target = $region28
        $region27: #{double_conv.5} parent=23 // pred_region
          %p134 = scmp.lt.s32.totalorder %s12, 1
          %s135 = scalar_select %p134, %s12, 1
          %s136 = smul.addr %s135, 2
          %s137 = smul.addr %s136, 8
          %s138 = scalar_lea.vmem %s0, %s137
        $region28: #{double_conv.5} parent=23 // pred_fallthru
          _
      $region24: #{double_conv.5} parent=5 // pred_fallthru
        _
      %p139 = scmp.le.s32.totalorder 1, %s12
      %p140 = scmp.lt.s32.totalorder %s12, 3
      %p141 = pnand %p139, %p140
      %p142 = pneg %p141
      // Predicated region
      $region29: #{double_conv.5} parent=5 // pred_check
        _
      $region30: #{double_conv.5} parent=5 // pred_check_branch
        %144 = sbr.rel (%p141) target = $region32
      $region31: #{double_conv.5} parent=5 // pred_region
        %s145 = ssub.s32 %s12, 1
        %p146 = scmp.lt.s32.totalorder %s17, 1
        %s147 = scalar_select %p146, %s17, 1
        %s148 = smul.addr %s147, 2
        %s149 = smul.addr %s148, 8
        %s150 = scalar_lea.vmem %s0, %s149
        %p151 = pneg %p38
        %p152 = pneg %p35
        %p153 = pneg %p59
        %p154 = pneg %p56
        %p155 = pneg %p80
        %p156 = pneg %p77
        %p157 = pneg %p106
        %p158 = pneg %p103
        %s159 = sand.u32 %s93, 1
        %s160 = scalar_lea.sflag [#allocation3], %s159
        %s161 = sand.u32 %s93, 1
        %s162 = smul.addr %s161, 128
        %s163 = scalar_lea.vmem [#allocation2], %s162
        %p164 = scmp.lt.s32.totalorder %s17, 1
        %s165 = scalar_select %p164, %s17, 1
        %s166 = smul.addr %s165, 2
        %s167 = smul.addr %s166, 8
        %s168 = scalar_lea.vmem %s0, %s167
        %v169 = vld [vmem:[%s168] sm:$0xff]
        %v170 = vld [vmem:[%s168 + $0x8] sm:$0xff]
        %v171 = vld [vmem:[%s1] sm:$0x1]
        %v172 = vlaneseq
        %v173 = vshrl.u32 %v172, 7
        %v174 = vsub.s32 0, %v173
        %v175 = vrot.slane %v171, %v174
        %v176 = vmul.f32 %v169, %v175
        %v177 = vmul.f32 %v170, %v175
        %v178 = vld [vmem:[%s1 + $0x1] sm:$0x1]
        %v179 = vlaneseq
        %v180 = vshrl.u32 %v179, 7
        %v181 = vsub.s32 0, %v180
        %v182 = vrot.slane %v178, %v181
        %v183 = vadd.f32 %v176, %v182
        %v184 = vadd.f32 %v177, %v182
        %v185 = vmax.f32 %v183, 0.0
        %v186 = vmax.f32 %v184, 0.0
        %v187 = vld [vmem:[%s2] sm:$0xff]
        %v188 = vld [vmem:[%s2 + $0x8] sm:$0xff]
        %v189 = vld [vmem:[%s2 + $0x10] sm:$0xff]
        %v190 = vld [vmem:[%s2 + $0x18] sm:$0xff]
        %v191 = vld [vmem:[%s2 + $0x20] sm:$0xff]
        %v192 = vld [vmem:[%s2 + $0x28] sm:$0xff]
        %v193 = vld [vmem:[%s2 + $0x30] sm:$0xff]
        %v194 = vld [vmem:[%s2 + $0x38] sm:$0xff]
        %v195 = vld [vmem:[%s2 + $0x40] sm:$0xff]
        %v196 = vld [vmem:[%s2 + $0x48] sm:$0xff]
        %v197 = vld [vmem:[%s2 + $0x50] sm:$0xff]
        %v198 = vld [vmem:[%s2 + $0x58] sm:$0xff]
        %v199 = vld [vmem:[%s2 + $0x60] sm:$0xff]
        %v200 = vld [vmem:[%s2 + $0x68] sm:$0xff]
        %v201 = vld [vmem:[%s2 + $0x70] sm:$0xff]
        %v202 = vld [vmem:[%s2 + $0x78] sm:$0xff]
        %203 = vmatprep.subr.mxu0 0.0
        %204 = vmatpush1.msra.mxu0 %v187
        %205 = vmatprep.subr.mxu0 0.0
        %206 = vmatpush1.msra.mxu0 %v188
        %207 = vmatprep.subr.mxu0 0.0
        %208 = vmatpush1.msra.mxu0 %v189
        %209 = vmatprep.subr.mxu0 0.0
        %210 = vmatpush1.msra.mxu0 %v190
        %211 = vmatprep.subr.mxu0 0.0
        %212 = vmatpush1.msra.mxu0 %v191
        %213 = vmatprep.subr.mxu0 0.0
        %214 = vmatpush1.msra.mxu0 %v192
        %215 = vmatprep.subr.mxu0 0.0
        %216 = vmatpush1.msra.mxu0 %v193
        %217 = vmatprep.subr.mxu0 0.0
        %218 = vmatpush1.msra.mxu0 %v194
        %219 = vmatprep.subr.mxu0 0.0
        %220 = vmatpush1.msra.mxu0 %v195
        %221 = vmatprep.subr.mxu0 0.0
        %222 = vmatpush1.msra.mxu0 %v196
        %223 = vmatprep.subr.mxu0 0.0
        %224 = vmatpush1.msra.mxu0 %v197
        %225 = vmatprep.subr.mxu0 0.0
        %226 = vmatpush1.msra.mxu0 %v198
        %227 = vmatprep.subr.mxu0 0.0
        %228 = vmatpush1.msra.mxu0 %v199
        %229 = vmatprep.subr.mxu0 0.0
        %230 = vmatpush1.msra.mxu0 %v200
        %231 = vmatprep.subr.mxu0 0.0
        %232 = vmatpush1.msra.mxu0 %v201
        %233 = vmatprep.subr.mxu0 0.0
        %234 = vmatpush1.msra.mxu0 %v202
        %235 = vmatprep.subr.mxu0 0.0
        %236 = vmatpush1.msra.mxu0 0.0
        %237 = vmatprep.subr.mxu0 0.0
        %238 = vmatpush1.msra.mxu0 0.0
        %239 = vmatprep.subr.mxu0 0.0
        %240 = vmatpush1.msra.mxu0 0.0
        %241 = vmatprep.subr.mxu0 0.0
        %242 = vmatpush1.msra.mxu0 0.0
        %243 = vmatprep.subr.mxu0 0.0
        %244 = vmatpush1.msra.mxu0 0.0
        %245 = vmatprep.subr.mxu0 0.0
        %246 = vmatpush1.msra.mxu0 0.0
        %247 = vmatprep.subr.mxu0 0.0
        %248 = vmatpush1.msra.mxu0 0.0
        %249 = vmatprep.subr.mxu0 0.0
        %250 = vmatpush1.msra.mxu0 0.0
        %251 = vmatprep.subr.mxu0 0.0
        %252 = vmatpush1.msra.mxu0 0.0
        %253 = vmatprep.subr.mxu0 0.0
        %254 = vmatpush1.msra.mxu0 0.0
        %255 = vmatprep.subr.mxu0 0.0
        %256 = vmatpush1.msra.mxu0 0.0
        %257 = vmatprep.subr.mxu0 0.0
        %258 = vmatpush1.msra.mxu0 0.0
        %259 = vmatprep.subr.mxu0 0.0
        %260 = vmatpush1.msra.mxu0 0.0
        %261 = vmatprep.subr.mxu0 0.0
        %262 = vmatpush1.msra.mxu0 0.0
        %263 = vmatprep.subr.mxu0 0.0
        %264 = vmatpush1.msra.mxu0 0.0
        %265 = vmatprep.subr.mxu0 0.0
        %266 = vmatpush1.msra.mxu0 0.0
        %267 = vmatprep.mubr.f32.mxu0 0.0
        %268 = vmatmul.mubr.f32.gmra.mrb[0].mxu0 %v185
        %v269 = vpop.f32.mrb[0].mxu0
        %v270 = vadd.f32 0.0, %v269
        %v271 = vpop.f32.mrb[0].mxu0
        %272 = vmatprep.mubr.f32.mxu0 0.0
        %273 = vmatmul.mubr.f32.gmra.mrb[0].mxu0 %v186
        %v274 = vpop.f32.mrb[0].mxu0
        %v275 = vadd.f32 0.0, %v274
        %v276 = vpop.f32.mrb[0].mxu0
        %277 = vdwg.mxu0
        %vm278 = vcmask 130048
        %279 = vst.msk [vmem:[%s163] sm:$0xff] %vm278, %v270
        %280 = vst.msk [vmem:[%s163 + $0x8] sm:$0xff] %vm278, %v275
        %s281 = scalar_lea.vmem %s2, 128
        %v282 = vld [vmem:[%s281] sm:$0xff]
        %v283 = vld [vmem:[%s281 + $0x8] sm:$0xff]
        %v284 = vld [vmem:[%s281 + $0x10] sm:$0xff]
        %v285 = vld [vmem:[%s281 + $0x18] sm:$0xff]
        %v286 = vld [vmem:[%s281 + $0x20] sm:$0xff]
        %v287 = vld [vmem:[%s281 + $0x28] sm:$0xff]
        %v288 = vld [vmem:[%s281 + $0x30] sm:$0xff]
        %v289 = vld [vmem:[%s281 + $0x38] sm:$0xff]
        %v290 = vld [vmem:[%s281 + $0x40] sm:$0xff]
        %v291 = vld [vmem:[%s281 + $0x48] sm:$0xff]
        %v292 = vld [vmem:[%s281 + $0x50] sm:$0xff]
        %v293 = vld [vmem:[%s281 + $0x58] sm:$0xff]
        %v294 = vld [vmem:[%s281 + $0x60] sm:$0xff]
        %v295 = vld [vmem:[%s281 + $0x68] sm:$0xff]
        %v296 = vld [vmem:[%s281 + $0x70] sm:$0xff]
        %v297 = vld [vmem:[%s281 + $0x78] sm:$0xff]
        %298 = vmatprep.subr.mxu0 0.0
        %299 = vmatpush1.msra.mxu0 %v282
        %300 = vmatprep.subr.mxu0 0.0
        %301 = vmatpush1.msra.mxu0 %v283
        %302 = vmatprep.subr.mxu0 0.0
        %303 = vmatpush1.msra.mxu0 %v284
        %304 = vmatprep.subr.mxu0 0.0
        %305 = vmatpush1.msra.mxu0 %v285
        %306 = vmatprep.subr.mxu0 0.0
        %307 = vmatpush1.msra.mxu0 %v286
        %308 = vmatprep.subr.mxu0 0.0
        %309 = vmatpush1.msra.mxu0 %v287
        %310 = vmatprep.subr.mxu0 0.0
        %311 = vmatpush1.msra.mxu0 %v288
        %312 = vmatprep.subr.mxu0 0.0
        %313 = vmatpush1.msra.mxu0 %v289
        %314 = vmatprep.subr.mxu0 0.0
        %315 = vmatpush1.msra.mxu0 %v290
        %316 = vmatprep.subr.mxu0 0.0
        %317 = vmatpush1.msra.mxu0 %v291
        %318 = vmatprep.subr.mxu0 0.0
        %319 = vmatpush1.msra.mxu0 %v292
        %320 = vmatprep.subr.mxu0 0.0
        %321 = vmatpush1.msra.mxu0 %v293
        %322 = vmatprep.subr.mxu0 0.0
        %323 = vmatpush1.msra.mxu0 %v294
        %324 = vmatprep.subr.mxu0 0.0
        %325 = vmatpush1.msra.mxu0 %v295
        %326 = vmatprep.subr.mxu0 0.0
        %327 = vmatpush1.msra.mxu0 %v296
        %328 = vmatprep.subr.mxu0 0.0
        %329 = vmatpush1.msra.mxu0 %v297
        %330 = vmatprep.subr.mxu0 0.0
        %331 = vmatpush1.msra.mxu0 0.0
        %332 = vmatprep.subr.mxu0 0.0
        %333 = vmatpush1.msra.mxu0 0.0
        %334 = vmatprep.subr.mxu0 0.0
        %335 = vmatpush1.msra.mxu0 0.0
        %336 = vmatprep.subr.mxu0 0.0
        %337 = vmatpush1.msra.mxu0 0.0
        %338 = vmatprep.subr.mxu0 0.0
        %339 = vmatpush1.msra.mxu0 0.0
        %340 = vmatprep.subr.mxu0 0.0
        %341 = vmatpush1.msra.mxu0 0.0
        %342 = vmatprep.subr.mxu0 0.0
        %343 = vmatpush1.msra.mxu0 0.0
        %344 = vmatprep.subr.mxu0 0.0
        %345 = vmatpush1.msra.mxu0 0.0
        %346 = vmatprep.subr.mxu0 0.0
        %347 = vmatpush1.msra.mxu0 0.0
        %348 = vmatprep.subr.mxu0 0.0
        %349 = vmatpush1.msra.mxu0 0.0
        %350 = vmatprep.subr.mxu0 0.0
        %351 = vmatpush1.msra.mxu0 0.0
        %352 = vmatprep.subr.mxu0 0.0
        %353 = vmatpush1.msra.mxu0 0.0
        %354 = vmatprep.subr.mxu0 0.0
        %355 = vmatpush1.msra.mxu0 0.0
        %356 = vmatprep.subr.mxu0 0.0
        %357 = vmatpush1.msra.mxu0 0.0
        %358 = vmatprep.subr.mxu0 0.0
        %359 = vmatpush1.msra.mxu0 0.0
        %360 = vmatprep.subr.mxu0 0.0
        %361 = vmatpush1.msra.mxu0 0.0
        %362 = vmatprep.mubr.f32.mxu0 0.0
        %363 = vmatmul.mubr.f32.gmra.mrb[0].mxu0 %v185
        %v364 = vpop.f32.mrb[0].mxu0
        %v365 = vadd.f32 0.0, %v364
        %v366 = vpop.f32.mrb[0].mxu0
        %367 = vmatprep.mubr.f32.mxu0 0.0
        %368 = vmatmul.mubr.f32.gmra.mrb[0].mxu0 %v186
        %v369 = vpop.f32.mrb[0].mxu0
        %v370 = vadd.f32 0.0, %v369
        %v371 = vpop.f32.mrb[0].mxu0
        %372 = vdwg.mxu0
        %s373 = scalar_lea.vmem %s163, 16 [#allocation2]
        %374 = vst.msk [vmem:[%s373] sm:$0xff] %vm278, %v365
        %375 = vst.msk [vmem:[%s373 + $0x8] sm:$0xff] %vm278, %v370
        %s376 = scalar_lea.vmem %s2, 256
        %v377 = vld [vmem:[%s376] sm:$0xff]
        %v378 = vld [vmem:[%s376 + $0x8] sm:$0xff]
        %v379 = vld [vmem:[%s376 + $0x10] sm:$0xff]
        %v380 = vld [vmem:[%s376 + $0x18] sm:$0xff]
        %v381 = vld [vmem:[%s376 + $0x20] sm:$0xff]
        %v382 = vld [vmem:[%s376 + $0x28] sm:$0xff]
        %v383 = vld [vmem:[%s376 + $0x30] sm:$0xff]
        %v384 = vld [vmem:[%s376 + $0x38] sm:$0xff]
        %v385 = vld [vmem:[%s376 + $0x40] sm:$0xff]
        %v386 = vld [vmem:[%s376 + $0x48] sm:$0xff]
        %v387 = vld [vmem:[%s376 + $0x50] sm:$0xff]
        %v388 = vld [vmem:[%s376 + $0x58] sm:$0xff]
        %v389 = vld [vmem:[%s376 + $0x60] sm:$0xff]
        %v390 = vld [vmem:[%s376 + $0x68] sm:$0xff]
        %v391 = vld [vmem:[%s376 + $0x70] sm:$0xff]
        %v392 = vld [vmem:[%s376 + $0x78] sm:$0xff]
        %393 = vmatprep.subr.mxu0 0.0
        %394 = vmatpush1.msra.mxu0 %v377
        %395 = vmatprep.subr.mxu0 0.0
        %396 = vmatpush1.msra.mxu0 %v378
        %397 = vmatprep.subr.mxu0 0.0
        %398 = vmatpush1.msra.mxu0 %v379
        %399 = vmatprep.subr.mxu0 0.0
        %400 = vmatpush1.msra.mxu0 %v380
        %401 = vmatprep.subr.mxu0 0.0
        %402 = vmatpush1.msra.mxu0 %v381
        %403 = vmatprep.subr.mxu0 0.0
        %404 = vmatpush1.msra.mxu0 %v382
        %405 = vmatprep.subr.mxu0 0.0
        %406 = vmatpush1.msra.mxu0 %v383
        %407 = vmatprep.subr.mxu0 0.0
        %408 = vmatpush1.msra.mxu0 %v384
        %409 = vmatprep.subr.mxu0 0.0
        %410 = vmatpush1.msra.mxu0 %v385
        %411 = vmatprep.subr.mxu0 0.0
        %412 = vmatpush1.msra.mxu0 %v386
        %413 = vmatprep.subr.mxu0 0.0
        %414 = vmatpush1.msra.mxu0 %v387
        %415 = vmatprep.subr.mxu0 0.0
        %416 = vmatpush1.msra.mxu0 %v388
        %417 = vmatprep.subr.mxu0 0.0
        %418 = vmatpush1.msra.mxu0 %v389
        %419 = vmatprep.subr.mxu0 0.0
        %420 = vmatpush1.msra.mxu0 %v390
        %421 = vmatprep.subr.mxu0 0.0
        %422 = vmatpush1.msra.mxu0 %v391
        %423 = vmatprep.subr.mxu0 0.0
        %424 = vmatpush1.msra.mxu0 %v392
        %425 = vmatprep.subr.mxu0 0.0
        %426 = vmatpush1.msra.mxu0 0.0
        %427 = vmatprep.subr.mxu0 0.0
        %428 = vmatpush1.msra.mxu0 0.0
        %429 = vmatprep.subr.mxu0 0.0
        %430 = vmatpush1.msra.mxu0 0.0
        %431 = vmatprep.subr.mxu0 0.0
        %432 = vmatpush1.msra.mxu0 0.0
        %433 = vmatprep.subr.mxu0 0.0
        %434 = vmatpush1.msra.mxu0 0.0
        %435 = vmatprep.subr.mxu0 0.0
        %436 = vmatpush1.msra.mxu0 0.0
        %437 = vmatprep.subr.mxu0 0.0
        %438 = vmatpush1.msra.mxu0 0.0
        %439 = vmatprep.subr.mxu0 0.0
        %440 = vmatpush1.msra.mxu0 0.0
        %441 = vmatprep.subr.mxu0 0.0
        %442 = vmatpush1.msra.mxu0 0.0
        %443 = vmatprep.subr.mxu0 0.0
        %444 = vmatpush1.msra.mxu0 0.0
        %445 = vmatprep.subr.mxu0 0.0
        %446 = vmatpush1.msra.mxu0 0.0
        %447 = vmatprep.subr.mxu0 0.0
        %448 = vmatpush1.msra.mxu0 0.0
        %449 = vmatprep.subr.mxu0 0.0
        %450 = vmatpush1.msra.mxu0 0.0
        %451 = vmatprep.subr.mxu0 0.0
        %452 = vmatpush1.msra.mxu0 0.0
        %453 = vmatprep.subr.mxu0 0.0
        %454 = vmatpush1.msra.mxu0 0.0
        %455 = vmatprep.subr.mxu0 0.0
        %456 = vmatpush1.msra.mxu0 0.0
        %457 = vmatprep.mubr.f32.mxu0 0.0
        %458 = vmatmul.mubr.f32.gmra.mrb[0].mxu0 %v185
        %v459 = vpop.f32.mrb[0].mxu0
        %v460 = vadd.f32 0.0, %v459
        %v461 = vpop.f32.mrb[0].mxu0
        %462 = vmatprep.mubr.f32.mxu0 0.0
        %463 = vmatmul.mubr.f32.gmra.mrb[0].mxu0 %v186
        %v464 = vpop.f32.mrb[0].mxu0
        %v465 = vadd.f32 0.0, %v464
        %v466 = vpop.f32.mrb[0].mxu0
        %467 = vdwg.mxu0
        %s468 = scalar_lea.vmem %s163, 32 [#allocation2]
        %469 = vst.msk [vmem:[%s468] sm:$0xff] %vm278, %v460
        %470 = vst.msk [vmem:[%s468 + $0x8] sm:$0xff] %vm278, %v465
        %s471 = scalar_lea.vmem %s2, 384
        %v472 = vld [vmem:[%s471] sm:$0xff]
        %v473 = vld [vmem:[%s471 + $0x8] sm:$0xff]
        %v474 = vld [vmem:[%s471 + $0x10] sm:$0xff]
        %v475 = vld [vmem:[%s471 + $0x18] sm:$0xff]
        %v476 = vld [vmem:[%s471 + $0x20] sm:$0xff]
        %v477 = vld [vmem:[%s471 + $0x28] sm:$0xff]
        %v478 = vld [vmem:[%s471 + $0x30] sm:$0xff]
        %v479 = vld [vmem:[%s471 + $0x38] sm:$0xff]
        %v480 = vld [vmem:[%s471 + $0x40] sm:$0xff]
        %v481 = vld [vmem:[%s471 + $0x48] sm:$0xff]
        %v482 = vld [vmem:[%s471 + $0x50] sm:$0xff]
        %v483 = vld [vmem:[%s471 + $0x58] sm:$0xff]
        %v484 = vld [vmem:[%s471 + $0x60] sm:$0xff]
        %v485 = vld [vmem:[%s471 + $0x68] sm:$0xff]
        %v486 = vld [vmem:[%s471 + $0x70] sm:$0xff]
        %v487 = vld [vmem:[%s471 + $0x78] sm:$0xff]
        %488 = vmatprep.subr.mxu0 0.0
        %489 = vmatpush1.msra.mxu0 %v472
        %490 = vmatprep.subr.mxu0 0.0
        %491 = vmatpush1.msra.mxu0 %v473
        %492 = vmatprep.subr.mxu0 0.0
        %493 = vmatpush1.msra.mxu0 %v474
        %494 = vmatprep.subr.mxu0 0.0
        %495 = vmatpush1.msra.mxu0 %v475
        %496 = vmatprep.subr.mxu0 0.0
        %497 = vmatpush1.msra.mxu0 %v476
        %498 = vmatprep.subr.mxu0 0.0
        %499 = vmatpush1.msra.mxu0 %v477
        %500 = vmatprep.subr.mxu0 0.0
        %501 = vmatpush1.msra.mxu0 %v478
        %502 = vmatprep.subr.mxu0 0.0
        %503 = vmatpush1.msra.mxu0 %v479
        %504 = vmatprep.subr.mxu0 0.0
        %505 = vmatpush1.msra.mxu0 %v480
        %506 = vmatprep.subr.mxu0 0.0
        %507 = vmatpush1.msra.mxu0 %v481
        %508 = vmatprep.subr.mxu0 0.0
        %509 = vmatpush1.msra.mxu0 %v482
        %510 = vmatprep.subr.mxu0 0.0
        %511 = vmatpush1.msra.mxu0 %v483
        %512 = vmatprep.subr.mxu0 0.0
        %513 = vmatpush1.msra.mxu0 %v484
        %514 = vmatprep.subr.mxu0 0.0
        %515 = vmatpush1.msra.mxu0 %v485
        %516 = vmatprep.subr.mxu0 0.0
        %517 = vmatpush1.msra.mxu0 %v486
        %518 = vmatprep.subr.mxu0 0.0
        %519 = vmatpush1.msra.mxu0 %v487
        %520 = vmatprep.subr.mxu0 0.0
        %521 = vmatpush1.msra.mxu0 0.0
        %522 = vmatprep.subr.mxu0 0.0
        %523 = vmatpush1.msra.mxu0 0.0
        %524 = vmatprep.subr.mxu0 0.0
        %525 = vmatpush1.msra.mxu0 0.0
        %526 = vmatprep.subr.mxu0 0.0
        %527 = vmatpush1.msra.mxu0 0.0
        %528 = vmatprep.subr.mxu0 0.0
        %529 = vmatpush1.msra.mxu0 0.0
        %530 = vmatprep.subr.mxu0 0.0
        %531 = vmatpush1.msra.mxu0 0.0
        %532 = vmatprep.subr.mxu0 0.0
        %533 = vmatpush1.msra.mxu0 0.0
        %534 = vmatprep.subr.mxu0 0.0
        %535 = vmatpush1.msra.mxu0 0.0
        %536 = vmatprep.subr.mxu0 0.0
        %537 = vmatpush1.msra.mxu0 0.0
        %538 = vmatprep.subr.mxu0 0.0
        %539 = vmatpush1.msra.mxu0 0.0
        %540 = vmatprep.subr.mxu0 0.0
        %541 = vmatpush1.msra.mxu0 0.0
        %542 = vmatprep.subr.mxu0 0.0
        %543 = vmatpush1.msra.mxu0 0.0
        %544 = vmatprep.subr.mxu0 0.0
        %545 = vmatpush1.msra.mxu0 0.0
        %546 = vmatprep.subr.mxu0 0.0
        %547 = vmatpush1.msra.mxu0 0.0
        %548 = vmatprep.subr.mxu0 0.0
        %549 = vmatpush1.msra.mxu0 0.0
        %550 = vmatprep.subr.mxu0 0.0
        %551 = vmatpush1.msra.mxu0 0.0
        %552 = vmatprep.mubr.f32.mxu0 0.0
        %553 = vmatmul.mubr.f32.gmra.mrb[0].mxu0 %v185
        %v554 = vpop.f32.mrb[0].mxu0
        %v555 = vadd.f32 0.0, %v554
        %v556 = vpop.f32.mrb[0].mxu0
        %557 = vmatprep.mubr.f32.mxu0 0.0
        %558 = vmatmul.mubr.f32.gmra.mrb[0].mxu0 %v186
        %v559 = vpop.f32.mrb[0].mxu0
        %v560 = vadd.f32 0.0, %v559
        %v561 = vpop.f32.mrb[0].mxu0
        %562 = vdwg.mxu0
        %s563 = scalar_lea.vmem %s163, 48 [#allocation2]
        %564 = vst.msk [vmem:[%s563] sm:$0xff] %vm278, %v555
        %565 = vst.msk [vmem:[%s563 + $0x8] sm:$0xff] %vm278, %v560
        %s566 = scalar_lea.vmem %s2, 512
        %v567 = vld [vmem:[%s566] sm:$0xff]
        %v568 = vld [vmem:[%s566 + $0x8] sm:$0xff]
        %v569 = vld [vmem:[%s566 + $0x10] sm:$0xff]
        %v570 = vld [vmem:[%s566 + $0x18] sm:$0xff]
        %v571 = vld [vmem:[%s566 + $0x20] sm:$0xff]
        %v572 = vld [vmem:[%s566 + $0x28] sm:$0xff]
        %v573 = vld [vmem:[%s566 + $0x30] sm:$0xff]
        %v574 = vld [vmem:[%s566 + $0x38] sm:$0xff]
        %v575 = vld [vmem:[%s566 + $0x40] sm:$0xff]
        %v576 = vld [vmem:[%s566 + $0x48] sm:$0xff]
        %v577 = vld [vmem:[%s566 + $0x50] sm:$0xff]
        %v578 = vld [vmem:[%s566 + $0x58] sm:$0xff]
        %v579 = vld [vmem:[%s566 + $0x60] sm:$0xff]
        %v580 = vld [vmem:[%s566 + $0x68] sm:$0xff]
        %v581 = vld [vmem:[%s566 + $0x70] sm:$0xff]
        %v582 = vld [vmem:[%s566 + $0x78] sm:$0xff]
        %583 = vmatprep.subr.mxu0 0.0
        %584 = vmatpush1.msra.mxu0 %v567
        %585 = vmatprep.subr.mxu0 0.0
        %586 = vmatpush1.msra.mxu0 %v568
        %587 = vmatprep.subr.mxu0 0.0
        %588 = vmatpush1.msra.mxu0 %v569
        %589 = vmatprep.subr.mxu0 0.0
        %590 = vmatpush1.msra.mxu0 %v570
        %591 = vmatprep.subr.mxu0 0.0
        %592 = vmatpush1.msra.mxu0 %v571
        %593 = vmatprep.subr.mxu0 0.0
        %594 = vmatpush1.msra.mxu0 %v572
        %595 = vmatprep.subr.mxu0 0.0
        %596 = vmatpush1.msra.mxu0 %v573
        %597 = vmatprep.subr.mxu0 0.0
        %598 = vmatpush1.msra.mxu0 %v574
        %599 = vmatprep.subr.mxu0 0.0
        %600 = vmatpush1.msra.mxu0 %v575
        %601 = vmatprep.subr.mxu0 0.0
        %602 = vmatpush1.msra.mxu0 %v576
        %603 = vmatprep.subr.mxu0 0.0
        %604 = vmatpush1.msra.mxu0 %v577
        %605 = vmatprep.subr.mxu0 0.0
        %606 = vmatpush1.msra.mxu0 %v578
        %607 = vmatprep.subr.mxu0 0.0
        %608 = vmatpush1.msra.mxu0 %v579
        %609 = vmatprep.subr.mxu0 0.0
        %610 = vmatpush1.msra.mxu0 %v580
        %611 = vmatprep.subr.mxu0 0.0
        %612 = vmatpush1.msra.mxu0 %v581
        %613 = vmatprep.subr.mxu0 0.0
        %614 = vmatpush1.msra.mxu0 %v582
        %615 = vmatprep.subr.mxu0 0.0
        %616 = vmatpush1.msra.mxu0 0.0
        %617 = vmatprep.subr.mxu0 0.0
        %618 = vmatpush1.msra.mxu0 0.0
        %619 = vmatprep.subr.mxu0 0.0
        %620 = vmatpush1.msra.mxu0 0.0
        %621 = vmatprep.subr.mxu0 0.0
        %622 = vmatpush1.msra.mxu0 0.0
        %623 = vmatprep.subr.mxu0 0.0
        %624 = vmatpush1.msra.mxu0 0.0
        %625 = vmatprep.subr.mxu0 0.0
        %626 = vmatpush1.msra.mxu0 0.0
        %627 = vmatprep.subr.mxu0 0.0
        %628 = vmatpush1.msra.mxu0 0.0
        %629 = vmatprep.subr.mxu0 0.0
        %630 = vmatpush1.msra.mxu0 0.0
        %631 = vmatprep.subr.mxu0 0.0
        %632 = vmatpush1.msra.mxu0 0.0
        %633 = vmatprep.subr.mxu0 0.0
        %634 = vmatpush1.msra.mxu0 0.0
        %635 = vmatprep.subr.mxu0 0.0
        %636 = vmatpush1.msra.mxu0 0.0
        %637 = vmatprep.subr.mxu0 0.0
        %638 = vmatpush1.msra.mxu0 0.0
        %639 = vmatprep.subr.mxu0 0.0
        %640 = vmatpush1.msra.mxu0 0.0
        %641 = vmatprep.subr.mxu0 0.0
        %642 = vmatpush1.msra.mxu0 0.0
        %643 = vmatprep.subr.mxu0 0.0
        %644 = vmatpush1.msra.mxu0 0.0
        %645 = vmatprep.subr.mxu0 0.0
        %646 = vmatpush1.msra.mxu0 0.0
        %647 = vmatprep.mubr.f32.mxu0 0.0
        %648 = vmatmul.mubr.f32.gmra.mrb[0].mxu0 %v185
        %v649 = vpop.f32.mrb[0].mxu0
        %v650 = vadd.f32 0.0, %v649
        %v651 = vpop.f32.mrb[0].mxu0
        %652 = vmatprep.mubr.f32.mxu0 0.0
        %653 = vmatmul.mubr.f32.gmra.mrb[0].mxu0 %v186
        %v654 = vpop.f32.mrb[0].mxu0
        %v655 = vadd.f32 0.0, %v654
        %v656 = vpop.f32.mrb[0].mxu0
        %657 = vdwg.mxu0
        %s658 = scalar_lea.vmem %s163, 64 [#allocation2]
        %659 = vst.msk [vmem:[%s658] sm:$0xff] %vm278, %v650
        %660 = vst.msk [vmem:[%s658 + $0x8] sm:$0xff] %vm278, %v655
        %s661 = scalar_lea.vmem %s2, 640
        %v662 = vld [vmem:[%s661] sm:$0xff]
        %v663 = vld [vmem:[%s661 + $0x8] sm:$0xff]
        %v664 = vld [vmem:[%s661 + $0x10] sm:$0xff]
        %v665 = vld [vmem:[%s661 + $0x18] sm:$0xff]
        %v666 = vld [vmem:[%s661 + $0x20] sm:$0xff]
        %v667 = vld [vmem:[%s661 + $0x28] sm:$0xff]
        %v668 = vld [vmem:[%s661 + $0x30] sm:$0xff]
        %v669 = vld [vmem:[%s661 + $0x38] sm:$0xff]
        %v670 = vld [vmem:[%s661 + $0x40] sm:$0xff]
        %v671 = vld [vmem:[%s661 + $0x48] sm:$0xff]
        %v672 = vld [vmem:[%s661 + $0x50] sm:$0xff]
        %v673 = vld [vmem:[%s661 + $0x58] sm:$0xff]
        %v674 = vld [vmem:[%s661 + $0x60] sm:$0xff]
        %v675 = vld [vmem:[%s661 + $0x68] sm:$0xff]
        %v676 = vld [vmem:[%s661 + $0x70] sm:$0xff]
        %v677 = vld [vmem:[%s661 + $0x78] sm:$0xff]
        %678 = vmatprep.subr.mxu0 0.0
        %679 = vmatpush1.msra.mxu0 %v662
        %680 = vmatprep.subr.mxu0 0.0
        %681 = vmatpush1.msra.mxu0 %v663
        %682 = vmatprep.subr.mxu0 0.0
        %683 = vmatpush1.msra.mxu0 %v664
        %684 = vmatprep.subr.mxu0 0.0
        %685 = vmatpush1.msra.mxu0 %v665
        %686 = vmatprep.subr.mxu0 0.0
        %687 = vmatpush1.msra.mxu0 %v666
        %688 = vmatprep.subr.mxu0 0.0
        %689 = vmatpush1.msra.mxu0 %v667
        %690 = vmatprep.subr.mxu0 0.0
        %691 = vmatpush1.msra.mxu0 %v668
        %692 = vmatprep.subr.mxu0 0.0
        %693 = vmatpush1.msra.mxu0 %v669
        %694 = vmatprep.subr.mxu0 0.0
        %695 = vmatpush1.msra.mxu0 %v670
        %696 = vmatprep.subr.mxu0 0.0
        %697 = vmatpush1.msra.mxu0 %v671
        %698 = vmatprep.subr.mxu0 0.0
        %699 = vmatpush1.msra.mxu0 %v672
        %700 = vmatprep.subr.mxu0 0.0
        %701 = vmatpush1.msra.mxu0 %v673
        %702 = vmatprep.subr.mxu0 0.0
        %703 = vmatpush1.msra.mxu0 %v674
        %704 = vmatprep.subr.mxu0 0.0
        %705 = vmatpush1.msra.mxu0 %v675
        %706 = vmatprep.subr.mxu0 0.0
        %707 = vmatpush1.msra.mxu0 %v676
        %708 = vmatprep.subr.mxu0 0.0
        %709 = vmatpush1.msra.mxu0 %v677
        %710 = vmatprep.subr.mxu0 0.0
        %711 = vmatpush1.msra.mxu0 0.0
        %712 = vmatprep.subr.mxu0 0.0
        %713 = vmatpush1.msra.mxu0 0.0
        %714 = vmatprep.subr.mxu0 0.0
        %715 = vmatpush1.msra.mxu0 0.0
        %716 = vmatprep.subr.mxu0 0.0
        %717 = vmatpush1.msra.mxu0 0.0
        %718 = vmatprep.subr.mxu0 0.0
        %719 = vmatpush1.msra.mxu0 0.0
        %720 = vmatprep.subr.mxu0 0.0
        %721 = vmatpush1.msra.mxu0 0.0
        %722 = vmatprep.subr.mxu0 0.0
        %723 = vmatpush1.msra.mxu0 0.0
        %724 = vmatprep.subr.mxu0 0.0
        %725 = vmatpush1.msra.mxu0 0.0
        %726 = vmatprep.subr.mxu0 0.0
        %727 = vmatpush1.msra.mxu0 0.0
        %728 = vmatprep.subr.mxu0 0.0
        %729 = vmatpush1.msra.mxu0 0.0
        %730 = vmatprep.subr.mxu0 0.0
        %731 = vmatpush1.msra.mxu0 0.0
        %732 = vmatprep.subr.mxu0 0.0
        %733 = vmatpush1.msra.mxu0 0.0
        %734 = vmatprep.subr.mxu0 0.0
        %735 = vmatpush1.msra.mxu0 0.0
        %736 = vmatprep.subr.mxu0 0.0
        %737 = vmatpush1.msra.mxu0 0.0
        %738 = vmatprep.subr.mxu0 0.0
        %739 = vmatpush1.msra.mxu0 0.0
        %740 = vmatprep.subr.mxu0 0.0
        %741 = vmatpush1.msra.mxu0 0.0
        %742 = vmatprep.mubr.f32.mxu0 0.0
        %743 = vmatmul.mubr.f32.gmra.mrb[0].mxu0 %v185
        %v744 = vpop.f32.mrb[0].mxu0
        %v745 = vadd.f32 0.0, %v744
        %v746 = vpop.f32.mrb[0].mxu0
        %747 = vmatprep.mubr.f32.mxu0 0.0
        %748 = vmatmul.mubr.f32.gmra.mrb[0].mxu0 %v186
        %v749 = vpop.f32.mrb[0].mxu0
        %v750 = vadd.f32 0.0, %v749
        %v751 = vpop.f32.mrb[0].mxu0
        %752 = vdwg.mxu0
        %s753 = scalar_lea.vmem %s163, 80 [#allocation2]
        %754 = vst.msk [vmem:[%s753] sm:$0xff] %vm278, %v745
        %755 = vst.msk [vmem:[%s753 + $0x8] sm:$0xff] %vm278, %v750
        %s756 = scalar_lea.vmem %s2, 768
        %v757 = vld [vmem:[%s756] sm:$0xff]
        %v758 = vld [vmem:[%s756 + $0x8] sm:$0xff]
        %v759 = vld [vmem:[%s756 + $0x10] sm:$0xff]
        %v760 = vld [vmem:[%s756 + $0x18] sm:$0xff]
        %v761 = vld [vmem:[%s756 + $0x20] sm:$0xff]
        %v762 = vld [vmem:[%s756 + $0x28] sm:$0xff]
        %v763 = vld [vmem:[%s756 + $0x30] sm:$0xff]
        %v764 = vld [vmem:[%s756 + $0x38] sm:$0xff]
        %v765 = vld [vmem:[%s756 + $0x40] sm:$0xff]
        %v766 = vld [vmem:[%s756 + $0x48] sm:$0xff]
        %v767 = vld [vmem:[%s756 + $0x50] sm:$0xff]
        %v768 = vld [vmem:[%s756 + $0x58] sm:$0xff]
        %v769 = vld [vmem:[%s756 + $0x60] sm:$0xff]
        %v770 = vld [vmem:[%s756 + $0x68] sm:$0xff]
        %v771 = vld [vmem:[%s756 + $0x70] sm:$0xff]
        %v772 = vld [vmem:[%s756 + $0x78] sm:$0xff]
        %773 = vmatprep.subr.mxu0 0.0
        %774 = vmatpush1.msra.mxu0 %v757
        %775 = vmatprep.subr.mxu0 0.0
        %776 = vmatpush1.msra.mxu0 %v758
        %777 = vmatprep.subr.mxu0 0.0
        %778 = vmatpush1.msra.mxu0 %v759
        %779 = vmatprep.subr.mxu0 0.0
        %780 = vmatpush1.msra.mxu0 %v760
        %781 = vmatprep.subr.mxu0 0.0
        %782 = vmatpush1.msra.mxu0 %v761
        %783 = vmatprep.subr.mxu0 0.0
        %784 = vmatpush1.msra.mxu0 %v762
        %785 = vmatprep.subr.mxu0 0.0
        %786 = vmatpush1.msra.mxu0 %v763
        %787 = vmatprep.subr.mxu0 0.0
        %788 = vmatpush1.msra.mxu0 %v764
        %789 = vmatprep.subr.mxu0 0.0
        %790 = vmatpush1.msra.mxu0 %v765
        %791 = vmatprep.subr.mxu0 0.0
        %792 = vmatpush1.msra.mxu0 %v766
        %793 = vmatprep.subr.mxu0 0.0
        %794 = vmatpush1.msra.mxu0 %v767
        %795 = vmatprep.subr.mxu0 0.0
        %796 = vmatpush1.msra.mxu0 %v768
        %797 = vmatprep.subr.mxu0 0.0
        %798 = vmatpush1.msra.mxu0 %v769
        %799 = vmatprep.subr.mxu0 0.0
        %800 = vmatpush1.msra.mxu0 %v770
        %801 = vmatprep.subr.mxu0 0.0
        %802 = vmatpush1.msra.mxu0 %v771
        %803 = vmatprep.subr.mxu0 0.0
        %804 = vmatpush1.msra.mxu0 %v772
        %805 = vmatprep.subr.mxu0 0.0
        %806 = vmatpush1.msra.mxu0 0.0
        %807 = vmatprep.subr.mxu0 0.0
        %808 = vmatpush1.msra.mxu0 0.0
        %809 = vmatprep.subr.mxu0 0.0
        %810 = vmatpush1.msra.mxu0 0.0
        %811 = vmatprep.subr.mxu0 0.0
        %812 = vmatpush1.msra.mxu0 0.0
        %813 = vmatprep.subr.mxu0 0.0
        %814 = vmatpush1.msra.mxu0 0.0
        %815 = vmatprep.subr.mxu0 0.0
        %816 = vmatpush1.msra.mxu0 0.0
        %817 = vmatprep.subr.mxu0 0.0
        %818 = vmatpush1.msra.mxu0 0.0
        %819 = vmatprep.subr.mxu0 0.0
        %820 = vmatpush1.msra.mxu0 0.0
        %821 = vmatprep.subr.mxu0 0.0
        %822 = vmatpush1.msra.mxu0 0.0
        %823 = vmatprep.subr.mxu0 0.0
        %824 = vmatpush1.msra.mxu0 0.0
        %825 = vmatprep.subr.mxu0 0.0
        %826 = vmatpush1.msra.mxu0 0.0
        %827 = vmatprep.subr.mxu0 0.0
        %828 = vmatpush1.msra.mxu0 0.0
        %829 = vmatprep.subr.mxu0 0.0
        %830 = vmatpush1.msra.mxu0 0.0
        %831 = vmatprep.subr.mxu0 0.0
        %832 = vmatpush1.msra.mxu0 0.0
        %833 = vmatprep.subr.mxu0 0.0
        %834 = vmatpush1.msra.mxu0 0.0
        %835 = vmatprep.subr.mxu0 0.0
        %836 = vmatpush1.msra.mxu0 0.0
        %837 = vmatprep.mubr.f32.mxu0 0.0
        %838 = vmatmul.mubr.f32.gmra.mrb[0].mxu0 %v185
        %v839 = vpop.f32.mrb[0].mxu0
        %v840 = vadd.f32 0.0, %v839
        %v841 = vpop.f32.mrb[0].mxu0
        %842 = vmatprep.mubr.f32.mxu0 0.0
        %843 = vmatmul.mubr.f32.gmra.mrb[0].mxu0 %v186
        %v844 = vpop.f32.mrb[0].mxu0
        %v845 = vadd.f32 0.0, %v844
        %v846 = vpop.f32.mrb[0].mxu0
        %847 = vdwg.mxu0
        %s848 = scalar_lea.vmem %s163, 96 [#allocation2]
        %849 = vst.msk [vmem:[%s848] sm:$0xff] %vm278, %v840
        %850 = vst.msk [vmem:[%s848 + $0x8] sm:$0xff] %vm278, %v845
        %s851 = scalar_lea.vmem %s2, 896
        %v852 = vld [vmem:[%s851] sm:$0xff]
        %v853 = vld [vmem:[%s851 + $0x8] sm:$0xff]
        %v854 = vld [vmem:[%s851 + $0x10] sm:$0xff]
        %v855 = vld [vmem:[%s851 + $0x18] sm:$0xff]
        %v856 = vld [vmem:[%s851 + $0x20] sm:$0xff]
        %v857 = vld [vmem:[%s851 + $0x28] sm:$0xff]
        %v858 = vld [vmem:[%s851 + $0x30] sm:$0xff]
        %v859 = vld [vmem:[%s851 + $0x38] sm:$0xff]
        %v860 = vld [vmem:[%s851 + $0x40] sm:$0xff]
        %v861 = vld [vmem:[%s851 + $0x48] sm:$0xff]
        %v862 = vld [vmem:[%s851 + $0x50] sm:$0xff]
        %v863 = vld [vmem:[%s851 + $0x58] sm:$0xff]
        %v864 = vld [vmem:[%s851 + $0x60] sm:$0xff]
        %v865 = vld [vmem:[%s851 + $0x68] sm:$0xff]
        %v866 = vld [vmem:[%s851 + $0x70] sm:$0xff]
        %v867 = vld [vmem:[%s851 + $0x78] sm:$0xff]
        %868 = vmatprep.subr.mxu0 0.0
        %869 = vmatpush1.msra.mxu0 %v852
        %870 = vmatprep.subr.mxu0 0.0
        %871 = vmatpush1.msra.mxu0 %v853
        %872 = vmatprep.subr.mxu0 0.0
        %873 = vmatpush1.msra.mxu0 %v854
        %874 = vmatprep.subr.mxu0 0.0
        %875 = vmatpush1.msra.mxu0 %v855
        %876 = vmatprep.subr.mxu0 0.0
        %877 = vmatpush1.msra.mxu0 %v856
        %878 = vmatprep.subr.mxu0 0.0
        %879 = vmatpush1.msra.mxu0 %v857
        %880 = vmatprep.subr.mxu0 0.0
        %881 = vmatpush1.msra.mxu0 %v858
        %882 = vmatprep.subr.mxu0 0.0
        %883 = vmatpush1.msra.mxu0 %v859
        %884 = vmatprep.subr.mxu0 0.0
        %885 = vmatpush1.msra.mxu0 %v860
        %886 = vmatprep.subr.mxu0 0.0
        %887 = vmatpush1.msra.mxu0 %v861
        %888 = vmatprep.subr.mxu0 0.0
        %889 = vmatpush1.msra.mxu0 %v862
        %890 = vmatprep.subr.mxu0 0.0
        %891 = vmatpush1.msra.mxu0 %v863
        %892 = vmatprep.subr.mxu0 0.0
        %893 = vmatpush1.msra.mxu0 %v864
        %894 = vmatprep.subr.mxu0 0.0
        %895 = vmatpush1.msra.mxu0 %v865
        %896 = vmatprep.subr.mxu0 0.0
        %897 = vmatpush1.msra.mxu0 %v866
        %898 = vmatprep.subr.mxu0 0.0
        %899 = vmatpush1.msra.mxu0 %v867
        %900 = vmatprep.subr.mxu0 0.0
        %901 = vmatpush1.msra.mxu0 0.0
        %902 = vmatprep.subr.mxu0 0.0
        %903 = vmatpush1.msra.mxu0 0.0
        %904 = vmatprep.subr.mxu0 0.0
        %905 = vmatpush1.msra.mxu0 0.0
        %906 = vmatprep.subr.mxu0 0.0
        %907 = vmatpush1.msra.mxu0 0.0
        %908 = vmatprep.subr.mxu0 0.0
        %909 = vmatpush1.msra.mxu0 0.0
        %910 = vmatprep.subr.mxu0 0.0
        %911 = vmatpush1.msra.mxu0 0.0
        %912 = vmatprep.subr.mxu0 0.0
        %913 = vmatpush1.msra.mxu0 0.0
        %914 = vmatprep.subr.mxu0 0.0
        %915 = vmatpush1.msra.mxu0 0.0
        %916 = vmatprep.subr.mxu0 0.0
        %917 = vmatpush1.msra.mxu0 0.0
        %918 = vmatprep.subr.mxu0 0.0
        %919 = vmatpush1.msra.mxu0 0.0
        %920 = vmatprep.subr.mxu0 0.0
        %921 = vmatpush1.msra.mxu0 0.0
        %922 = vmatprep.subr.mxu0 0.0
        %923 = vmatpush1.msra.mxu0 0.0
        %924 = vmatprep.subr.mxu0 0.0
        %925 = vmatpush1.msra.mxu0 0.0
        %926 = vmatprep.subr.mxu0 0.0
        %927 = vmatpush1.msra.mxu0 0.0
        %928 = vmatprep.subr.mxu0 0.0
        %929 = vmatpush1.msra.mxu0 0.0
        %930 = vmatprep.subr.mxu0 0.0
        %931 = vmatpush1.msra.mxu0 0.0
        %932 = vmatprep.mubr.f32.mxu0 0.0
        %933 = vmatmul.mubr.f32.gmra.mrb[0].mxu0 %v185
        %v934 = vpop.f32.mrb[0].mxu0
        %v935 = vadd.f32 0.0, %v934
        %v936 = vpop.f32.mrb[0].mxu0
        %937 = vmatprep.mubr.f32.mxu0 0.0
        %938 = vmatmul.mubr.f32.gmra.mrb[0].mxu0 %v186
        %v939 = vpop.f32.mrb[0].mxu0
        %v940 = vadd.f32 0.0, %v939
        %v941 = vpop.f32.mrb[0].mxu0
        %942 = vdwg.mxu0
        %s943 = scalar_lea.vmem %s163, 112 [#allocation2]
        %944 = vst.msk [vmem:[%s943] sm:$0xff] %vm278, %v935
        %945 = vst.msk [vmem:[%s943 + $0x8] sm:$0xff] %vm278, %v940
        %s946 = sand.u32 %s93, 1
        %s947 = scalar_lea.sflag [#allocation3], %s946
        %s948 = sand.u32 %s93, 1
        %s949 = smul.addr %s948, 128
        %s950 = scalar_lea.vmem [#allocation2], %s949
        // Predicated region
        $region33: #{double_conv.5} parent=31 // pred_check
          %p951 = pneg %p103
        $region34: #{double_conv.5} parent=31 // pred_check_branch
          %953 = sbr.rel (%p951) target = $region36
        $region35: #{double_conv.5} parent=31 // pred_region
          %s955 = ssub.s32 2048, 2048
          %956 = vsyncadd %s947, %s955
          %s957 = smul.addr %s17, 16
          %s958 = smul.addr %s957, 128
          %s959 = scalar_lea.hbm %s3, %s958
          %s960 = sshll.u32 %s950, 4
          %s961 = int_to_ptr.vmem [resolvable:$true] %s960
          %966 = dma.vmem_to_hbm [thread:$0]  %s961, 2048, %s959, %s947, 128, 128, 8
        $region36: #{double_conv.5} parent=31 // pred_fallthru
          _
      $region32: #{double_conv.5} parent=5 // pred_fallthru
        _
      %p967 = scmp.le.s32.totalorder 2, %s12
      // Predicated region
      $region37: #{double_conv.5} parent=5 // pred_check
        %p968 = pneg %p967
      $region38: #{double_conv.5} parent=5 // pred_check_branch
        %970 = sbr.rel (%p968) target = $region40
      $region39: #{double_conv.5} parent=5 // pred_region
        %s971 = ssub.s32 %s12, 2
        // Predicated region
        $region41: #{double_conv.5} parent=39 // pred_check
          %p972 = pneg %p109
        $region42: #{double_conv.5} parent=39 // pred_check_branch
          %974 = sbr.rel (%p972) target = $region44
        $region43: #{double_conv.5} parent=39 // pred_region
          %s975 = sand.u32 %s94, 1
          %s976 = scalar_lea.sflag [#allocation3], %s975
          %s977 = sand.u32 %s94, 1
          %s978 = smul.addr %s977, 128
          %s979 = scalar_lea.vmem [#allocation2], %s978
          %980 = dma.done %s976, 2048
        $region44: #{double_conv.5} parent=39 // pred_fallthru
          _
      $region40: #{double_conv.5} parent=5 // pred_fallthru
        _
    $region6: #{double_conv.5} parent=1 // loop_footer
      %s16 = sadd.s32 1, %s12
    $region7: #{double_conv.5} parent=1 // loop_footer_branch
      %11 = sbr.rel target = $region3
    $region8: #{double_conv.5} parent=1 // loop_exit
      _
    %981 = vsyncpa [#allocation3], 1
    %s982 = scalar_lea.sflag [#allocation3], 1
    %983 = vsyncpa %s982, 1

</llo_original>
